<compile_context>
chip_gen: v5e
topology: v5e:2x2
jax: 0.10.0
libtpu: 0.0.40
codegen_flags: <defaults>
</compile_context>

<pallas_src>
import functools

import numpy as np
import jax
import jax.numpy as jnp
from jax.experimental import pallas as pl
from jax.experimental.pallas import tpu as pltpu  # noqa: F401  (TPU backend assumed)

LANE = 128


def _rup(n, mult=LANE):
    return ((n + mult - 1) // mult) * mult


def _pad_to(a, shape):
    pads = [(0, t - s) for s, t in zip(a.shape, shape)]
    if any(p[1] for p in pads):
        a = jnp.pad(a, pads)
    return a


def _zeros_map(ndim):
    return lambda i: (0,) * ndim


# ----------------------------- Pallas kernels ------------------------------

def _gcn2_kernel(a_ref, x_ref, w1_ref, b1_ref, w2_ref, b2_ref, o_ref):
    # Fused: h1 = relu(A @ (X @ W1) + b1); h2 = relu(A @ (h1 @ W2) + b2)
    a = a_ref[...]
    h = jnp.dot(x_ref[...], w1_ref[...], preferred_element_type=jnp.float32)
    h = jnp.maximum(jnp.dot(a, h, preferred_element_type=jnp.float32) + b1_ref[...], 0.0)
    h = jnp.dot(h, w2_ref[...], preferred_element_type=jnp.float32)
    h = jnp.maximum(jnp.dot(a, h, preferred_element_type=jnp.float32) + b2_ref[...], 0.0)
    o_ref[...] = h


def gcn2_forward(a_norm, x_p, w1_p, b1_p, w2_p, b2_p):
    N = x_p.shape[0]
    Hp = w1_p.shape[1]
    args = (a_norm, x_p, w1_p, b1_p, w2_p, b2_p)
    return pl.pallas_call(
        _gcn2_kernel,
        out_shape=jax.ShapeDtypeStruct((N, Hp), jnp.float32),
        grid=(1,),
        in_specs=[pl.BlockSpec(a.shape, _zeros_map(a.ndim)) for a in args],
        out_specs=pl.BlockSpec((N, Hp), _zeros_map(2)),
    )(*args)


def _head_kernel(um_ref, *refs, nhid, n_fc):
    # refs = (w0_3d, b0, w1, b1, ..., w_{n_fc-1}, b_{n_fc-1}, o_ref)
    o_ref = refs[-1]
    wb = refs[:-1]

    # Batched projector for all G graphs in one step: P_g = Um_g @ Um_g^T
    # (contract last axis of both operands -> no transpose needed).
    um = um_ref[...]                                            # (G, nhid, Kp)
    p = jnp.einsum('ghk,gjk->ghj', um, um,
                   preferred_element_type=jnp.float32)          # (G, nhid, nhid)

    # FC block 0: triu-gather + BatchNorm already folded into w0/b0 in glue.
    w0, b0 = wb[0], wb[1]                                       # (nhid, nhid, D0p), (1, D0p)
    g = p.shape[0]
    y = jnp.zeros((g, w0.shape[-1]), jnp.float32)
    for h in range(nhid):                                       # unrolled, nhid is small
        y = y + jnp.dot(p[:, h, :], w0[h], preferred_element_type=jnp.float32)
    y = y + b0[...]
    if n_fc > 1:
        y = jnp.maximum(y, 0.0)                                 # ReLU (Dropout = identity in eval)

    # Remaining FC blocks (BN folded); no ReLU after the last one.
    for li in range(1, n_fc):
        w, b = wb[2 * li], wb[2 * li + 1]
        y = jnp.dot(y, w[...], preferred_element_type=jnp.float32) + b[...]
        if li < n_fc - 1:
            y = jnp.maximum(y, 0.0)

    o_ref[...] = y


def head_forward(um_p, fc_padded, nhid):
    G = um_p.shape[0]
    n_fc = len(fc_padded)
    out_dim = fc_padded[-1][0].shape[-1]

    args = [um_p]
    in_specs = [pl.BlockSpec(um_p.shape, _zeros_map(um_p.ndim))]
    for w, b in fc_padded:
        args.extend([w, b])
        in_specs.append(pl.BlockSpec(w.shape, _zeros_map(w.ndim)))
        in_specs.append(pl.BlockSpec(b.shape, _zeros_map(b.ndim)))

    kern = functools.partial(_head_kernel, nhid=nhid, n_fc=n_fc)
    return pl.pallas_call(
        kern,
        out_shape=jax.ShapeDtypeStruct((G, out_dim), jnp.float32),
        grid=(1,),
        in_specs=in_specs,
        out_specs=pl.BlockSpec((G, out_dim), _zeros_map(2)),
    )(*args)


# ------------------------------- glue pieces -------------------------------

def build_norm_adj(edge_index, num_nodes):
    # GCNConv normalization: A_hat = A + I,  D_hat^-1/2 A_hat D_hat^-1/2
    A = np.zeros((num_nodes, num_nodes), dtype=np.float32)
    src, dst = edge_index
    A[src, dst] = 1.0
    A[dst, src] = 1.0
    A = A + np.eye(num_nodes, dtype=np.float32)
    deg = A.sum(axis=1)
    dinv = 1.0 / np.sqrt(deg)
    return (A * dinv[:, None]) * dinv[None, :]


def fold_fc_params(fc_params, nhid, eps=1e-5):
    """Fold eval-mode BatchNorm into (W, b); fold the triu gather into the first W."""
    iu = jnp.triu_indices(nhid)
    folded = []
    for li, (W, b, gamma, beta, rmean, rvar) in enumerate(fc_params):
        scale = gamma / jnp.sqrt(rvar + eps)
        shift = beta - rmean * scale
        Wf = W * scale[None, :]
        bf = b * scale + shift
        if li == 0:
            # Expand (triu_dim, D) -> (nhid, nhid, D); lower-triangular rows stay zero,
            # so P_flat @ Wexp == P[triu] @ W exactly.
            Wexp = jnp.zeros((nhid, nhid, W.shape[1]), jnp.float32)
            Wexp = Wexp.at[iu[0], iu[1], :].set(Wf)
            Wf = Wexp
        folded.append((Wf, bf))
    return folded


def net_forward(a_norm, x, params, graph_sizes, p_ratio, nhid, num_classes):
    (W1, b1), (W2, b2), fc_params = params
    N, F = x.shape
    Fp, Hp = _rup(F), _rup(nhid)

    # ---- kernel 1: fused GCNConv1+ReLU+GCNConv2+ReLU (lane-padded to 128) ----
    x_p = _pad_to(x, (N, Fp))
    W1_p = _pad_to(W1, (Fp, Hp))
    b1_p = _pad_to(b1.reshape(1, -1), (1, Hp))
    W2_p = _pad_to(W2, (Hp, Hp))
    b2_p = _pad_to(b2.reshape(1, -1), (1, Hp))
    h2_p = gcn2_forward(a_norm, x_p, W1_p, b1_p, W2_p, b2_p)     # (N, Hp)
    h2 = h2_p[:, :nhid]

    # ---- grasspool SVD: one batched SVD over zero-padded per-graph blocks ----
    # TODO(synk): SVD has no Pallas primitive; the batched jnp.linalg.svd stays in
    #             plain JAX glue between the two fused kernels.
    G = len(graph_sizes)
    max_n = max(graph_sizes)
    offs = np.cumsum([0] + list(graph_sizes))
    hb = jnp.stack([
        jnp.pad(h2[offs[i]:offs[i + 1]], ((0, max_n - graph_sizes[i]), (0, 0)))
        for i in range(G)
    ])                                                           # (G, max_n, nhid)
    # Zero rows of h_g give zero columns of h_g.T -> extra zero singular values only,
    # which the strict (S > pRatio) mask removes, so the projector matches the
    # per-graph unpadded computation. S is sorted descending, so column-masking by
    # (S > pRatio) is exactly U[:, :k] with k = sum(S > pRatio).
    U, S, _ = jnp.linalg.svd(jnp.swapaxes(hb, 1, 2), full_matrices=False)
    um = U * (S > p_ratio).astype(jnp.float32)[:, None, :]       # (G, nhid, m)
    um_p = _pad_to(um, (G, nhid, _rup(um.shape[-1])))            # lane-pad contraction dim

    # ---- kernel 2: batched projector + (triu & BN folded) FC head ----
    folded = fold_fc_params(fc_params, nhid)
    padded = []
    for li, (W, b) in enumerate(folded):
        dout_p = _rup(W.shape[-1])
        if li == 0:
            Wp = _pad_to(W, (nhid, nhid, dout_p))
        else:
            Wp = _pad_to(W, (_rup(W.shape[0]), dout_p))
        padded.append((Wp, _pad_to(b.reshape(1, -1), (1, dout_p))))

    out_p = head_forward(um_p, padded, nhid)                     # (G, Cp)
    out = out_p[:, :num_classes]
    if num_classes == 1:
        return out.reshape(-1)
    return out


# ----------------------------------- main -----------------------------------

if __name__ == "__main__":
    num_features, nhid, num_classes = 8, 8, 3
    hid_fc_dim = [32]
    dropout_prob = 0.5                      # identity in eval mode
    pRatio = 0.5
    graph_sizes = (5, 6, 5)
    N = sum(graph_sizes)

    key = jax.random.PRNGKey(0)
    keys = jax.random.split(key, 8)
    x = jax.random.normal(keys[0], (N, num_features), dtype=jnp.float32)

    # deterministic random edges per graph
    rng = np.random.RandomState(0)
    edges = []
    off = 0
    for n_g in graph_sizes:
        for _ in range(2 * n_g):
            s, d = rng.randint(n_g), rng.randint(n_g)
            if s != d:
                edges.append((off + s, off + d))
        off += n_g
    edge_index = np.array(edges, dtype=np.int32).T
    a_norm = jnp.asarray(build_norm_adj(edge_index, N))

    # parameters (deterministic init; BN at PyTorch defaults: gamma=1, beta=0, rm=0, rv=1)
    W1 = 0.1 * jax.random.normal(keys[1], (num_features, nhid), jnp.float32)
    b1 = jnp.zeros((nhid,), jnp.float32)
    W2 = 0.1 * jax.random.normal(keys[2], (nhid, nhid), jnp.float32)
    b2 = jnp.zeros((nhid,), jnp.float32)

    pooled_dim = nhid * (nhid + 1) // 2
    dims = [pooled_dim] + hid_fc_dim + [num_classes]
    fc_params = []
    for li, (din, dout) in enumerate(zip(dims[:-1], dims[1:])):
        Wf = 0.1 * jax.random.normal(keys[3 + li], (din, dout), jnp.float32)
        bf = jnp.zeros((dout,), jnp.float32)
        gamma = jnp.ones((dout,), jnp.float32)
        beta = jnp.zeros((dout,), jnp.float32)
        rmean = jnp.zeros((dout,), jnp.float32)
        rvar = jnp.ones((dout,), jnp.float32)
        fc_params.append((Wf, bf, gamma, beta, rmean, rvar))

    params = ((W1, b1), (W2, b2), tuple(fc_params))

    fwd = jax.jit(functools.partial(
        net_forward, graph_sizes=graph_sizes, p_ratio=pRatio,
        nhid=nhid, num_classes=num_classes))
    out = fwd(a_norm, x, params)
    out = jax.block_until_ready(out)
    assert out.shape == (len(graph_sizes), num_classes)
    print("KERNEL_OK")
</pallas_src>

<mosaic_0001>
module attributes {stable_mosaic.version = 11 : i64} {
  func.func @_gcn2_kernel(%arg0: i32, %arg1: memref<16x16xf32, #tpu.memory_space<vmem>>, %arg2: memref<16x128xf32, #tpu.memory_space<vmem>>, %arg3: memref<128x128xf32, #tpu.memory_space<vmem>>, %arg4: memref<1x128xf32, #tpu.memory_space<vmem>>, %arg5: memref<128x128xf32, #tpu.memory_space<vmem>>, %arg6: memref<1x128xf32, #tpu.memory_space<vmem>>, %arg7: memref<16x128xf32, #tpu.memory_space<vmem>>) attributes {dimension_semantics = [#tpu.dimension_semantics<arbitrary>], iteration_bounds = array<i64: 1>, scalar_prefetch = 0 : i64, scratch_operands = 0 : i64, tpu.core_type = #tpu.core_type<tc>, window_params = [{pipeline_mode = #tpu.pipeline_mode<synchronous>, transform_indices = @transform_0, window_bounds = array<i64: 16, 16>}, {pipeline_mode = #tpu.pipeline_mode<synchronous>, transform_indices = @transform_1, window_bounds = array<i64: 16, 128>}, {pipeline_mode = #tpu.pipeline_mode<synchronous>, transform_indices = @transform_2, window_bounds = array<i64: 128, 128>}, {pipeline_mode = #tpu.pipeline_mode<synchronous>, transform_indices = @transform_3, window_bounds = array<i64: 1, 128>}, {pipeline_mode = #tpu.pipeline_mode<synchronous>, transform_indices = @transform_4, window_bounds = array<i64: 128, 128>}, {pipeline_mode = #tpu.pipeline_mode<synchronous>, transform_indices = @transform_5, window_bounds = array<i64: 1, 128>}, {pipeline_mode = #tpu.pipeline_mode<synchronous>, transform_indices = @transform_6, window_bounds = array<i64: 16, 128>}]} {
    %c0 = arith.constant 0 : index
    %c0_0 = arith.constant 0 : index
    %0 = vector.load %arg1[%c0, %c0_0] : memref<16x16xf32, #tpu.memory_space<vmem>>, vector<16x16xf32>
    %c0_1 = arith.constant 0 : index
    %c0_2 = arith.constant 0 : index
    %1 = vector.load %arg2[%c0_1, %c0_2] : memref<16x128xf32, #tpu.memory_space<vmem>>, vector<16x128xf32>
    %c0_3 = arith.constant 0 : index
    %c0_4 = arith.constant 0 : index
    %2 = vector.load %arg3[%c0_3, %c0_4] : memref<128x128xf32, #tpu.memory_space<vmem>>, vector<128x128xf32>
    %cst = arith.constant dense<0.000000e+00> : vector<16x128xf32>
    %3 = tpu.matmul %1, %2, %cst {dimension_numbers = #tpu.dot_dimension_numbers<[1], [0], [0], [1], [0, 0, 1, 1], [], []>} : vector<16x128xf32>, vector<128x128xf32>, vector<16x128xf32> -> vector<16x128xf32>
    %cst_5 = arith.constant dense<0.000000e+00> : vector<16x128xf32>
    %4 = tpu.matmul %0, %3, %cst_5 {dimension_numbers = #tpu.dot_dimension_numbers<[1], [0], [0], [1], [0, 0, 1, 1], [], []>} : vector<16x16xf32>, vector<16x128xf32>, vector<16x128xf32> -> vector<16x128xf32>
    %c0_6 = arith.constant 0 : index
    %c0_7 = arith.constant 0 : index
    %5 = vector.load %arg4[%c0_6, %c0_7] : memref<1x128xf32, #tpu.memory_space<vmem>>, vector<1x128xf32>
    %6 = vector.broadcast %5 : vector<1x128xf32> to vector<16x128xf32>
    %7 = arith.addf %4, %6 : vector<16x128xf32>
    %cst_8 = arith.constant 0.000000e+00 : f32
    %8 = vector.broadcast %cst_8 : f32 to vector<16x128xf32>
    %9 = arith.maximumf %7, %8 : vector<16x128xf32>
    %c0_9 = arith.constant 0 : index
    %c0_10 = arith.constant 0 : index
    %10 = vector.load %arg5[%c0_9, %c0_10] : memref<128x128xf32, #tpu.memory_space<vmem>>, vector<128x128xf32>
    %cst_11 = arith.constant dense<0.000000e+00> : vector<16x128xf32>
    %11 = tpu.matmul %9, %10, %cst_11 {dimension_numbers = #tpu.dot_dimension_numbers<[1], [0], [0], [1], [0, 0, 1, 1], [], []>} : vector<16x128xf32>, vector<128x128xf32>, vector<16x128xf32> -> vector<16x128xf32>
    %cst_12 = arith.constant dense<0.000000e+00> : vector<16x128xf32>
    %12 = tpu.matmul %0, %11, %cst_12 {dimension_numbers = #tpu.dot_dimension_numbers<[1], [0], [0], [1], [0, 0, 1, 1], [], []>} : vector<16x16xf32>, vector<16x128xf32>, vector<16x128xf32> -> vector<16x128xf32>
    %c0_13 = arith.constant 0 : index
    %c0_14 = arith.constant 0 : index
    %13 = vector.load %arg6[%c0_13, %c0_14] : memref<1x128xf32, #tpu.memory_space<vmem>>, vector<1x128xf32>
    %14 = vector.broadcast %13 : vector<1x128xf32> to vector<16x128xf32>
    %15 = arith.addf %12, %14 : vector<16x128xf32>
    %cst_15 = arith.constant 0.000000e+00 : f32
    %16 = vector.broadcast %cst_15 : f32 to vector<16x128xf32>
    %17 = arith.maximumf %15, %16 : vector<16x128xf32>
    %c0_16 = arith.constant 0 : index
    %c0_17 = arith.constant 0 : index
    %18 = vector.load %arg7[%c0_16, %c0_17] : memref<16x128xf32, #tpu.memory_space<vmem>>, vector<16x128xf32>
    tpu.vector_store %arg7[%c0_16, %c0_17], %17 {strides = array<i32>} : memref<16x128xf32, #tpu.memory_space<vmem>>, vector<16x128xf32>,
    return
  }
  func.func @transform_0(%arg0: i32) -> (i32, i32) {
    %c0_i32 = arith.constant 0 : i32
    %c0_i32_0 = arith.constant 0 : i32
    %c0_i32_1 = arith.constant 0 : i32
    return %c0_i32, %c0_i32_0 : i32, i32
  }
  func.func @transform_1(%arg0: i32) -> (i32, i32) {
    %c0_i32 = arith.constant 0 : i32
    %c0_i32_0 = arith.constant 0 : i32
    %c0_i32_1 = arith.constant 0 : i32
    return %c0_i32, %c0_i32_0 : i32, i32
  }
  func.func @transform_2(%arg0: i32) -> (i32, i32) {
    %c0_i32 = arith.constant 0 : i32
    %c0_i32_0 = arith.constant 0 : i32
    %c0_i32_1 = arith.constant 0 : i32
    return %c0_i32, %c0_i32_0 : i32, i32
  }
  func.func @transform_3(%arg0: i32) -> (i32, i32) {
    %c0_i32 = arith.constant 0 : i32
    %c0_i32_0 = arith.constant 0 : i32
    %c0_i32_1 = arith.constant 0 : i32
    return %c0_i32, %c0_i32_0 : i32, i32
  }
  func.func @transform_4(%arg0: i32) -> (i32, i32) {
    %c0_i32 = arith.constant 0 : i32
    %c0_i32_0 = arith.constant 0 : i32
    %c0_i32_1 = arith.constant 0 : i32
    return %c0_i32, %c0_i32_0 : i32, i32
  }
  func.func @transform_5(%arg0: i32) -> (i32, i32) {
    %c0_i32 = arith.constant 0 : i32
    %c0_i32_0 = arith.constant 0 : i32
    %c0_i32_1 = arith.constant 0 : i32
    return %c0_i32, %c0_i32_0 : i32, i32
  }
  func.func @transform_6(%arg0: i32) -> (i32, i32) {
    %c0_i32 = arith.constant 0 : i32
    %c0_i32_0 = arith.constant 0 : i32
    %c0_i32_1 = arith.constant 0 : i32
    return %c0_i32, %c0_i32_0 : i32, i32
  }
}

module attributes {stable_mosaic.version = 11 : i64} {
  func.func @_head_kernel(%arg0: i32, %arg1: memref<3x8x128xf32, #tpu.memory_space<vmem>>, %arg2: memref<8x8x128xf32, #tpu.memory_space<vmem>>, %arg3: memref<1x128xf32, #tpu.memory_space<vmem>>, %arg4: memref<128x128xf32, #tpu.memory_space<vmem>>, %arg5: memref<1x128xf32, #tpu.memory_space<vmem>>, %arg6: memref<3x128xf32, #tpu.memory_space<vmem>>) attributes {dimension_semantics = [#tpu.dimension_semantics<arbitrary>], iteration_bounds = array<i64: 1>, scalar_prefetch = 0 : i64, scratch_operands = 0 : i64, tpu.core_type = #tpu.core_type<tc>, window_params = [{pipeline_mode = #tpu.pipeline_mode<synchronous>, transform_indices = @transform_0, window_bounds = array<i64: 3, 8, 128>}, {pipeline_mode = #tpu.pipeline_mode<synchronous>, transform_indices = @transform_1, window_bounds = array<i64: 8, 8, 128>}, {pipeline_mode = #tpu.pipeline_mode<synchronous>, transform_indices = @transform_2, window_bounds = array<i64: 1, 128>}, {pipeline_mode = #tpu.pipeline_mode<synchronous>, transform_indices = @transform_3, window_bounds = array<i64: 128, 128>}, {pipeline_mode = #tpu.pipeline_mode<synchronous>, transform_indices = @transform_4, window_bounds = array<i64: 1, 128>}, {pipeline_mode = #tpu.pipeline_mode<synchronous>, transform_indices = @transform_5, window_bounds = array<i64: 3, 128>}]} {
    %c0 = arith.constant 0 : index
    %c0_0 = arith.constant 0 : index
    %c0_1 = arith.constant 0 : index
    %0 = vector.load %arg1[%c0, %c0_0, %c0_1] : memref<3x8x128xf32, #tpu.memory_space<vmem>>, vector<3x8x128xf32>
    "tpu.trace_start"() <{level = 10 : i32, message = "ghk,gjk->ghj"}> : () -> ()
    %cst = arith.constant dense<0.000000e+00> : vector<3x8x8xf32>
    %1 = tpu.matmul %0, %0, %cst {dimension_numbers = #tpu.dot_dimension_numbers<[2], [2], [1], [1], [0, 0, 0, 1, 1, 1], [0], [0]>} : vector<3x8x128xf32>, vector<3x8x128xf32>, vector<3x8x8xf32> -> vector<3x8x8xf32>
    %cst_2 = arith.constant 0.000000e+00 : f32
    "tpu.trace_stop"() : () -> ()
    %2 = vector.broadcast %cst_2 : f32 to vector<3x128xf32>
    %3 = vector.extract_strided_slice %1 {offsets = [0, 0, 0], sizes = [3, 1, 8], strides = [1, 1, 1]} : vector<3x8x8xf32> to vector<3x1x8xf32>
    %4 = vector.shape_cast %3 : vector<3x1x8xf32> to vector<3x8xf32>
    %c0_3 = arith.constant 0 : index
    %c0_4 = arith.constant 0 : index
    %c0_5 = arith.constant 0 : index
    %5 = vector.load %arg2[%c0_3, %c0_4, %c0_5] : memref<8x8x128xf32, #tpu.memory_space<vmem>>, vector<1x8x128xf32>
    %6 = vector.shape_cast %5 : vector<1x8x128xf32> to vector<8x128xf32>
    %cst_6 = arith.constant dense<0.000000e+00> : vector<3x128xf32>
    %7 = tpu.matmul %4, %6, %cst_6 {dimension_numbers = #tpu.dot_dimension_numbers<[1], [0], [0], [1], [0, 0, 1, 1], [], []>} : vector<3x8xf32>, vector<8x128xf32>, vector<3x128xf32> -> vector<3x128xf32>
    %8 = arith.addf %2, %7 : vector<3x128xf32>
    %9 = vector.extract_strided_slice %1 {offsets = [0, 1, 0], sizes = [3, 1, 8], strides = [1, 1, 1]} : vector<3x8x8xf32> to vector<3x1x8xf32>
    %10 = vector.shape_cast %9 : vector<3x1x8xf32> to vector<3x8xf32>
    %c1 = arith.constant 1 : index
    %c0_7 = arith.constant 0 : index
    %c0_8 = arith.constant 0 : index
    %11 = vector.load %arg2[%c1, %c0_7, %c0_8] : memref<8x8x128xf32, #tpu.memory_space<vmem>>, vector<1x8x128xf32>
    %12 = vector.shape_cast %11 : vector<1x8x128xf32> to vector<8x128xf32>
    %cst_9 = arith.constant dense<0.000000e+00> : vector<3x128xf32>
    %13 = tpu.matmul %10, %12, %cst_9 {dimension_numbers = #tpu.dot_dimension_numbers<[1], [0], [0], [1], [0, 0, 1, 1], [], []>} : vector<3x8xf32>, vector<8x128xf32>, vector<3x128xf32> -> vector<3x128xf32>
    %14 = arith.addf %8, %13 : vector<3x128xf32>
    %15 = vector.extract_strided_slice %1 {offsets = [0, 2, 0], sizes = [3, 1, 8], strides = [1, 1, 1]} : vector<3x8x8xf32> to vector<3x1x8xf32>
    %16 = vector.shape_cast %15 : vector<3x1x8xf32> to vector<3x8xf32>
    %c2 = arith.constant 2 : index
    %c0_10 = arith.constant 0 : index
    %c0_11 = arith.constant 0 : index
    %17 = vector.load %arg2[%c2, %c0_10, %c0_11] : memref<8x8x128xf32, #tpu.memory_space<vmem>>, vector<1x8x128xf32>
    %18 = vector.shape_cast %17 : vector<1x8x128xf32> to vector<8x128xf32>
    %cst_12 = arith.constant dense<0.000000e+00> : vector<3x128xf32>
    %19 = tpu.matmul %16, %18, %cst_12 {dimension_numbers = #tpu.dot_dimension_numbers<[1], [0], [0], [1], [0, 0, 1, 1], [], []>} : vector<3x8xf32>, vector<8x128xf32>, vector<3x128xf32> -> vector<3x128xf32>
    %20 = arith.addf %14, %19 : vector<3x128xf32>
    %21 = vector.extract_strided_slice %1 {offsets = [0, 3, 0], sizes = [3, 1, 8], strides = [1, 1, 1]} : vector<3x8x8xf32> to vector<3x1x8xf32>
    %22 = vector.shape_cast %21 : vector<3x1x8xf32> to vector<3x8xf32>
    %c3 = arith.constant 3 : index
    %c0_13 = arith.constant 0 : index
    %c0_14 = arith.constant 0 : index
    %23 = vector.load %arg2[%c3, %c0_13, %c0_14] : memref<8x8x128xf32, #tpu.memory_space<vmem>>, vector<1x8x128xf32>
    %24 = vector.shape_cast %23 : vector<1x8x128xf32> to vector<8x128xf32>
    %cst_15 = arith.constant dense<0.000000e+00> : vector<3x128xf32>
    %25 = tpu.matmul %22, %24, %cst_15 {dimension_numbers = #tpu.dot_dimension_numbers<[1], [0], [0], [1], [0, 0, 1, 1], [], []>} : vector<3x8xf32>, vector<8x128xf32>, vector<3x128xf32> -> vector<3x128xf32>
    %26 = arith.addf %20, %25 : vector<3x128xf32>
    %27 = vector.extract_strided_slice %1 {offsets = [0, 4, 0], sizes = [3, 1, 8], strides = [1, 1, 1]} : vector<3x8x8xf32> to vector<3x1x8xf32>
    %28 = vector.shape_cast %27 : vector<3x1x8xf32> to vector<3x8xf32>
    %c4 = arith.constant 4 : index
    %c0_16 = arith.constant 0 : index
    %c0_17 = arith.constant 0 : index
    %29 = vector.load %arg2[%c4, %c0_16, %c0_17] : memref<8x8x128xf32, #tpu.memory_space<vmem>>, vector<1x8x128xf32>
    %30 = vector.shape_cast %29 : vector<1x8x128xf32> to vector<8x128xf32>
    %cst_18 = arith.constant dense<0.000000e+00> : vector<3x128xf32>
    %31 = tpu.matmul %28, %30, %cst_18 {dimension_numbers = #tpu.dot_dimension_numbers<[1], [0], [0], [1], [0, 0, 1, 1], [], []>} : vector<3x8xf32>, vector<8x128xf32>, vector<3x128xf32> -> vector<3x128xf32>
    %32 = arith.addf %26, %31 : vector<3x128xf32>
    %33 = vector.extract_strided_slice %1 {offsets = [0, 5, 0], sizes = [3, 1, 8], strides = [1, 1, 1]} : vector<3x8x8xf32> to vector<3x1x8xf32>
    %34 = vector.shape_cast %33 : vector<3x1x8xf32> to vector<3x8xf32>
    %c5 = arith.constant 5 : index
    %c0_19 = arith.constant 0 : index
    %c0_20 = arith.constant 0 : index
    %35 = vector.load %arg2[%c5, %c0_19, %c0_20] : memref<8x8x128xf32, #tpu.memory_space<vmem>>, vector<1x8x128xf32>
    %36 = vector.shape_cast %35 : vector<1x8x128xf32> to vector<8x128xf32>
    %cst_21 = arith.constant dense<0.000000e+00> : vector<3x128xf32>
    %37 = tpu.matmul %34, %36, %cst_21 {dimension_numbers = #tpu.dot_dimension_numbers<[1], [0], [0], [1], [0, 0, 1, 1], [], []>} : vector<3x8xf32>, vector<8x128xf32>, vector<3x128xf32> -> vector<3x128xf32>
    %38 = arith.addf %32, %37 : vector<3x128xf32>
    %39 = vector.extract_strided_slice %1 {offsets = [0, 6, 0], sizes = [3, 1, 8], strides = [1, 1, 1]} : vector<3x8x8xf32> to vector<3x1x8xf32>
    %40 = vector.shape_cast %39 : vector<3x1x8xf32> to vector<3x8xf32>
    %c6 = arith.constant 6 : index
    %c0_22 = arith.constant 0 : index
    %c0_23 = arith.constant 0 : index
    %41 = vector.load %arg2[%c6, %c0_22, %c0_23] : memref<8x8x128xf32, #tpu.memory_space<vmem>>, vector<1x8x128xf32>
    %42 = vector.shape_cast %41 : vector<1x8x128xf32> to vector<8x128xf32>
    %cst_24 = arith.constant dense<0.000000e+00> : vector<3x128xf32>
    %43 = tpu.matmul %40, %42, %cst_24 {dimension_numbers = #tpu.dot_dimension_numbers<[1], [0], [0], [1], [0, 0, 1, 1], [], []>} : vector<3x8xf32>, vector<8x128xf32>, vector<3x128xf32> -> vector<3x128xf32>
    %44 = arith.addf %38, %43 : vector<3x128xf32>
    %45 = vector.extract_strided_slice %1 {offsets = [0, 7, 0], sizes = [3, 1, 8], strides = [1, 1, 1]} : vector<3x8x8xf32> to vector<3x1x8xf32>
    %46 = vector.shape_cast %45 : vector<3x1x8xf32> to vector<3x8xf32>
    %c7 = arith.constant 7 : index
    %c0_25 = arith.constant 0 : index
    %c0_26 = arith.constant 0 : index
    %47 = vector.load %arg2[%c7, %c0_25, %c0_26] : memref<8x8x128xf32, #tpu.memory_space<vmem>>, vector<1x8x128xf32>
    %48 = vector.shape_cast %47 : vector<1x8x128xf32> to vector<8x128xf32>
    %cst_27 = arith.constant dense<0.000000e+00> : vector<3x128xf32>
    %49 = tpu.matmul %46, %48, %cst_27 {dimension_numbers = #tpu.dot_dimension_numbers<[1], [0], [0], [1], [0, 0, 1, 1], [], []>} : vector<3x8xf32>, vector<8x128xf32>, vector<3x128xf32> -> vector<3x128xf32>
    %50 = arith.addf %44, %49 : vector<3x128xf32>
    %c0_28 = arith.constant 0 : index
    %c0_29 = arith.constant 0 : index
    %51 = vector.load %arg3[%c0_28, %c0_29] : memref<1x128xf32, #tpu.memory_space<vmem>>, vector<1x128xf32>
    %52 = vector.broadcast %51 : vector<1x128xf32> to vector<3x128xf32>
    %53 = arith.addf %50, %52 : vector<3x128xf32>
    %cst_30 = arith.constant 0.000000e+00 : f32
    %54 = vector.broadcast %cst_30 : f32 to vector<3x128xf32>
    %55 = arith.maximumf %53, %54 : vector<3x128xf32>
    %c0_31 = arith.constant 0 : index
    %c0_32 = arith.constant 0 : index
    %56 = vector.load %arg4[%c0_31, %c0_32] : memref<128x128xf32, #tpu.memory_space<vmem>>, vector<128x128xf32>
    %cst_33 = arith.constant dense<0.000000e+00> : vector<3x128xf32>
    %57 = tpu.matmul %55, %56, %cst_33 {dimension_numbers = #tpu.dot_dimension_numbers<[1], [0], [0], [1], [0, 0, 1, 1], [], []>} : vector<3x128xf32>, vector<128x128xf32>, vector<3x128xf32> -> vector<3x128xf32>
    %c0_34 = arith.constant 0 : index
    %c0_35 = arith.constant 0 : index
    %58 = vector.load %arg5[%c0_34, %c0_35] : memref<1x128xf32, #tpu.memory_space<vmem>>, vector<1x128xf32>
    %59 = vector.broadcast %58 : vector<1x128xf32> to vector<3x128xf32>
    %60 = arith.addf %57, %59 : vector<3x128xf32>
    %c0_36 = arith.constant 0 : index
    %c0_37 = arith.constant 0 : index
    %61 = vector.load %arg6[%c0_36, %c0_37] : memref<3x128xf32, #tpu.memory_space<vmem>>, vector<3x128xf32>
    tpu.vector_store %arg6[%c0_36, %c0_37], %60 {strides = array<i32>} : memref<3x128xf32, #tpu.memory_space<vmem>>, vector<3x128xf32>,
    return
  }
  func.func @transform_0(%arg0: i32) -> (i32, i32, i32) {
    %c0_i32 = arith.constant 0 : i32
    %c0_i32_0 = arith.constant 0 : i32
    %c0_i32_1 = arith.constant 0 : i32
    %c0_i32_2 = arith.constant 0 : i32
    return %c0_i32, %c0_i32_0, %c0_i32_1 : i32, i32, i32
  }
  func.func @transform_1(%arg0: i32) -> (i32, i32, i32) {
    %c0_i32 = arith.constant 0 : i32
    %c0_i32_0 = arith.constant 0 : i32
    %c0_i32_1 = arith.constant 0 : i32
    %c0_i32_2 = arith.constant 0 : i32
    return %c0_i32, %c0_i32_0, %c0_i32_1 : i32, i32, i32
  }
  func.func @transform_2(%arg0: i32) -> (i32, i32) {
    %c0_i32 = arith.constant 0 : i32
    %c0_i32_0 = arith.constant 0 : i32
    %c0_i32_1 = arith.constant 0 : i32
    return %c0_i32, %c0_i32_0 : i32, i32
  }
  func.func @transform_3(%arg0: i32) -> (i32, i32) {
    %c0_i32 = arith.constant 0 : i32
    %c0_i32_0 = arith.constant 0 : i32
    %c0_i32_1 = arith.constant 0 : i32
    return %c0_i32, %c0_i32_0 : i32, i32
  }
  func.func @transform_4(%arg0: i32) -> (i32, i32) {
    %c0_i32 = arith.constant 0 : i32
    %c0_i32_0 = arith.constant 0 : i32
    %c0_i32_1 = arith.constant 0 : i32
    return %c0_i32, %c0_i32_0 : i32, i32
  }
  func.func @transform_5(%arg0: i32) -> (i32, i32) {
    %c0_i32 = arith.constant 0 : i32
    %c0_i32_0 = arith.constant 0 : i32
    %c0_i32_1 = arith.constant 0 : i32
    return %c0_i32, %c0_i32_0 : i32, i32
  }
}

</mosaic_0001>

<llo_original>
// kernel: custom-call.31
$region0: #{custom-call.31}
  %s0 = inlined_call_operand.vmem [shape: f32[3,8,6], index: 0, kind: input, shape index: {}]
  %s1 = inlined_call_operand.vmem [shape: f32[3,8,6], index: 1, kind: output, shape index: {0}]
  %s2 = inlined_call_operand.vmem [shape: f32[3,6], index: 2, kind: output, shape index: {1}]
  %3 = xla_tuple %s1, %s2
  $region1: #{custom-call.31} parent=0
    #allocation0 [shape = 'u8[8192]{0}', space=vmem, size = 0x2000, scoped, tag = 'operand span for operand 0']
    #allocation1 [shape = 'u8[8192]{0}', space=vmem, size = 0x2000, scoped, tag = 'operand span for operand 1']
    #allocation2 [shape = 'u8[4096]{0}', space=vmem, size = 0x1000, scoped, tag = 'operand span for operand 2']
    #allocation3 [shape = 'u8[4096]{0}', space=vmem, size = 0x1000, scoped, tag = 'packed  for operand 2']
    loop: start=0, step=1, limit=5
    $region2: #{custom-call.31} parent=1 // loop_pre_header
      _
    $region3: #{custom-call.31} parent=1 // loop_header
      %s5 = sphi 0, %s9
      %p6 = scmp.ge.s32.totalorder %s5, 5
      %s12 = sphi 0, %s31
      %s13 = sphi 0, %s27
      %s14 = sphi 0, %s23
      %s15 = sphi 0, %s12
      %s16 = sphi 0, %s13
      %s17 = sphi 0, %s14
      %s18 = sphi 0, %s15
      %s19 = sphi 0, %s16
      %s20 = sphi 0, %s17
      %s46 = sphi 0, %s48
      %s49 = sphi 0, %s46
      %s50 = sphi 0, %s49
      %s66 = sphi 0, %s50
    $region4: #{custom-call.31} parent=1 // loop_header_branch
      %8 = sbr.rel (%p6) target = $region8
    $region5: #{custom-call.31} parent=1 // loop_body
      %s10 = ssub.s32 %s5, 1
      %s11 = ssub.s32 %s5, 2
      %s21 = sadd.s32 1, %s14
      %p22 = scmp.ge.s32.totalorder %s21, 1
      %s23 = scalar_select %p22, 0, %s21
      %s24 = sadd.s32 1, %s13
      %s25 = scalar_select %p22, %s24, %s13
      %p26 = scmp.ge.s32.totalorder %s25, 1
      %s27 = scalar_select %p26, 0, %s25
      %s28 = sadd.s32 1, %s12
      %s29 = scalar_select %p26, %s28, %s12
      %p30 = scmp.ge.s32.totalorder %s29, 3
      %s31 = scalar_select %p30, 0, %s29
      %p32 = scmp.lt.s32.totalorder %s12, 0
      %s33 = ssub.s32 0, %s12
      %s34 = scalar_select %p32, %s33, %s12
      %s35 = sshrl.u32 %s34, 3
      %s36 = ssub.s32 0, %s35
      %s37 = scalar_select %p32, %s36, %s35
      %p38 = scmp.lt.s32.totalorder %s31, 0
      %s39 = ssub.s32 0, %s31
      %s40 = scalar_select %p38, %s39, %s31
      %s41 = sshrl.u32 %s40, 3
      %s42 = ssub.s32 0, %s41
      %s43 = scalar_select %p38, %s42, %s41
      %s44 = ssub.s32 %s37, %s43
      %p45 = scmp.eq.s32.totalorder %s44, 0
      %s47 = sadd.s32 %s46, 1
      %s48 = scalar_select %p45, %s46, %s47
      %p51 = pneg %p45
      %p52 = scmp.eq.s32.totalorder %s5, 2
      %p53 = por %p51, %p52
      %p54 = scmp.ne.s32.totalorder %s46, %s49
      %p55 = scmp.eq.s32.totalorder %s5, 0
      %p56 = por %p54, %p55
      %p57 = scmp.ne.s32.totalorder %s46, %s49
      %p58 = scmp.eq.s32.totalorder %s10, 2
      %p59 = por %p57, %p58
      %p60 = scmp.ne.s32.totalorder %s49, %s50
      %p61 = scmp.eq.s32.totalorder %s10, 0
      %p62 = por %p60, %p61
      %p63 = scmp.ne.s32.totalorder %s49, %s50
      %p64 = scmp.eq.s32.totalorder %s11, 2
      %p65 = por %p63, %p64
      %p67 = scmp.ne.s32.totalorder %s50, %s66
      %p68 = scmp.eq.s32.totalorder %s11, 0
      %p69 = por %p67, %p68
      %p70 = scmp.le.s32.totalorder 1, %s5
      %p71 = scmp.lt.s32.totalorder %s5, 4
      %p72 = pnand %p70, %p71
      %p73 = pneg %p72
      // Predicated region
      $region9: #{custom-call.31} parent=5 // pred_check
        _
      $region10: #{custom-call.31} parent=5 // pred_check_branch
        %75 = sbr.rel (%p72) target = $region12
      $region11: #{custom-call.31} parent=5 // pred_region
        %s76 = ssub.s32 %s5, 1
      $region12: #{custom-call.31} parent=5 // pred_fallthru
        _
      %p77 = scmp.lt.s32.totalorder %s5, 3
      // Predicated region
      $region13: #{custom-call.31} parent=5 // pred_check
        %p78 = pneg %p77
      $region14: #{custom-call.31} parent=5 // pred_check_branch
        %80 = sbr.rel (%p78) target = $region16
      $region15: #{custom-call.31} parent=5 // pred_region
        %s81 = sand.u32 %s5, 1
        %s82 = sand.u32 %s5, 1
        %s83 = smul.addr %s82, 8
        %s84 = scalar_lea.vmem [#allocation0], %s83
        %s85 = sadd.s32 %s14, %s13
        %s86 = sadd.s32 %s85, %s12
        %s87 = smul.addr %s86, 8
        %s88 = scalar_lea.vmem %s0, %s87
        // Predicated region
        $region17: #{custom-call.31} parent=15 // pred_check
          _
        $region18: #{custom-call.31} parent=15 // pred_check_branch
          %90 = sbr.rel (0) target = $region20
        $region19: #{custom-call.31} parent=15 // pred_region
          // Predicated region
          $region21: #{custom-call.31} parent=19 // pred_check
            _
          $region22: #{custom-call.31} parent=19 // pred_check_branch
            %92 = sbr.rel (0) target = $region24
          $region23: #{custom-call.31} parent=19 // pred_region
            // Predicated region
            $region36: #{custom-call.31} parent=23 // pred_check
              _
            $region37: #{custom-call.31} parent=23 // pred_check_branch
              %108 = sbr.rel (0) target = $region39
            $region38: #{custom-call.31} parent=23 // pred_region
              loop: start=0, step=1, limit=1
              $region40: #{custom-call.31} parent=38 // loop_pre_header
                _
              $region41: #{custom-call.31} parent=38 // loop_header
                %s110 = sphi 0, %s114
                %p111 = scmp.ge.s32.totalorder %s110, 1
                %s115 = sphi %s88, %s88
                %s116 = sphi %s84, %s84
              $region42: #{custom-call.31} parent=38 // loop_header_branch
                %113 = sbr.rel (%p111) target = $region46
              $region43: #{custom-call.31} parent=38 // loop_body
                %v117 = vld [vmem:[%s115] sm:$0xff]
                %118 = vst [vmem:[%s116] sm:$0xff] %v117
              $region44: #{custom-call.31} parent=38 // loop_footer
                %s114 = sadd.s32 1, %s110
              $region45: #{custom-call.31} parent=38 // loop_footer_branch
                %109 = sbr.rel target = $region41
              $region46: #{custom-call.31} parent=38 // loop_exit
                _
            $region39: #{custom-call.31} parent=23 // pred_fallthru
              _
            // Predicated region
            $region47: #{custom-call.31} parent=23 // pred_check
              _
            $region48: #{custom-call.31} parent=23 // pred_check_branch
              %120 = sbr.rel target = $region50
            $region49: #{custom-call.31} parent=23 // pred_region
              _
            $region50: #{custom-call.31} parent=23 // pred_fallthru
              _
          $region24: #{custom-call.31} parent=19 // pred_fallthru
            _
          // Predicated region
          $region25: #{custom-call.31} parent=19 // pred_check
            _
          $region26: #{custom-call.31} parent=19 // pred_check_branch
            %94 = sbr.rel target = $region28
          $region27: #{custom-call.31} parent=19 // pred_region
            %s96 = ssub.s32 256, 1
            loop: start=0, step=1, limit=1
            $region29: #{custom-call.31} parent=27 // loop_pre_header
              _
            $region30: #{custom-call.31} parent=27 // loop_header
              %s98 = sphi 0, %s102
              %p99 = scmp.ge.s32.totalorder %s98, 1
              %s103 = sphi %s88, %s88
              %s104 = sphi %s84, %s84
            $region31: #{custom-call.31} parent=27 // loop_header_branch
              %101 = sbr.rel (%p99) target = $region35
            $region32: #{custom-call.31} parent=27 // loop_body
              %v105 = vld [vmem:[%s103] sm:%s96]
              %106 = vst [vmem:[%s104] sm:%s96] %v105
            $region33: #{custom-call.31} parent=27 // loop_footer
              %s102 = sadd.s32 1, %s98
            $region34: #{custom-call.31} parent=27 // loop_footer_branch
              %97 = sbr.rel target = $region30
            $region35: #{custom-call.31} parent=27 // loop_exit
              _
          $region28: #{custom-call.31} parent=19 // pred_fallthru
            _
        $region20: #{custom-call.31} parent=15 // pred_fallthru
          _
        %121 = vnop
      $region16: #{custom-call.31} parent=5 // pred_fallthru
        _
      %p122 = scmp.le.s32.totalorder 1, %s5
      %p123 = scmp.lt.s32.totalorder %s5, 4
      %p124 = pnand %p122, %p123
      %p125 = pneg %p124
      // Predicated region
      $region51: #{custom-call.31} parent=5 // pred_check
        _
      $region52: #{custom-call.31} parent=5 // pred_check_branch
        %127 = sbr.rel (%p124) target = $region54
      $region53: #{custom-call.31} parent=5 // pred_region
        #allocation4 [shape = 'f32[8,128]{1,0}', space=vmem, size = 0x1000, scoped, tag = 'scratch for Householder reflectors']
        %s128 = ssub.s32 %s5, 1
        %s129 = sand.u32 %s10, 1
        %s130 = sand.u32 %s10, 1
        %s131 = smul.addr %s130, 8
        %s132 = scalar_lea.vmem [#allocation0], %s131
        %s133 = sand.u32 %s10, 1
        %s134 = sand.u32 %s10, 1
        %s135 = smul.addr %s134, 8
        %s136 = scalar_lea.vmem [#allocation0], %s135
        %s137 = sand.u32 %s10, 1
        %s138 = sand.u32 %s10, 1
        %s139 = smul.addr %s138, 8
        %s140 = scalar_lea.vmem [#allocation1], %s139
        %p141 = pneg %p62
        %p142 = pneg %p59
        %s143 = sand.u32 %s49, 1
        %s144 = sand.u32 %s49, 1
        %s145 = smul.addr %s144, 4
        %s146 = scalar_lea.vmem [#allocation3], %s145
        %p147 = scmp.lt.s32.totalorder %s15, 0
        %s148 = ssub.s32 0, %s15
        %s149 = scalar_select %p147, %s148, %s15
        %s150 = sshrl.u32 %s149, 3
        %s151 = ssub.s32 0, %s150
        %s152 = scalar_select %p147, %s151, %s150
        %s153 = sand.u32 %s15, 7
        %s154 = scalar_lea.vmem [#allocation2], %s153
        %v155 = vld [vmem:[%s132] sm:$0xff]
        %156 = vst [vmem:[%s140] sm:$0xff] %v155
        %157 = vst [vmem:[%s154] sm:$0x1] 0.0
        loop: start=0, step=1, limit=6
        $region55: #{custom-call.31} parent=53 // loop_pre_header
          _
        $region56: #{custom-call.31} parent=53 // loop_header
          %s159 = sphi 0, %s163
          %p160 = scmp.ge.s32.totalorder %s159, 6
        $region57: #{custom-call.31} parent=53 // loop_header_branch
          %162 = sbr.rel (%p160) target = $region61
        $region58: #{custom-call.31} parent=53 // loop_body
          %v164 = vld [vmem:[%s140] sm:$0xff]
          %v165 = vlaneseq
          %v166 = vshrl.u32 %v165, 7
          %v168 = vstv %s159
          %vm169 = vcmp.gt.s32.totalorder %v166, %v168
          %vm170 = vcmp.lt.s32.totalorder %v166, 8
          %vm171 = vmand %vm169, %vm170
          %v172 = vsel %vm171, %v164, 0.0
          %v173 = vmul.f32 %v172, %v172
          %v174 = vrot.slane %v173, 4
          %v175 = vadd.f32 %v173, %v174
          %v176 = vrot.slane %v175, 2
          %v177 = vadd.f32 %v175, %v176
          %v178 = vrot.slane %v177, 1
          %v179 = vadd.f32 %v177, %v178
          %v180 = vrsqrt.pop %v179
          %v181 = vmul.f32 %v180, %v179
          %v182 = vmul.f32 %v181, %v180
          %v183 = vmul.f32 0.5, %v182
          %v184 = vsub.f32 1.5, %v183
          %v185 = vmul.f32 %v180, %v184
          %v186 = vmul.f32 %v179, %v185
          %vm187 = vcmp.eq.f32.partialorder %v179, inf
          %v188 = vsel %vm187, %v179, %v186
          %vm189 = vcmp.eq.f32.partialorder %v179, 0.0
          %v190 = vand.u32 %v179, 2147483648
          %v191 = vsel %vm189, %v190, %v188
          %vm192 = vcmp.eq.f32.partialorder %v179, 0.0
          %s193 = sshrl.u32 %s159, 3
          %s194 = sand.u32 %s159, 7
          %s195 = smul.addr %s193, 8
          %s196 = sadd.s32 %s194, %s195
          %s197 = scalar_lea.vmem %s140, %s196 [#allocation1]
          %v198 = vld [vmem:[%s197] ss:$0 sm:$0xff]
          %v199 = vand.u32 2147483647, %v198
          %v200 = vmax.f32 %v199, 0.0
          %v201 = vand.u32 2147483647, %v191
          %v202 = vmax.f32 %v200, %v201
          %v203 = vrcp.pop %v202
          %v204 = vmul.f32 %v202, %v203
          %v205 = vsub.f32 1.0, %v204
          %v206 = vmul.f32 %v203, %v205
          %v207 = vadd.f32 %v203, %v206
          %vm208 = vweird.f32 %v202
          %vm209 = vweird.f32 %v203
          %vm210 = vmor %vm208, %vm209
          %v211 = vsel %vm210, %v203, %v207
          %v212 = vand.u32 2147483647, %v202
          %vm213 = vcmp.eq.f32.partialorder %v212, 8.507059e+37
          %v214 = vand.u32 %v202, 2147483648
          %v215 = vor.u32 1.1754944e-38, %v214
          %v216 = vsel %vm213, %v215, %v211
          %v217 = vmul.f32 %v199, %v216
          %v218 = vmul.f32 %v217, %v217
          %v219 = vrcp.pop %v202
          %v220 = vmul.f32 %v202, %v219
          %v221 = vsub.f32 1.0, %v220
          %v222 = vmul.f32 %v219, %v221
          %v223 = vadd.f32 %v219, %v222
          %vm224 = vweird.f32 %v202
          %vm225 = vweird.f32 %v219
          %vm226 = vmor %vm224, %vm225
          %v227 = vsel %vm226, %v219, %v223
          %v228 = vand.u32 2147483647, %v202
          %vm229 = vcmp.eq.f32.partialorder %v228, 8.507059e+37
          %v230 = vand.u32 %v202, 2147483648
          %v231 = vor.u32 1.1754944e-38, %v230
          %v232 = vsel %vm229, %v231, %v227
          %v233 = vmul.f32 0.0, %v232
          %v234 = vmul.f32 %v233, %v233
          %v235 = vadd.f32 %v218, %v234
          %v236 = vrcp.pop %v202
          %v237 = vmul.f32 %v202, %v236
          %v238 = vsub.f32 1.0, %v237
          %v239 = vmul.f32 %v236, %v238
          %v240 = vadd.f32 %v236, %v239
          %vm241 = vweird.f32 %v202
          %vm242 = vweird.f32 %v236
          %vm243 = vmor %vm241, %vm242
          %v244 = vsel %vm243, %v236, %v240
          %v245 = vand.u32 2147483647, %v202
          %vm246 = vcmp.eq.f32.partialorder %v245, 8.507059e+37
          %v247 = vand.u32 %v202, 2147483648
          %v248 = vor.u32 1.1754944e-38, %v247
          %v249 = vsel %vm246, %v248, %v244
          %v250 = vmul.f32 %v201, %v249
          %v251 = vmul.f32 %v250, %v250
          %v252 = vadd.f32 %v235, %v251
          %vm253 = vcmp.eq.f32.partialorder %v202, 0.0
          %v254 = vrsqrt.pop %v252
          %v255 = vmul.f32 %v254, %v252
          %v256 = vmul.f32 %v255, %v254
          %v257 = vmul.f32 0.5, %v256
          %v258 = vsub.f32 1.5, %v257
          %v259 = vmul.f32 %v254, %v258
          %v260 = vmul.f32 %v252, %v259
          %vm261 = vcmp.eq.f32.partialorder %v252, inf
          %v262 = vsel %vm261, %v252, %v260
          %vm263 = vcmp.eq.f32.partialorder %v252, 0.0
          %v264 = vand.u32 %v252, 2147483648
          %v265 = vsel %vm263, %v264, %v262
          %v266 = vmul.f32 %v202, %v265
          %v267 = vsel %vm253, 0.0, %v266
          %vm268 = vcmp.lt.f32.partialorder %v198, 0.0
          %v269 = vxor.u32 %v267, 2147483648
          %v270 = vsel %vm268, %v267, %v269
          %v271 = vsub.f32 %v270, %v198
          %v272 = vrcp.pop %v270
          %v273 = vmul.f32 %v270, %v272
          %v274 = vsub.f32 1.0, %v273
          %v275 = vmul.f32 %v272, %v274
          %v276 = vadd.f32 %v272, %v275
          %vm277 = vweird.f32 %v270
          %vm278 = vweird.f32 %v272
          %vm279 = vmor %vm277, %vm278
          %v280 = vsel %vm279, %v272, %v276
          %v281 = vand.u32 2147483647, %v270
          %vm282 = vcmp.eq.f32.partialorder %v281, 8.507059e+37
          %v283 = vand.u32 %v270, 2147483648
          %v284 = vor.u32 1.1754944e-38, %v283
          %v285 = vsel %vm282, %v284, %v280
          %v286 = vmul.f32 %v271, %v285
          %v287 = vsel %vm192, %v198, %v270
          %v288 = vsel %vm192, 0.0, %v286
          %v289 = vsub.f32 %v198, %v287
          %s290 = smov %s140
          %v291 = vlaneseq
          %v292 = vshrl.u32 %v291, 7
          %v293 = vmov %v292
          %v294 = vld [vmem:[%s290] sm:$0xff]
          %v296 = vstv %s159
          %vm297 = vcmp.gt.s32.totalorder %v293, %v296
          %vm298 = vcmp.lt.s32.totalorder %v293, 8
          %vm299 = vmand %vm297, %vm298
          %v300 = vsel %vm299, %v294, 0.0
          %v301 = vrcp.pop %v289
          %v302 = vmul.f32 %v289, %v301
          %v303 = vsub.f32 1.0, %v302
          %v304 = vmul.f32 %v301, %v303
          %v305 = vadd.f32 %v301, %v304
          %vm306 = vweird.f32 %v289
          %vm307 = vweird.f32 %v301
          %vm308 = vmor %vm306, %vm307
          %v309 = vsel %vm308, %v301, %v305
          %v310 = vand.u32 2147483647, %v289
          %vm311 = vcmp.eq.f32.partialorder %v310, 8.507059e+37
          %v312 = vand.u32 %v289, 2147483648
          %v313 = vor.u32 1.1754944e-38, %v312
          %v314 = vsel %vm311, %v313, %v309
          %v315 = vmul.f32 %v300, %v314
          %v316 = vsel %vm192, 0.0, %v315
          %v317 = vstv %s159
          %v318 = vlaneseq
          %v319 = vand.u32 %v318, 127
          %vm320 = vcmp.eq.s32.totalorder %v319, %v317
          %v321 = vsel %vm320, %v316, 0.0
          %322 = vadd.xlane.f32.xlu0 %v321
          %v323 = vpop.xlane.xlu0 %322
          %324 = vst [vmem:[#allocation4] sm:$0xff] %v323
          %s325 = scalar_lea.vmem [#allocation4], %s159
          %326 = vst [vmem:[%s325] sm:$0x1] 1.0
          %v327 = vstv %s159
          %v328 = vlaneseq
          %v329 = vand.u32 %v328, 127
          %vm330 = vcmp.eq.s32.totalorder %v329, %v327
          %v331 = vsel %vm330, %v288, 0.0
          %332 = vadd.xlane.f32.xlu0 %v331
          %v333 = vpop.xlane.xlu0 %332
          %v334 = vstv %s159
          %v335 = vlaneseq
          %v336 = vand.u32 %v335, 127
          %vm337 = vcmp.eq.s32.totalorder %v336, %v334
          %v338 = vld [vmem:[%s154] ss:$0 sm:$0xff]
          %v339 = vsel %vm337, %v333, %v338
          %340 = vst [vmem:[%s154] sm:$0x1] %v339
          %s341 = smov %s140
          %s342 = smov [#allocation4]
          %v343 = vlaneseq
          %v344 = vshrl.u32 %v343, 7
          %v345 = vmov %v344
          %v347 = vld [vmem:[%s342] sm:$0xff]
          %v348 = vld [vmem:[%s341] sm:$0xff]
          %v349 = vmul.f32 %v347, %v348
          %vm350 = vcmp.lt.s32.totalorder %v345, 8
          %v351 = vsel %vm350, %v349, 0.0
          %v352 = vrot.slane %v351, 4
          %v353 = vadd.f32 %v351, %v352
          %v354 = vrot.slane %v353, 2
          %v355 = vadd.f32 %v353, %v354
          %v356 = vrot.slane %v355, 1
          %v357 = vadd.f32 %v355, %v356
          %s358 = smov %s341
          %s359 = smov %s342
          %v360 = vlaneseq
          %v361 = vshrl.u32 %v360, 7
          %v362 = vmov %v361
          %v363 = vmul.f32 %v357, %v333
          %v365 = vlaneseq
          %v366 = vand.u32 %v365, 127
          %v367 = vld [vmem:[%s359] sm:$0xff]
          %v368 = vmul.f32 %v367, %v363
          %v369 = vld [vmem:[%s358] sm:$0xff]
          %v370 = vstv %s159
          %vm371 = vcmp.gt.s32.totalorder %v366, %v370
          %v372 = vsub.f32 %v369, %v368
          %v373 = vsel %vm371, %v372, %v369
          %v374 = vstv %s159
          %v375 = vlaneseq
          %v376 = vand.u32 %v375, 127
          %vm377 = vcmp.eq.s32.totalorder %v376, %v374
          %v378 = vstv %s159
          %vm379 = vcmp.ge.s32.totalorder %v362, %v378
          %vm380 = vmand %vm377, %vm379
          %v381 = vsel %vm380, %v367, %v373
          %382 = vst [vmem:[%s358] sm:$0xff] %v381
          %s383 = scalar_lea.vmem %s358, %s159
          %v384 = vld [vmem:[%s383] ss:$0 sm:$0xff]
          %v385 = vstv %s159
          %v386 = vlaneseq
          %v387 = vand.u32 %v386, 127
          %vm388 = vcmp.eq.s32.totalorder %v387, %v385
          %v389 = vsel %vm388, %v287, %v384
          %390 = vst [vmem:[%s383] sm:$0x1] %v389
        $region59: #{custom-call.31} parent=53 // loop_footer
          %s163 = sadd.s32 1, %s159
        $region60: #{custom-call.31} parent=53 // loop_footer_branch
          %158 = sbr.rel target = $region56
        $region61: #{custom-call.31} parent=53 // loop_exit
          _
        %s392 = ssub.s32 16, 1
        %v393 = vld [vmem:[#allocation2] sm:%s392]
        %s395 = ssub.s32 16, 1
        %396 = vst [vmem:[%s146] sm:%s395] %v393
        %s397 = sand.u32 %s10, 1
        %s398 = sand.u32 %s10, 1
        %s399 = smul.addr %s398, 8
        %s400 = scalar_lea.vmem [#allocation1], %s399
        %s401 = sand.u32 %s49, 1
        %s402 = sand.u32 %s49, 1
        %s403 = smul.addr %s402, 4
        %s404 = scalar_lea.vmem [#allocation3], %s403
        %s405 = sadd.s32 %s17, %s16
        %s406 = sadd.s32 %s405, %s15
        %s407 = smul.addr %s406, 8
        %s408 = scalar_lea.vmem %s1, %s407
        // Predicated region
        $region62: #{custom-call.31} parent=53 // pred_check
          _
        $region63: #{custom-call.31} parent=53 // pred_check_branch
          %410 = sbr.rel (0) target = $region65
        $region64: #{custom-call.31} parent=53 // pred_region
          // Predicated region
          $region66: #{custom-call.31} parent=64 // pred_check
            _
          $region67: #{custom-call.31} parent=64 // pred_check_branch
            %412 = sbr.rel (0) target = $region69
          $region68: #{custom-call.31} parent=64 // pred_region
            // Predicated region
            $region81: #{custom-call.31} parent=68 // pred_check
              _
            $region82: #{custom-call.31} parent=68 // pred_check_branch
              %428 = sbr.rel (0) target = $region84
            $region83: #{custom-call.31} parent=68 // pred_region
              loop: start=0, step=1, limit=1
              $region85: #{custom-call.31} parent=83 // loop_pre_header
                _
              $region86: #{custom-call.31} parent=83 // loop_header
                %s430 = sphi 0, %s434
                %p431 = scmp.ge.s32.totalorder %s430, 1
                %s435 = sphi %s400, %s400
                %s436 = sphi %s408, %s408
              $region87: #{custom-call.31} parent=83 // loop_header_branch
                %433 = sbr.rel (%p431) target = $region91
              $region88: #{custom-call.31} parent=83 // loop_body
                %v437 = vld [vmem:[%s435] sm:$0xff]
                %438 = vst [vmem:[%s436] sm:$0xff] %v437
              $region89: #{custom-call.31} parent=83 // loop_footer
                %s434 = sadd.s32 1, %s430
              $region90: #{custom-call.31} parent=83 // loop_footer_branch
                %429 = sbr.rel target = $region86
              $region91: #{custom-call.31} parent=83 // loop_exit
                _
            $region84: #{custom-call.31} parent=68 // pred_fallthru
              _
            // Predicated region
            $region92: #{custom-call.31} parent=68 // pred_check
              _
            $region93: #{custom-call.31} parent=68 // pred_check_branch
              %440 = sbr.rel target = $region95
            $region94: #{custom-call.31} parent=68 // pred_region
              _
            $region95: #{custom-call.31} parent=68 // pred_fallthru
              _
          $region69: #{custom-call.31} parent=64 // pred_fallthru
            _
          // Predicated region
          $region70: #{custom-call.31} parent=64 // pred_check
            _
          $region71: #{custom-call.31} parent=64 // pred_check_branch
            %414 = sbr.rel target = $region73
          $region72: #{custom-call.31} parent=64 // pred_region
            %s416 = ssub.s32 256, 1
            loop: start=0, step=1, limit=1
            $region74: #{custom-call.31} parent=72 // loop_pre_header
              _
            $region75: #{custom-call.31} parent=72 // loop_header
              %s418 = sphi 0, %s422
              %p419 = scmp.ge.s32.totalorder %s418, 1
              %s423 = sphi %s400, %s400
              %s424 = sphi %s408, %s408
            $region76: #{custom-call.31} parent=72 // loop_header_branch
              %421 = sbr.rel (%p419) target = $region80
            $region77: #{custom-call.31} parent=72 // loop_body
              %v425 = vld [vmem:[%s423] sm:%s416]
              %426 = vst [vmem:[%s424] sm:%s416] %v425
            $region78: #{custom-call.31} parent=72 // loop_footer
              %s422 = sadd.s32 1, %s418
            $region79: #{custom-call.31} parent=72 // loop_footer_branch
              %417 = sbr.rel target = $region75
            $region80: #{custom-call.31} parent=72 // loop_exit
              _
          $region73: #{custom-call.31} parent=64 // pred_fallthru
            _
        $region65: #{custom-call.31} parent=53 // pred_fallthru
          _
        %441 = vnop
        // Predicated region
        $region96: #{custom-call.31} parent=53 // pred_check
          %p442 = pneg %p59
        $region97: #{custom-call.31} parent=53 // pred_check_branch
          %444 = sbr.rel (%p442) target = $region99
        $region98: #{custom-call.31} parent=53 // pred_region
          %p445 = scmp.lt.s32.totalorder %s15, 0
          %s446 = ssub.s32 0, %s15
          %s447 = scalar_select %p445, %s446, %s15
          %s448 = sshrl.u32 %s447, 3
          %s449 = ssub.s32 0, %s448
          %s450 = scalar_select %p445, %s449, %s448
          %s451 = smul.addr %s450, 4
          %s452 = scalar_lea.vmem %s2, %s451
          // Predicated region
          $region100: #{custom-call.31} parent=98 // pred_check
            _
          $region101: #{custom-call.31} parent=98 // pred_check_branch
            %454 = sbr.rel (0) target = $region103
          $region102: #{custom-call.31} parent=98 // pred_region
            // Predicated region
            $region104: #{custom-call.31} parent=102 // pred_check
              _
            $region105: #{custom-call.31} parent=102 // pred_check_branch
              %456 = sbr.rel target = $region107
            $region106: #{custom-call.31} parent=102 // pred_region
              // Predicated region
              $region119: #{custom-call.31} parent=106 // pred_check
                _
              $region120: #{custom-call.31} parent=106 // pred_check_branch
                %472 = sbr.rel (0) target = $region122
              $region121: #{custom-call.31} parent=106 // pred_region
                %s474 = ssub.s32 16, 1
                loop: start=0, step=1, limit=1
                $region123: #{custom-call.31} parent=121 // loop_pre_header
                  _
                $region124: #{custom-call.31} parent=121 // loop_header
                  %s476 = sphi 0, %s480
                  %p477 = scmp.ge.s32.totalorder %s476, 1
                  %s481 = sphi %s404, %s404
                  %s482 = sphi %s452, %s452
                $region125: #{custom-call.31} parent=121 // loop_header_branch
                  %479 = sbr.rel (%p477) target = $region129
                $region126: #{custom-call.31} parent=121 // loop_body
                  %v483 = vld [vmem:[%s481] sm:%s474]
                  %484 = vst [vmem:[%s482] sm:%s474] %v483
                $region127: #{custom-call.31} parent=121 // loop_footer
                  %s480 = sadd.s32 1, %s476
                $region128: #{custom-call.31} parent=121 // loop_footer_branch
                  %475 = sbr.rel target = $region124
                $region129: #{custom-call.31} parent=121 // loop_exit
                  _
              $region122: #{custom-call.31} parent=106 // pred_fallthru
                _
            $region107: #{custom-call.31} parent=102 // pred_fallthru
              _
            // Predicated region
            $region108: #{custom-call.31} parent=102 // pred_check
              _
            $region109: #{custom-call.31} parent=102 // pred_check_branch
              %458 = sbr.rel (0) target = $region111
            $region110: #{custom-call.31} parent=102 // pred_region
              %s460 = ssub.s32 16, 1
              loop: start=0, step=1, limit=1
              $region112: #{custom-call.31} parent=110 // loop_pre_header
                _
              $region113: #{custom-call.31} parent=110 // loop_header
                %s462 = sphi 0, %s466
                %p463 = scmp.ge.s32.totalorder %s462, 1
                %s467 = sphi %s404, %s404
                %s468 = sphi %s452, %s452
              $region114: #{custom-call.31} parent=110 // loop_header_branch
                %465 = sbr.rel (%p463) target = $region118
              $region115: #{custom-call.31} parent=110 // loop_body
                %v469 = vld [vmem:[%s467] sm:%s460]
                %470 = vst [vmem:[%s468] sm:%s460] %v469
              $region116: #{custom-call.31} parent=110 // loop_footer
                %s466 = sadd.s32 1, %s462
              $region117: #{custom-call.31} parent=110 // loop_footer_branch
                %461 = sbr.rel target = $region113
              $region118: #{custom-call.31} parent=110 // loop_exit
                _
            $region111: #{custom-call.31} parent=102 // pred_fallthru
              _
          $region103: #{custom-call.31} parent=98 // pred_fallthru
            _
          %485 = vnop
        $region99: #{custom-call.31} parent=53 // pred_fallthru
          _
      $region54: #{custom-call.31} parent=5 // pred_fallthru
        _
      %p486 = scmp.le.s32.totalorder 2, %s5
      // Predicated region
      $region130: #{custom-call.31} parent=5 // pred_check
        %p487 = pneg %p486
      $region131: #{custom-call.31} parent=5 // pred_check_branch
        %489 = sbr.rel (%p487) target = $region133
      $region132: #{custom-call.31} parent=5 // pred_region
        %s490 = ssub.s32 %s5, 2
        %s491 = sand.u32 %s11, 1
        %s492 = sand.u32 %s11, 1
        %s493 = smul.addr %s492, 8
        %s494 = scalar_lea.vmem [#allocation1], %s493
        // Predicated region
        $region134: #{custom-call.31} parent=132 // pred_check
          %p495 = pneg %p65
        $region135: #{custom-call.31} parent=132 // pred_check_branch
          %497 = sbr.rel (%p495) target = $region137
        $region136: #{custom-call.31} parent=132 // pred_region
          %s498 = sand.u32 %s50, 1
          %s499 = sand.u32 %s50, 1
          %s500 = smul.addr %s499, 4
          %s501 = scalar_lea.vmem [#allocation3], %s500
        $region137: #{custom-call.31} parent=132 // pred_fallthru
          _
      $region133: #{custom-call.31} parent=5 // pred_fallthru
        _
    $region6: #{custom-call.31} parent=1 // loop_footer
      %s9 = sadd.s32 1, %s5
    $region7: #{custom-call.31} parent=1 // loop_footer_branch
      %4 = sbr.rel target = $region3
    $region8: #{custom-call.31} parent=1 // loop_exit
      _

// kernel: custom-call.71
$region0: #{custom-call.71}
  %s0 = inlined_call_operand.vmem [shape: f32[3,12,6], index: 0, kind: input, shape index: {}]
  %s1 = inlined_call_operand.vmem [shape: f32[3,12,6], index: 1, kind: output, shape index: {0}]
  %s2 = inlined_call_operand.vmem [shape: f32[3,6], index: 2, kind: output, shape index: {1}]
  %3 = xla_tuple %s1, %s2
  $region1: #{custom-call.71} parent=0
    #allocation0 [shape = 'u8[16384]{0}', space=vmem, size = 0x4000, scoped, tag = 'operand span for operand 0']
    #allocation1 [shape = 'u8[16384]{0}', space=vmem, size = 0x4000, scoped, tag = 'operand span for operand 1']
    #allocation2 [shape = 'u8[4096]{0}', space=vmem, size = 0x1000, scoped, tag = 'operand span for operand 2']
    #allocation3 [shape = 'u8[4096]{0}', space=vmem, size = 0x1000, scoped, tag = 'packed  for operand 2']
    loop: start=0, step=1, limit=5
    $region2: #{custom-call.71} parent=1 // loop_pre_header
      _
    $region3: #{custom-call.71} parent=1 // loop_header
      %s5 = sphi 0, %s9
      %p6 = scmp.ge.s32.totalorder %s5, 5
      %s12 = sphi 0, %s31
      %s13 = sphi 0, %s27
      %s14 = sphi 0, %s23
      %s15 = sphi 0, %s12
      %s16 = sphi 0, %s13
      %s17 = sphi 0, %s14
      %s18 = sphi 0, %s15
      %s19 = sphi 0, %s16
      %s20 = sphi 0, %s17
      %s46 = sphi 0, %s48
      %s49 = sphi 0, %s46
      %s50 = sphi 0, %s49
      %s66 = sphi 0, %s50
    $region4: #{custom-call.71} parent=1 // loop_header_branch
      %8 = sbr.rel (%p6) target = $region8
    $region5: #{custom-call.71} parent=1 // loop_body
      %s10 = ssub.s32 %s5, 1
      %s11 = ssub.s32 %s5, 2
      %s21 = sadd.s32 1, %s14
      %p22 = scmp.ge.s32.totalorder %s21, 1
      %s23 = scalar_select %p22, 0, %s21
      %s24 = sadd.s32 1, %s13
      %s25 = scalar_select %p22, %s24, %s13
      %p26 = scmp.ge.s32.totalorder %s25, 1
      %s27 = scalar_select %p26, 0, %s25
      %s28 = sadd.s32 1, %s12
      %s29 = scalar_select %p26, %s28, %s12
      %p30 = scmp.ge.s32.totalorder %s29, 3
      %s31 = scalar_select %p30, 0, %s29
      %p32 = scmp.lt.s32.totalorder %s12, 0
      %s33 = ssub.s32 0, %s12
      %s34 = scalar_select %p32, %s33, %s12
      %s35 = sshrl.u32 %s34, 3
      %s36 = ssub.s32 0, %s35
      %s37 = scalar_select %p32, %s36, %s35
      %p38 = scmp.lt.s32.totalorder %s31, 0
      %s39 = ssub.s32 0, %s31
      %s40 = scalar_select %p38, %s39, %s31
      %s41 = sshrl.u32 %s40, 3
      %s42 = ssub.s32 0, %s41
      %s43 = scalar_select %p38, %s42, %s41
      %s44 = ssub.s32 %s37, %s43
      %p45 = scmp.eq.s32.totalorder %s44, 0
      %s47 = sadd.s32 %s46, 1
      %s48 = scalar_select %p45, %s46, %s47
      %p51 = pneg %p45
      %p52 = scmp.eq.s32.totalorder %s5, 2
      %p53 = por %p51, %p52
      %p54 = scmp.ne.s32.totalorder %s46, %s49
      %p55 = scmp.eq.s32.totalorder %s5, 0
      %p56 = por %p54, %p55
      %p57 = scmp.ne.s32.totalorder %s46, %s49
      %p58 = scmp.eq.s32.totalorder %s10, 2
      %p59 = por %p57, %p58
      %p60 = scmp.ne.s32.totalorder %s49, %s50
      %p61 = scmp.eq.s32.totalorder %s10, 0
      %p62 = por %p60, %p61
      %p63 = scmp.ne.s32.totalorder %s49, %s50
      %p64 = scmp.eq.s32.totalorder %s11, 2
      %p65 = por %p63, %p64
      %p67 = scmp.ne.s32.totalorder %s50, %s66
      %p68 = scmp.eq.s32.totalorder %s11, 0
      %p69 = por %p67, %p68
      %p70 = scmp.le.s32.totalorder 1, %s5
      %p71 = scmp.lt.s32.totalorder %s5, 4
      %p72 = pnand %p70, %p71
      %p73 = pneg %p72
      // Predicated region
      $region9: #{custom-call.71} parent=5 // pred_check
        _
      $region10: #{custom-call.71} parent=5 // pred_check_branch
        %75 = sbr.rel (%p72) target = $region12
      $region11: #{custom-call.71} parent=5 // pred_region
        %s76 = ssub.s32 %s5, 1
      $region12: #{custom-call.71} parent=5 // pred_fallthru
        _
      %p77 = scmp.lt.s32.totalorder %s5, 3
      // Predicated region
      $region13: #{custom-call.71} parent=5 // pred_check
        %p78 = pneg %p77
      $region14: #{custom-call.71} parent=5 // pred_check_branch
        %80 = sbr.rel (%p78) target = $region16
      $region15: #{custom-call.71} parent=5 // pred_region
        %s81 = sand.u32 %s5, 1
        %s82 = sand.u32 %s5, 1
        %s83 = smul.addr %s82, 16
        %s84 = scalar_lea.vmem [#allocation0], %s83
        %s85 = smul.u32 2, %s13
        %s86 = sadd.s32 %s14, %s85
        %s87 = smul.addr %s12, 2
        %s88 = sadd.s32 %s86, %s87
        %s89 = smul.addr %s88, 8
        %s90 = scalar_lea.vmem %s0, %s89
        // Predicated region
        $region17: #{custom-call.71} parent=15 // pred_check
          _
        $region18: #{custom-call.71} parent=15 // pred_check_branch
          %92 = sbr.rel (0) target = $region20
        $region19: #{custom-call.71} parent=15 // pred_region
          // Predicated region
          $region21: #{custom-call.71} parent=19 // pred_check
            _
          $region22: #{custom-call.71} parent=19 // pred_check_branch
            %94 = sbr.rel (0) target = $region24
          $region23: #{custom-call.71} parent=19 // pred_region
            // Predicated region
            $region36: #{custom-call.71} parent=23 // pred_check
              _
            $region37: #{custom-call.71} parent=23 // pred_check_branch
              %112 = sbr.rel (0) target = $region39
            $region38: #{custom-call.71} parent=23 // pred_region
              loop: start=0, step=1, limit=1
              $region40: #{custom-call.71} parent=38 // loop_pre_header
                _
              $region41: #{custom-call.71} parent=38 // loop_header
                %s114 = sphi 0, %s118
                %p115 = scmp.ge.s32.totalorder %s114, 1
                %s119 = sphi %s90, %s90
                %s120 = sphi %s84, %s84
              $region42: #{custom-call.71} parent=38 // loop_header_branch
                %117 = sbr.rel (%p115) target = $region46
              $region43: #{custom-call.71} parent=38 // loop_body
                %v121 = vld [vmem:[%s119] sm:$0xff]
                %122 = vst [vmem:[%s120] sm:$0xff] %v121
                %v123 = vld [vmem:[%s119 + $0x8] sm:$0xff]
                %124 = vst [vmem:[%s120 + $0x8] sm:$0xff] %v123
              $region44: #{custom-call.71} parent=38 // loop_footer
                %s118 = sadd.s32 1, %s114
              $region45: #{custom-call.71} parent=38 // loop_footer_branch
                %113 = sbr.rel target = $region41
              $region46: #{custom-call.71} parent=38 // loop_exit
                _
            $region39: #{custom-call.71} parent=23 // pred_fallthru
              _
            // Predicated region
            $region47: #{custom-call.71} parent=23 // pred_check
              _
            $region48: #{custom-call.71} parent=23 // pred_check_branch
              %126 = sbr.rel target = $region50
            $region49: #{custom-call.71} parent=23 // pred_region
              _
            $region50: #{custom-call.71} parent=23 // pred_fallthru
              _
          $region24: #{custom-call.71} parent=19 // pred_fallthru
            _
          // Predicated region
          $region25: #{custom-call.71} parent=19 // pred_check
            _
          $region26: #{custom-call.71} parent=19 // pred_check_branch
            %96 = sbr.rel target = $region28
          $region27: #{custom-call.71} parent=19 // pred_region
            %s98 = ssub.s32 256, 1
            loop: start=0, step=1, limit=1
            $region29: #{custom-call.71} parent=27 // loop_pre_header
              _
            $region30: #{custom-call.71} parent=27 // loop_header
              %s100 = sphi 0, %s104
              %p101 = scmp.ge.s32.totalorder %s100, 1
              %s105 = sphi %s90, %s90
              %s106 = sphi %s84, %s84
            $region31: #{custom-call.71} parent=27 // loop_header_branch
              %103 = sbr.rel (%p101) target = $region35
            $region32: #{custom-call.71} parent=27 // loop_body
              %v107 = vld [vmem:[%s105] sm:%s98]
              %108 = vst [vmem:[%s106] sm:%s98] %v107
              %v109 = vld [vmem:[%s105 + $0x8] sm:%s98]
              %110 = vst [vmem:[%s106 + $0x8] sm:%s98] %v109
            $region33: #{custom-call.71} parent=27 // loop_footer
              %s104 = sadd.s32 1, %s100
            $region34: #{custom-call.71} parent=27 // loop_footer_branch
              %99 = sbr.rel target = $region30
            $region35: #{custom-call.71} parent=27 // loop_exit
              _
          $region28: #{custom-call.71} parent=19 // pred_fallthru
            _
        $region20: #{custom-call.71} parent=15 // pred_fallthru
          _
        %127 = vnop
      $region16: #{custom-call.71} parent=5 // pred_fallthru
        _
      %p128 = scmp.le.s32.totalorder 1, %s5
      %p129 = scmp.lt.s32.totalorder %s5, 4
      %p130 = pnand %p128, %p129
      %p131 = pneg %p130
      // Predicated region
      $region51: #{custom-call.71} parent=5 // pred_check
        _
      $region52: #{custom-call.71} parent=5 // pred_check_branch
        %133 = sbr.rel (%p130) target = $region54
      $region53: #{custom-call.71} parent=5 // pred_region
        #allocation4 [shape = 'f32[12,128]{1,0}', space=vmem, size = 0x2000, scoped, tag = 'scratch for Householder reflectors']
        %s134 = ssub.s32 %s5, 1
        %s135 = sand.u32 %s10, 1
        %s136 = sand.u32 %s10, 1
        %s137 = smul.addr %s136, 16
        %s138 = scalar_lea.vmem [#allocation0], %s137
        %s139 = sand.u32 %s10, 1
        %s140 = sand.u32 %s10, 1
        %s141 = smul.addr %s140, 16
        %s142 = scalar_lea.vmem [#allocation0], %s141
        %s143 = sand.u32 %s10, 1
        %s144 = sand.u32 %s10, 1
        %s145 = smul.addr %s144, 16
        %s146 = scalar_lea.vmem [#allocation1], %s145
        %p147 = pneg %p62
        %p148 = pneg %p59
        %s149 = sand.u32 %s49, 1
        %s150 = sand.u32 %s49, 1
        %s151 = smul.addr %s150, 4
        %s152 = scalar_lea.vmem [#allocation3], %s151
        %s153 = smul.u32 2, %s16
        %s154 = smul.u32 2, %s16
        %p155 = scmp.lt.s32.totalorder %s15, 0
        %s156 = ssub.s32 0, %s15
        %s157 = scalar_select %p155, %s156, %s15
        %s158 = sshrl.u32 %s157, 3
        %s159 = ssub.s32 0, %s158
        %s160 = scalar_select %p155, %s159, %s158
        %s161 = sand.u32 %s15, 7
        %s162 = scalar_lea.vmem [#allocation2], %s161
        %v163 = vld [vmem:[%s138] sm:$0xff]
        %164 = vst [vmem:[%s146] sm:$0xff] %v163
        %s165 = scalar_lea.vmem %s146, 8 [#allocation1]
        %s166 = scalar_lea.vmem %s138, 8 [#allocation0]
        %v167 = vld [vmem:[%s166] sm:$0xff]
        %168 = vst [vmem:[%s165] sm:$0xff] %v167
        %169 = vst [vmem:[%s162] sm:$0x1] 0.0
        loop: start=0, step=1, limit=6
        $region55: #{custom-call.71} parent=53 // loop_pre_header
          _
        $region56: #{custom-call.71} parent=53 // loop_header
          %s171 = sphi 0, %s175
          %p172 = scmp.ge.s32.totalorder %s171, 6
        $region57: #{custom-call.71} parent=53 // loop_header_branch
          %174 = sbr.rel (%p172) target = $region61
        $region58: #{custom-call.71} parent=53 // loop_body
          %v176 = vld [vmem:[%s146] sm:$0xff]
          %v177 = vlaneseq
          %v178 = vshrl.u32 %v177, 7
          %v180 = vstv %s171
          %vm181 = vcmp.gt.s32.totalorder %v178, %v180
          %v182 = vsel %vm181, %v176, 0.0
          %v183 = vmul.f32 %v182, %v182
          %s184 = scalar_lea.vmem %s146, 8 [#allocation1]
          %v185 = vld [vmem:[%s184] sm:$0xff]
          %v186 = vlaneseq
          %v187 = vshrl.u32 %v186, 7
          %v188 = vadd.s32 %v187, 8
          %v189 = vstv %s171
          %vm190 = vcmp.gt.s32.totalorder %v188, %v189
          %vm191 = vcmp.lt.s32.totalorder %v188, 12
          %vm192 = vmand %vm190, %vm191
          %v193 = vsel %vm192, %v185, 0.0
          %v194 = vmul.f32 %v193, %v193
          %v195 = vadd.f32 %v183, %v194
          %v196 = vrot.slane %v195, 4
          %v197 = vadd.f32 %v195, %v196
          %v198 = vrot.slane %v197, 2
          %v199 = vadd.f32 %v197, %v198
          %v200 = vrot.slane %v199, 1
          %v201 = vadd.f32 %v199, %v200
          %v202 = vrsqrt.pop %v201
          %v203 = vmul.f32 %v202, %v201
          %v204 = vmul.f32 %v203, %v202
          %v205 = vmul.f32 0.5, %v204
          %v206 = vsub.f32 1.5, %v205
          %v207 = vmul.f32 %v202, %v206
          %v208 = vmul.f32 %v201, %v207
          %vm209 = vcmp.eq.f32.partialorder %v201, inf
          %v210 = vsel %vm209, %v201, %v208
          %vm211 = vcmp.eq.f32.partialorder %v201, 0.0
          %v212 = vand.u32 %v201, 2147483648
          %v213 = vsel %vm211, %v212, %v210
          %vm214 = vcmp.eq.f32.partialorder %v201, 0.0
          %s215 = sshrl.u32 %s171, 3
          %s216 = sand.u32 %s171, 7
          %s217 = smul.addr %s215, 8
          %s218 = sadd.s32 %s216, %s217
          %s219 = scalar_lea.vmem %s146, %s218 [#allocation1]
          %v220 = vld [vmem:[%s219] ss:$0 sm:$0xff]
          %v221 = vand.u32 2147483647, %v220
          %v222 = vmax.f32 %v221, 0.0
          %v223 = vand.u32 2147483647, %v213
          %v224 = vmax.f32 %v222, %v223
          %v225 = vrcp.pop %v224
          %v226 = vmul.f32 %v224, %v225
          %v227 = vsub.f32 1.0, %v226
          %v228 = vmul.f32 %v225, %v227
          %v229 = vadd.f32 %v225, %v228
          %vm230 = vweird.f32 %v224
          %vm231 = vweird.f32 %v225
          %vm232 = vmor %vm230, %vm231
          %v233 = vsel %vm232, %v225, %v229
          %v234 = vand.u32 2147483647, %v224
          %vm235 = vcmp.eq.f32.partialorder %v234, 8.507059e+37
          %v236 = vand.u32 %v224, 2147483648
          %v237 = vor.u32 1.1754944e-38, %v236
          %v238 = vsel %vm235, %v237, %v233
          %v239 = vmul.f32 %v221, %v238
          %v240 = vmul.f32 %v239, %v239
          %v241 = vrcp.pop %v224
          %v242 = vmul.f32 %v224, %v241
          %v243 = vsub.f32 1.0, %v242
          %v244 = vmul.f32 %v241, %v243
          %v245 = vadd.f32 %v241, %v244
          %vm246 = vweird.f32 %v224
          %vm247 = vweird.f32 %v241
          %vm248 = vmor %vm246, %vm247
          %v249 = vsel %vm248, %v241, %v245
          %v250 = vand.u32 2147483647, %v224
          %vm251 = vcmp.eq.f32.partialorder %v250, 8.507059e+37
          %v252 = vand.u32 %v224, 2147483648
          %v253 = vor.u32 1.1754944e-38, %v252
          %v254 = vsel %vm251, %v253, %v249
          %v255 = vmul.f32 0.0, %v254
          %v256 = vmul.f32 %v255, %v255
          %v257 = vadd.f32 %v240, %v256
          %v258 = vrcp.pop %v224
          %v259 = vmul.f32 %v224, %v258
          %v260 = vsub.f32 1.0, %v259
          %v261 = vmul.f32 %v258, %v260
          %v262 = vadd.f32 %v258, %v261
          %vm263 = vweird.f32 %v224
          %vm264 = vweird.f32 %v258
          %vm265 = vmor %vm263, %vm264
          %v266 = vsel %vm265, %v258, %v262
          %v267 = vand.u32 2147483647, %v224
          %vm268 = vcmp.eq.f32.partialorder %v267, 8.507059e+37
          %v269 = vand.u32 %v224, 2147483648
          %v270 = vor.u32 1.1754944e-38, %v269
          %v271 = vsel %vm268, %v270, %v266
          %v272 = vmul.f32 %v223, %v271
          %v273 = vmul.f32 %v272, %v272
          %v274 = vadd.f32 %v257, %v273
          %vm275 = vcmp.eq.f32.partialorder %v224, 0.0
          %v276 = vrsqrt.pop %v274
          %v277 = vmul.f32 %v276, %v274
          %v278 = vmul.f32 %v277, %v276
          %v279 = vmul.f32 0.5, %v278
          %v280 = vsub.f32 1.5, %v279
          %v281 = vmul.f32 %v276, %v280
          %v282 = vmul.f32 %v274, %v281
          %vm283 = vcmp.eq.f32.partialorder %v274, inf
          %v284 = vsel %vm283, %v274, %v282
          %vm285 = vcmp.eq.f32.partialorder %v274, 0.0
          %v286 = vand.u32 %v274, 2147483648
          %v287 = vsel %vm285, %v286, %v284
          %v288 = vmul.f32 %v224, %v287
          %v289 = vsel %vm275, 0.0, %v288
          %vm290 = vcmp.lt.f32.partialorder %v220, 0.0
          %v291 = vxor.u32 %v289, 2147483648
          %v292 = vsel %vm290, %v289, %v291
          %v293 = vsub.f32 %v292, %v220
          %v294 = vrcp.pop %v292
          %v295 = vmul.f32 %v292, %v294
          %v296 = vsub.f32 1.0, %v295
          %v297 = vmul.f32 %v294, %v296
          %v298 = vadd.f32 %v294, %v297
          %vm299 = vweird.f32 %v292
          %vm300 = vweird.f32 %v294
          %vm301 = vmor %vm299, %vm300
          %v302 = vsel %vm301, %v294, %v298
          %v303 = vand.u32 2147483647, %v292
          %vm304 = vcmp.eq.f32.partialorder %v303, 8.507059e+37
          %v305 = vand.u32 %v292, 2147483648
          %v306 = vor.u32 1.1754944e-38, %v305
          %v307 = vsel %vm304, %v306, %v302
          %v308 = vmul.f32 %v293, %v307
          %v309 = vsel %vm214, %v220, %v292
          %v310 = vsel %vm214, 0.0, %v308
          %v311 = vsub.f32 %v220, %v309
          %s312 = smov %s146
          %v313 = vlaneseq
          %v314 = vshrl.u32 %v313, 7
          %v315 = vmov %v314
          %v316 = vld [vmem:[%s312] sm:$0xff]
          %v318 = vstv %s171
          %vm319 = vcmp.gt.s32.totalorder %v315, %v318
          %v320 = vsel %vm319, %v316, 0.0
          %v321 = vrcp.pop %v311
          %v322 = vmul.f32 %v311, %v321
          %v323 = vsub.f32 1.0, %v322
          %v324 = vmul.f32 %v321, %v323
          %v325 = vadd.f32 %v321, %v324
          %vm326 = vweird.f32 %v311
          %vm327 = vweird.f32 %v321
          %vm328 = vmor %vm326, %vm327
          %v329 = vsel %vm328, %v321, %v325
          %v330 = vand.u32 2147483647, %v311
          %vm331 = vcmp.eq.f32.partialorder %v330, 8.507059e+37
          %v332 = vand.u32 %v311, 2147483648
          %v333 = vor.u32 1.1754944e-38, %v332
          %v334 = vsel %vm331, %v333, %v329
          %v335 = vmul.f32 %v320, %v334
          %v336 = vsel %vm214, 0.0, %v335
          %v337 = vstv %s171
          %v338 = vlaneseq
          %v339 = vand.u32 %v338, 127
          %vm340 = vcmp.eq.s32.totalorder %v339, %v337
          %v341 = vsel %vm340, %v336, 0.0
          %342 = vadd.xlane.f32.xlu0 %v341
          %v343 = vpop.xlane.xlu0 %342
          %344 = vst [vmem:[#allocation4] sm:$0xff] %v343
          %s345 = scalar_lea.vmem %s312, 8
          %v346 = vld [vmem:[%s345] sm:$0xff]
          %v347 = vadd.s32 %v315, 8
          %v348 = vstv %s171
          %vm349 = vcmp.gt.s32.totalorder %v347, %v348
          %vm350 = vcmp.lt.s32.totalorder %v347, 12
          %vm351 = vmand %vm349, %vm350
          %v352 = vsel %vm351, %v346, 0.0
          %v353 = vrcp.pop %v311
          %v354 = vmul.f32 %v311, %v353
          %v355 = vsub.f32 1.0, %v354
          %v356 = vmul.f32 %v353, %v355
          %v357 = vadd.f32 %v353, %v356
          %vm358 = vweird.f32 %v311
          %vm359 = vweird.f32 %v353
          %vm360 = vmor %vm358, %vm359
          %v361 = vsel %vm360, %v353, %v357
          %v362 = vand.u32 2147483647, %v311
          %vm363 = vcmp.eq.f32.partialorder %v362, 8.507059e+37
          %v364 = vand.u32 %v311, 2147483648
          %v365 = vor.u32 1.1754944e-38, %v364
          %v366 = vsel %vm363, %v365, %v361
          %v367 = vmul.f32 %v352, %v366
          %v368 = vsel %vm214, 0.0, %v367
          %v369 = vstv %s171
          %v370 = vlaneseq
          %v371 = vand.u32 %v370, 127
          %vm372 = vcmp.eq.s32.totalorder %v371, %v369
          %v373 = vsel %vm372, %v368, 0.0
          %374 = vadd.xlane.f32.xlu0 %v373
          %v375 = vpop.xlane.xlu0 %374
          %s376 = scalar_lea.vmem [#allocation4], 8
          %377 = vst [vmem:[%s376] sm:$0xff] %v375
          %s378 = scalar_lea.vmem [#allocation4], %s171
          %379 = vst [vmem:[%s378] sm:$0x1] 1.0
          %v380 = vstv %s171
          %v381 = vlaneseq
          %v382 = vand.u32 %v381, 127
          %vm383 = vcmp.eq.s32.totalorder %v382, %v380
          %v384 = vsel %vm383, %v310, 0.0
          %385 = vadd.xlane.f32.xlu0 %v384
          %v386 = vpop.xlane.xlu0 %385
          %v387 = vstv %s171
          %v388 = vlaneseq
          %v389 = vand.u32 %v388, 127
          %vm390 = vcmp.eq.s32.totalorder %v389, %v387
          %v391 = vld [vmem:[%s162] ss:$0 sm:$0xff]
          %v392 = vsel %vm390, %v386, %v391
          %393 = vst [vmem:[%s162] sm:$0x1] %v392
          %s394 = smov %s146
          %s395 = smov [#allocation4]
          %v396 = vlaneseq
          %v397 = vshrl.u32 %v396, 7
          %v398 = vmov %v397
          %v400 = vld [vmem:[%s395] sm:$0xff]
          %v401 = vld [vmem:[%s394] sm:$0xff]
          %v402 = vmul.f32 %v400, %v401
          %v403 = vadd.s32 %v398, 8
          %s404 = scalar_lea.vmem %s395, 8
          %v405 = vld [vmem:[%s404] sm:$0xff]
          %s406 = scalar_lea.vmem %s394, 8
          %v407 = vld [vmem:[%s406] sm:$0xff]
          %v408 = vmul.f32 %v405, %v407
          %vm409 = vcmp.lt.s32.totalorder %v403, 12
          %v410 = vsel %vm409, %v408, 0.0
          %v411 = vadd.f32 %v402, %v410
          %v412 = vrot.slane %v411, 4
          %v413 = vadd.f32 %v411, %v412
          %v414 = vrot.slane %v413, 2
          %v415 = vadd.f32 %v413, %v414
          %v416 = vrot.slane %v415, 1
          %v417 = vadd.f32 %v415, %v416
          %s418 = smov %s394
          %s419 = smov %s395
          %v420 = vlaneseq
          %v421 = vshrl.u32 %v420, 7
          %v422 = vmov %v421
          %v423 = vmul.f32 %v417, %v386
          %v425 = vlaneseq
          %v426 = vand.u32 %v425, 127
          %v427 = vld [vmem:[%s419] sm:$0xff]
          %v428 = vmul.f32 %v427, %v423
          %v429 = vld [vmem:[%s418] sm:$0xff]
          %v430 = vstv %s171
          %vm431 = vcmp.gt.s32.totalorder %v426, %v430
          %v432 = vsub.f32 %v429, %v428
          %v433 = vsel %vm431, %v432, %v429
          %v434 = vstv %s171
          %v435 = vlaneseq
          %v436 = vand.u32 %v435, 127
          %vm437 = vcmp.eq.s32.totalorder %v436, %v434
          %v438 = vstv %s171
          %vm439 = vcmp.ge.s32.totalorder %v422, %v438
          %vm440 = vmand %vm437, %vm439
          %v441 = vsel %vm440, %v427, %v433
          %442 = vst [vmem:[%s418] sm:$0xff] %v441
          %v443 = vadd.s32 %v422, 8
          %v444 = vlaneseq
          %v445 = vand.u32 %v444, 127
          %s446 = scalar_lea.vmem %s419, 8
          %v447 = vld [vmem:[%s446] sm:$0xff]
          %v448 = vmul.f32 %v447, %v423
          %s449 = scalar_lea.vmem %s418, 8
          %v450 = vld [vmem:[%s449] sm:$0xff]
          %v451 = vstv %s171
          %vm452 = vcmp.gt.s32.totalorder %v445, %v451
          %v453 = vsub.f32 %v450, %v448
          %v454 = vsel %vm452, %v453, %v450
          %v455 = vstv %s171
          %v456 = vlaneseq
          %v457 = vand.u32 %v456, 127
          %vm458 = vcmp.eq.s32.totalorder %v457, %v455
          %v459 = vstv %s171
          %vm460 = vcmp.ge.s32.totalorder %v443, %v459
          %vm461 = vmand %vm458, %vm460
          %v462 = vsel %vm461, %v447, %v454
          %463 = vst [vmem:[%s449] sm:$0xff] %v462
          %s464 = scalar_lea.vmem %s418, %s171
          %v465 = vld [vmem:[%s464] ss:$0 sm:$0xff]
          %v466 = vstv %s171
          %v467 = vlaneseq
          %v468 = vand.u32 %v467, 127
          %vm469 = vcmp.eq.s32.totalorder %v468, %v466
          %v470 = vsel %vm469, %v309, %v465
          %471 = vst [vmem:[%s464] sm:$0x1] %v470
        $region59: #{custom-call.71} parent=53 // loop_footer
          %s175 = sadd.s32 1, %s171
        $region60: #{custom-call.71} parent=53 // loop_footer_branch
          %170 = sbr.rel target = $region56
        $region61: #{custom-call.71} parent=53 // loop_exit
          _
        %s473 = ssub.s32 16, 1
        %v474 = vld [vmem:[#allocation2] sm:%s473]
        %s476 = ssub.s32 16, 1
        %477 = vst [vmem:[%s152] sm:%s476] %v474
        %s478 = sand.u32 %s10, 1
        %s479 = sand.u32 %s10, 1
        %s480 = smul.addr %s479, 16
        %s481 = scalar_lea.vmem [#allocation1], %s480
        %s482 = sand.u32 %s49, 1
        %s483 = sand.u32 %s49, 1
        %s484 = smul.addr %s483, 4
        %s485 = scalar_lea.vmem [#allocation3], %s484
        %s486 = smul.u32 2, %s16
        %s487 = sadd.s32 %s17, %s486
        %s488 = smul.addr %s15, 2
        %s489 = sadd.s32 %s487, %s488
        %s490 = smul.addr %s489, 8
        %s491 = scalar_lea.vmem %s1, %s490
        // Predicated region
        $region62: #{custom-call.71} parent=53 // pred_check
          _
        $region63: #{custom-call.71} parent=53 // pred_check_branch
          %493 = sbr.rel (0) target = $region65
        $region64: #{custom-call.71} parent=53 // pred_region
          // Predicated region
          $region66: #{custom-call.71} parent=64 // pred_check
            _
          $region67: #{custom-call.71} parent=64 // pred_check_branch
            %495 = sbr.rel (0) target = $region69
          $region68: #{custom-call.71} parent=64 // pred_region
            // Predicated region
            $region81: #{custom-call.71} parent=68 // pred_check
              _
            $region82: #{custom-call.71} parent=68 // pred_check_branch
              %513 = sbr.rel (0) target = $region84
            $region83: #{custom-call.71} parent=68 // pred_region
              loop: start=0, step=1, limit=1
              $region85: #{custom-call.71} parent=83 // loop_pre_header
                _
              $region86: #{custom-call.71} parent=83 // loop_header
                %s515 = sphi 0, %s519
                %p516 = scmp.ge.s32.totalorder %s515, 1
                %s520 = sphi %s481, %s481
                %s521 = sphi %s491, %s491
              $region87: #{custom-call.71} parent=83 // loop_header_branch
                %518 = sbr.rel (%p516) target = $region91
              $region88: #{custom-call.71} parent=83 // loop_body
                %v522 = vld [vmem:[%s520] sm:$0xff]
                %523 = vst [vmem:[%s521] sm:$0xff] %v522
                %v524 = vld [vmem:[%s520 + $0x8] sm:$0xff]
                %525 = vst [vmem:[%s521 + $0x8] sm:$0xff] %v524
              $region89: #{custom-call.71} parent=83 // loop_footer
                %s519 = sadd.s32 1, %s515
              $region90: #{custom-call.71} parent=83 // loop_footer_branch
                %514 = sbr.rel target = $region86
              $region91: #{custom-call.71} parent=83 // loop_exit
                _
            $region84: #{custom-call.71} parent=68 // pred_fallthru
              _
            // Predicated region
            $region92: #{custom-call.71} parent=68 // pred_check
              _
            $region93: #{custom-call.71} parent=68 // pred_check_branch
              %527 = sbr.rel target = $region95
            $region94: #{custom-call.71} parent=68 // pred_region
              _
            $region95: #{custom-call.71} parent=68 // pred_fallthru
              _
          $region69: #{custom-call.71} parent=64 // pred_fallthru
            _
          // Predicated region
          $region70: #{custom-call.71} parent=64 // pred_check
            _
          $region71: #{custom-call.71} parent=64 // pred_check_branch
            %497 = sbr.rel target = $region73
          $region72: #{custom-call.71} parent=64 // pred_region
            %s499 = ssub.s32 256, 1
            loop: start=0, step=1, limit=1
            $region74: #{custom-call.71} parent=72 // loop_pre_header
              _
            $region75: #{custom-call.71} parent=72 // loop_header
              %s501 = sphi 0, %s505
              %p502 = scmp.ge.s32.totalorder %s501, 1
              %s506 = sphi %s481, %s481
              %s507 = sphi %s491, %s491
            $region76: #{custom-call.71} parent=72 // loop_header_branch
              %504 = sbr.rel (%p502) target = $region80
            $region77: #{custom-call.71} parent=72 // loop_body
              %v508 = vld [vmem:[%s506] sm:%s499]
              %509 = vst [vmem:[%s507] sm:%s499] %v508
              %v510 = vld [vmem:[%s506 + $0x8] sm:%s499]
              %511 = vst [vmem:[%s507 + $0x8] sm:%s499] %v510
            $region78: #{custom-call.71} parent=72 // loop_footer
              %s505 = sadd.s32 1, %s501
            $region79: #{custom-call.71} parent=72 // loop_footer_branch
              %500 = sbr.rel target = $region75
            $region80: #{custom-call.71} parent=72 // loop_exit
              _
          $region73: #{custom-call.71} parent=64 // pred_fallthru
            _
        $region65: #{custom-call.71} parent=53 // pred_fallthru
          _
        %528 = vnop
        // Predicated region
        $region96: #{custom-call.71} parent=53 // pred_check
          %p529 = pneg %p59
        $region97: #{custom-call.71} parent=53 // pred_check_branch
          %531 = sbr.rel (%p529) target = $region99
        $region98: #{custom-call.71} parent=53 // pred_region
          %p532 = scmp.lt.s32.totalorder %s15, 0
          %s533 = ssub.s32 0, %s15
          %s534 = scalar_select %p532, %s533, %s15
          %s535 = sshrl.u32 %s534, 3
          %s536 = ssub.s32 0, %s535
          %s537 = scalar_select %p532, %s536, %s535
          %s538 = smul.addr %s537, 4
          %s539 = scalar_lea.vmem %s2, %s538
          // Predicated region
          $region100: #{custom-call.71} parent=98 // pred_check
            _
          $region101: #{custom-call.71} parent=98 // pred_check_branch
            %541 = sbr.rel (0) target = $region103
          $region102: #{custom-call.71} parent=98 // pred_region
            // Predicated region
            $region104: #{custom-call.71} parent=102 // pred_check
              _
            $region105: #{custom-call.71} parent=102 // pred_check_branch
              %543 = sbr.rel target = $region107
            $region106: #{custom-call.71} parent=102 // pred_region
              // Predicated region
              $region119: #{custom-call.71} parent=106 // pred_check
                _
              $region120: #{custom-call.71} parent=106 // pred_check_branch
                %559 = sbr.rel (0) target = $region122
              $region121: #{custom-call.71} parent=106 // pred_region
                %s561 = ssub.s32 16, 1
                loop: start=0, step=1, limit=1
                $region123: #{custom-call.71} parent=121 // loop_pre_header
                  _
                $region124: #{custom-call.71} parent=121 // loop_header
                  %s563 = sphi 0, %s567
                  %p564 = scmp.ge.s32.totalorder %s563, 1
                  %s568 = sphi %s485, %s485
                  %s569 = sphi %s539, %s539
                $region125: #{custom-call.71} parent=121 // loop_header_branch
                  %566 = sbr.rel (%p564) target = $region129
                $region126: #{custom-call.71} parent=121 // loop_body
                  %v570 = vld [vmem:[%s568] sm:%s561]
                  %571 = vst [vmem:[%s569] sm:%s561] %v570
                $region127: #{custom-call.71} parent=121 // loop_footer
                  %s567 = sadd.s32 1, %s563
                $region128: #{custom-call.71} parent=121 // loop_footer_branch
                  %562 = sbr.rel target = $region124
                $region129: #{custom-call.71} parent=121 // loop_exit
                  _
              $region122: #{custom-call.71} parent=106 // pred_fallthru
                _
            $region107: #{custom-call.71} parent=102 // pred_fallthru
              _
            // Predicated region
            $region108: #{custom-call.71} parent=102 // pred_check
              _
            $region109: #{custom-call.71} parent=102 // pred_check_branch
              %545 = sbr.rel (0) target = $region111
            $region110: #{custom-call.71} parent=102 // pred_region
              %s547 = ssub.s32 16, 1
              loop: start=0, step=1, limit=1
              $region112: #{custom-call.71} parent=110 // loop_pre_header
                _
              $region113: #{custom-call.71} parent=110 // loop_header
                %s549 = sphi 0, %s553
                %p550 = scmp.ge.s32.totalorder %s549, 1
                %s554 = sphi %s485, %s485
                %s555 = sphi %s539, %s539
              $region114: #{custom-call.71} parent=110 // loop_header_branch
                %552 = sbr.rel (%p550) target = $region118
              $region115: #{custom-call.71} parent=110 // loop_body
                %v556 = vld [vmem:[%s554] sm:%s547]
                %557 = vst [vmem:[%s555] sm:%s547] %v556
              $region116: #{custom-call.71} parent=110 // loop_footer
                %s553 = sadd.s32 1, %s549
              $region117: #{custom-call.71} parent=110 // loop_footer_branch
                %548 = sbr.rel target = $region113
              $region118: #{custom-call.71} parent=110 // loop_exit
                _
            $region111: #{custom-call.71} parent=102 // pred_fallthru
              _
          $region103: #{custom-call.71} parent=98 // pred_fallthru
            _
          %572 = vnop
        $region99: #{custom-call.71} parent=53 // pred_fallthru
          _
      $region54: #{custom-call.71} parent=5 // pred_fallthru
        _
      %p573 = scmp.le.s32.totalorder 2, %s5
      // Predicated region
      $region130: #{custom-call.71} parent=5 // pred_check
        %p574 = pneg %p573
      $region131: #{custom-call.71} parent=5 // pred_check_branch
        %576 = sbr.rel (%p574) target = $region133
      $region132: #{custom-call.71} parent=5 // pred_region
        %s577 = ssub.s32 %s5, 2
        %s578 = sand.u32 %s11, 1
        %s579 = sand.u32 %s11, 1
        %s580 = smul.addr %s579, 16
        %s581 = scalar_lea.vmem [#allocation1], %s580
        // Predicated region
        $region134: #{custom-call.71} parent=132 // pred_check
          %p582 = pneg %p65
        $region135: #{custom-call.71} parent=132 // pred_check_branch
          %584 = sbr.rel (%p582) target = $region137
        $region136: #{custom-call.71} parent=132 // pred_region
          %s585 = sand.u32 %s50, 1
          %s586 = sand.u32 %s50, 1
          %s587 = smul.addr %s586, 4
          %s588 = scalar_lea.vmem [#allocation3], %s587
        $region137: #{custom-call.71} parent=132 // pred_fallthru
          _
      $region133: #{custom-call.71} parent=5 // pred_fallthru
        _
    $region6: #{custom-call.71} parent=1 // loop_footer
      %s9 = sadd.s32 1, %s5
    $region7: #{custom-call.71} parent=1 // loop_footer_branch
      %4 = sbr.rel target = $region3
    $region8: #{custom-call.71} parent=1 // loop_exit
      _

// kernel: custom-call.72
$region0: #{custom-call.72}
  %s0 = inlined_call_operand.vmem [shape: f32[3,6,6], index: 0, kind: input, shape index: {}]
  %s1 = inlined_call_operand.vmem [shape: f32[3,6,6], index: 1, kind: output, shape index: {}]
  $region1: #{custom-call.72} parent=0
    #allocation0 [shape = 'u8[8192]{0}', space=vmem, size = 0x2000, scoped, tag = 'operand span for operand 0']
    #allocation1 [shape = 'u8[8192]{0}', space=vmem, size = 0x2000, scoped, tag = 'operand span for operand 1']
    loop: start=0, step=1, limit=5
    $region2: #{custom-call.72} parent=1 // loop_pre_header
      _
    $region3: #{custom-call.72} parent=1 // loop_header
      %s3 = sphi 0, %s7
      %p4 = scmp.ge.s32.totalorder %s3, 5
    $region4: #{custom-call.72} parent=1 // loop_header_branch
      %6 = sbr.rel (%p4) target = $region8
    $region5: #{custom-call.72} parent=1 // loop_body
      %s8 = ssub.s32 %s3, 1
      %s9 = ssub.s32 %s3, 2
      %s10 = sadd.s32 %s3, 1
      %p11 = scmp.le.s32.totalorder 1, %s3
      %p12 = scmp.lt.s32.totalorder %s3, 4
      %p13 = pnand %p11, %p12
      %p14 = pneg %p13
      // Predicated region
      $region9: #{custom-call.72} parent=5 // pred_check
        _
      $region10: #{custom-call.72} parent=5 // pred_check_branch
        %16 = sbr.rel (%p13) target = $region12
      $region11: #{custom-call.72} parent=5 // pred_region
        %s17 = ssub.s32 %s3, 1
      $region12: #{custom-call.72} parent=5 // pred_fallthru
        _
      %p18 = scmp.lt.s32.totalorder %s3, 3
      // Predicated region
      $region13: #{custom-call.72} parent=5 // pred_check
        %p19 = pneg %p18
      $region14: #{custom-call.72} parent=5 // pred_check_branch
        %21 = sbr.rel (%p19) target = $region16
      $region15: #{custom-call.72} parent=5 // pred_region
        %s22 = sand.u32 %s3, 1
        %s23 = sand.u32 %s3, 1
        %s24 = smul.addr %s23, 8
        %s25 = scalar_lea.vmem [#allocation0], %s24
        %s26 = smul.addr %s3, 8
        %s27 = scalar_lea.vmem %s0, %s26
        // Predicated region
        $region17: #{custom-call.72} parent=15 // pred_check
          _
        $region18: #{custom-call.72} parent=15 // pred_check_branch
          %29 = sbr.rel (0) target = $region20
        $region19: #{custom-call.72} parent=15 // pred_region
          // Predicated region
          $region21: #{custom-call.72} parent=19 // pred_check
            _
          $region22: #{custom-call.72} parent=19 // pred_check_branch
            %31 = sbr.rel (0) target = $region24
          $region23: #{custom-call.72} parent=19 // pred_region
            // Predicated region
            $region36: #{custom-call.72} parent=23 // pred_check
              _
            $region37: #{custom-call.72} parent=23 // pred_check_branch
              %47 = sbr.rel (0) target = $region39
            $region38: #{custom-call.72} parent=23 // pred_region
              loop: start=0, step=1, limit=1
              $region40: #{custom-call.72} parent=38 // loop_pre_header
                _
              $region41: #{custom-call.72} parent=38 // loop_header
                %s49 = sphi 0, %s53
                %p50 = scmp.ge.s32.totalorder %s49, 1
                %s54 = sphi %s27, %s27
                %s55 = sphi %s25, %s25
              $region42: #{custom-call.72} parent=38 // loop_header_branch
                %52 = sbr.rel (%p50) target = $region46
              $region43: #{custom-call.72} parent=38 // loop_body
                %v56 = vld [vmem:[%s54] sm:$0xff]
                %57 = vst [vmem:[%s55] sm:$0xff] %v56
              $region44: #{custom-call.72} parent=38 // loop_footer
                %s53 = sadd.s32 1, %s49
              $region45: #{custom-call.72} parent=38 // loop_footer_branch
                %48 = sbr.rel target = $region41
              $region46: #{custom-call.72} parent=38 // loop_exit
                _
            $region39: #{custom-call.72} parent=23 // pred_fallthru
              _
            // Predicated region
            $region47: #{custom-call.72} parent=23 // pred_check
              _
            $region48: #{custom-call.72} parent=23 // pred_check_branch
              %59 = sbr.rel target = $region50
            $region49: #{custom-call.72} parent=23 // pred_region
              _
            $region50: #{custom-call.72} parent=23 // pred_fallthru
              _
          $region24: #{custom-call.72} parent=19 // pred_fallthru
            _
          // Predicated region
          $region25: #{custom-call.72} parent=19 // pred_check
            _
          $region26: #{custom-call.72} parent=19 // pred_check_branch
            %33 = sbr.rel target = $region28
          $region27: #{custom-call.72} parent=19 // pred_region
            %s35 = ssub.s32 256, 1
            loop: start=0, step=1, limit=1
            $region29: #{custom-call.72} parent=27 // loop_pre_header
              _
            $region30: #{custom-call.72} parent=27 // loop_header
              %s37 = sphi 0, %s41
              %p38 = scmp.ge.s32.totalorder %s37, 1
              %s42 = sphi %s27, %s27
              %s43 = sphi %s25, %s25
            $region31: #{custom-call.72} parent=27 // loop_header_branch
              %40 = sbr.rel (%p38) target = $region35
            $region32: #{custom-call.72} parent=27 // loop_body
              %v44 = vld [vmem:[%s42] sm:%s35]
              %45 = vst [vmem:[%s43] sm:%s35] %v44
            $region33: #{custom-call.72} parent=27 // loop_footer
              %s41 = sadd.s32 1, %s37
            $region34: #{custom-call.72} parent=27 // loop_footer_branch
              %36 = sbr.rel target = $region30
            $region35: #{custom-call.72} parent=27 // loop_exit
              _
          $region28: #{custom-call.72} parent=19 // pred_fallthru
            _
        $region20: #{custom-call.72} parent=15 // pred_fallthru
          _
        %60 = vnop
      $region16: #{custom-call.72} parent=5 // pred_fallthru
        _
      %p61 = scmp.le.s32.totalorder 1, %s3
      %p62 = scmp.lt.s32.totalorder %s3, 4
      %p63 = pnand %p61, %p62
      %p64 = pneg %p63
      // Predicated region
      $region51: #{custom-call.72} parent=5 // pred_check
        _
      $region52: #{custom-call.72} parent=5 // pred_check_branch
        %66 = sbr.rel (%p63) target = $region54
      $region53: #{custom-call.72} parent=5 // pred_region
        %s67 = ssub.s32 %s3, 1
        %s68 = sand.u32 %s8, 1
        %s69 = sand.u32 %s8, 1
        %s70 = smul.addr %s69, 8
        %s71 = scalar_lea.vmem [#allocation0], %s70
        %s72 = sand.u32 %s8, 1
        %s73 = sand.u32 %s8, 1
        %s74 = smul.addr %s73, 8
        %s75 = scalar_lea.vmem [#allocation0], %s74
        %s76 = sand.u32 %s8, 1
        %s77 = sand.u32 %s8, 1
        %s78 = smul.addr %s77, 8
        %s79 = scalar_lea.vmem [#allocation1], %s78
        %v80 = vlaneseq
        %v81 = vand.u32 %v80, 127
        %v82 = vlaneseq
        %v83 = vshrl.u32 %v82, 7
        %vm85 = vcmp.eq.s32.totalorder %v81, %v83
        %v86 = vld [vmem:[%s71] sm:$0xff]
        %v87 = vlaneseq
        %v88 = vand.u32 %v87, 127
        %vm89 = vcmp.eq.s32.totalorder %v88, 0
        %v90 = vsel %vm89, %v86, 1.0
        %v91 = vsel %vm85, %v90, 0.0
        %s92 = scalar_lea.vmem %s71, 1 [#allocation0]
        %v93 = vld [vmem:[%s92] ss:$0 sm:$0xff]
        %vm94 = vcmask 48128
        %v95 = vsel %vm94, %v93, 0.0
        %v96 = vlaneseq
        %v97 = vand.u32 %v96, 127
        %vm98 = vcmp.eq.s32.totalorder %v97, 1
        %v99 = vmul.f32 %v95, %v91
        %100 = vadd.xlane.f32.xlu0 %v99
        %v101 = vpop.xlane.xlu0 %100
        %v102 = vsel %vm98, %v101, %v91
        %s103 = scalar_lea.vmem %s71, 2 [#allocation0]
        %v104 = vld [vmem:[%s103] ss:$0 sm:$0xff]
        %vm105 = vcmask 48128
        %v106 = vsel %vm105, %v104, 0.0
        %v107 = vlaneseq
        %v108 = vand.u32 %v107, 127
        %vm109 = vcmp.eq.s32.totalorder %v108, 2
        %v110 = vmul.f32 %v106, %v102
        %111 = vadd.xlane.f32.xlu0 %v110
        %v112 = vpop.xlane.xlu0 %111
        %v113 = vsel %vm109, %v112, %v102
        %s114 = scalar_lea.vmem %s71, 3 [#allocation0]
        %v115 = vld [vmem:[%s114] ss:$0 sm:$0xff]
        %vm116 = vcmask 48128
        %v117 = vsel %vm116, %v115, 0.0
        %v118 = vlaneseq
        %v119 = vand.u32 %v118, 127
        %vm120 = vcmp.eq.s32.totalorder %v119, 3
        %v121 = vmul.f32 %v117, %v113
        %122 = vadd.xlane.f32.xlu0 %v121
        %v123 = vpop.xlane.xlu0 %122
        %v124 = vsel %vm120, %v123, %v113
        %s125 = scalar_lea.vmem %s71, 4 [#allocation0]
        %v126 = vld [vmem:[%s125] ss:$0 sm:$0xff]
        %vm127 = vcmask 48128
        %v128 = vsel %vm127, %v126, 0.0
        %v129 = vlaneseq
        %v130 = vand.u32 %v129, 127
        %vm131 = vcmp.eq.s32.totalorder %v130, 4
        %v132 = vmul.f32 %v128, %v124
        %133 = vadd.xlane.f32.xlu0 %v132
        %v134 = vpop.xlane.xlu0 %133
        %v135 = vsel %vm131, %v134, %v124
        %s136 = scalar_lea.vmem %s71, 5 [#allocation0]
        %v137 = vld [vmem:[%s136] ss:$0 sm:$0xff]
        %vm138 = vcmask 48128
        %v139 = vsel %vm138, %v137, 0.0
        %v140 = vlaneseq
        %v141 = vand.u32 %v140, 127
        %vm142 = vcmp.eq.s32.totalorder %v141, 5
        %v143 = vmul.f32 %v139, %v135
        %144 = vadd.xlane.f32.xlu0 %v143
        %v145 = vpop.xlane.xlu0 %144
        %v146 = vsel %vm142, %v145, %v135
        %147 = vst [vmem:[%s79] sm:$0xff] %v146
        %s148 = sand.u32 %s8, 1
        %s149 = sand.u32 %s8, 1
        %s150 = smul.addr %s149, 8
        %s151 = scalar_lea.vmem [#allocation1], %s150
        %s152 = smul.addr %s8, 8
        %s153 = scalar_lea.vmem %s1, %s152
        // Predicated region
        $region55: #{custom-call.72} parent=53 // pred_check
          _
        $region56: #{custom-call.72} parent=53 // pred_check_branch
          %155 = sbr.rel (0) target = $region58
        $region57: #{custom-call.72} parent=53 // pred_region
          // Predicated region
          $region59: #{custom-call.72} parent=57 // pred_check
            _
          $region60: #{custom-call.72} parent=57 // pred_check_branch
            %157 = sbr.rel (0) target = $region62
          $region61: #{custom-call.72} parent=57 // pred_region
            // Predicated region
            $region74: #{custom-call.72} parent=61 // pred_check
              _
            $region75: #{custom-call.72} parent=61 // pred_check_branch
              %173 = sbr.rel (0) target = $region77
            $region76: #{custom-call.72} parent=61 // pred_region
              loop: start=0, step=1, limit=1
              $region78: #{custom-call.72} parent=76 // loop_pre_header
                _
              $region79: #{custom-call.72} parent=76 // loop_header
                %s175 = sphi 0, %s179
                %p176 = scmp.ge.s32.totalorder %s175, 1
                %s180 = sphi %s151, %s151
                %s181 = sphi %s153, %s153
              $region80: #{custom-call.72} parent=76 // loop_header_branch
                %178 = sbr.rel (%p176) target = $region84
              $region81: #{custom-call.72} parent=76 // loop_body
                %v182 = vld [vmem:[%s180] sm:$0xff]
                %183 = vst [vmem:[%s181] sm:$0xff] %v182
              $region82: #{custom-call.72} parent=76 // loop_footer
                %s179 = sadd.s32 1, %s175
              $region83: #{custom-call.72} parent=76 // loop_footer_branch
                %174 = sbr.rel target = $region79
              $region84: #{custom-call.72} parent=76 // loop_exit
                _
            $region77: #{custom-call.72} parent=61 // pred_fallthru
              _
            // Predicated region
            $region85: #{custom-call.72} parent=61 // pred_check
              _
            $region86: #{custom-call.72} parent=61 // pred_check_branch
              %185 = sbr.rel target = $region88
            $region87: #{custom-call.72} parent=61 // pred_region
              _
            $region88: #{custom-call.72} parent=61 // pred_fallthru
              _
          $region62: #{custom-call.72} parent=57 // pred_fallthru
            _
          // Predicated region
          $region63: #{custom-call.72} parent=57 // pred_check
            _
          $region64: #{custom-call.72} parent=57 // pred_check_branch
            %159 = sbr.rel target = $region66
          $region65: #{custom-call.72} parent=57 // pred_region
            %s161 = ssub.s32 256, 1
            loop: start=0, step=1, limit=1
            $region67: #{custom-call.72} parent=65 // loop_pre_header
              _
            $region68: #{custom-call.72} parent=65 // loop_header
              %s163 = sphi 0, %s167
              %p164 = scmp.ge.s32.totalorder %s163, 1
              %s168 = sphi %s151, %s151
              %s169 = sphi %s153, %s153
            $region69: #{custom-call.72} parent=65 // loop_header_branch
              %166 = sbr.rel (%p164) target = $region73
            $region70: #{custom-call.72} parent=65 // loop_body
              %v170 = vld [vmem:[%s168] sm:%s161]
              %171 = vst [vmem:[%s169] sm:%s161] %v170
            $region71: #{custom-call.72} parent=65 // loop_footer
              %s167 = sadd.s32 1, %s163
            $region72: #{custom-call.72} parent=65 // loop_footer_branch
              %162 = sbr.rel target = $region68
            $region73: #{custom-call.72} parent=65 // loop_exit
              _
          $region66: #{custom-call.72} parent=57 // pred_fallthru
            _
        $region58: #{custom-call.72} parent=53 // pred_fallthru
          _
        %186 = vnop
      $region54: #{custom-call.72} parent=5 // pred_fallthru
        _
      %p187 = scmp.le.s32.totalorder 2, %s3
      // Predicated region
      $region89: #{custom-call.72} parent=5 // pred_check
        %p188 = pneg %p187
      $region90: #{custom-call.72} parent=5 // pred_check_branch
        %190 = sbr.rel (%p188) target = $region92
      $region91: #{custom-call.72} parent=5 // pred_region
        %s191 = ssub.s32 %s3, 2
        %s192 = sand.u32 %s9, 1
        %s193 = sand.u32 %s9, 1
        %s194 = smul.addr %s193, 8
        %s195 = scalar_lea.vmem [#allocation1], %s194
      $region92: #{custom-call.72} parent=5 // pred_fallthru
        _
    $region6: #{custom-call.72} parent=1 // loop_footer
      %s7 = sadd.s32 1, %s3
    $region7: #{custom-call.72} parent=1 // loop_footer_branch
      %2 = sbr.rel target = $region3
    $region8: #{custom-call.72} parent=1 // loop_exit
      _

// kernel: net_forward.2
$region0: #{net_forward.2}
  #allocation0 [shape = 'u32[]', space=smem, size = 0x4, offset = 0x4, fixed_abs, tag = 'smem constant byte address 0x4 - core index']
  #allocation1 [shape = 'u32[72,128]{1,0:T(1,128)}', space=vmem, size = 0x9000, scoped, tag = 'internal scratch']
  %s0 = inlined_call_operand.vmem [shape: f32[16,16], index: 0, kind: input, shape index: {}]
  %s1 = inlined_call_operand.vmem [shape: f32[16,128], index: 1, kind: input, shape index: {}]
  %s2 = inlined_call_operand.vmem [shape: f32[128,128], index: 2, kind: input, shape index: {}]
  %s3 = inlined_call_operand.vmem [shape: f32[1,128], index: 3, kind: input, shape index: {}]
  %s4 = inlined_call_operand.vmem [shape: f32[128,128], index: 4, kind: input, shape index: {}]
  %s5 = inlined_call_operand.vmem [shape: f32[1,128], index: 5, kind: input, shape index: {}]
  %s6 = inlined_call_operand.vmem [shape: f32[16,128], index: 6, kind: output, shape index: {}]
  %s7 = sld [smem:[#allocation0]]
  $region34: #{net_forward.2} parent=0
    _
  %s9 = ssub.s32 1, %s7
  %s10 = scalar_select 0, %s9, %s7
  // Predicated region
  $region2: #{net_forward.2} parent=0 // pred_check
    _
  $region3: #{net_forward.2} parent=0 // pred_check_branch
    %12 = sbr.rel (0) target = $region5
  $region4: #{net_forward.2} parent=0 // pred_region
    _
  $region5: #{net_forward.2} parent=0 // pred_fallthru
    _
  // Predicated region
  $region6: #{net_forward.2} parent=0 // pred_check
    _
  $region7: #{net_forward.2} parent=0 // pred_check_branch
    %14 = sbr.rel (0) target = $region9
  $region8: #{net_forward.2} parent=0 // pred_region
    _
  $region9: #{net_forward.2} parent=0 // pred_fallthru
    _
  // Predicated region
  $region10: #{net_forward.2} parent=0 // pred_check
    _
  $region11: #{net_forward.2} parent=0 // pred_check_branch
    %16 = sbr.rel (0) target = $region13
  $region12: #{net_forward.2} parent=0 // pred_region
    _
  $region13: #{net_forward.2} parent=0 // pred_fallthru
    _
  // Predicated region
  $region14: #{net_forward.2} parent=0 // pred_check
    _
  $region15: #{net_forward.2} parent=0 // pred_check_branch
    %18 = sbr.rel (0) target = $region17
  $region16: #{net_forward.2} parent=0 // pred_region
    _
  $region17: #{net_forward.2} parent=0 // pred_fallthru
    _
  // Predicated region
  $region18: #{net_forward.2} parent=0 // pred_check
    _
  $region19: #{net_forward.2} parent=0 // pred_check_branch
    %20 = sbr.rel (0) target = $region21
  $region20: #{net_forward.2} parent=0 // pred_region
    _
  $region21: #{net_forward.2} parent=0 // pred_fallthru
    _
  // Predicated region
  $region22: #{net_forward.2} parent=0 // pred_check
    _
  $region23: #{net_forward.2} parent=0 // pred_check_branch
    %22 = sbr.rel (0) target = $region25
  $region24: #{net_forward.2} parent=0 // pred_region
    _
  $region25: #{net_forward.2} parent=0 // pred_fallthru
    _
  %v23 = vld [vmem:[%s0] sm:$0xff]
  %v24 = vld [vmem:[%s0 + $0x8] sm:$0xff]
  %v25 = vld [vmem:[%s1] sm:$0xff]
  %v26 = vld [vmem:[%s1 + $0x8] sm:$0xff]
  %v27 = vld [vmem:[%s2] sm:$0xff]
  %v28 = vld [vmem:[%s2 + $0x8] sm:$0xff]
  %v29 = vld [vmem:[%s2 + $0x10] sm:$0xff]
  %v30 = vld [vmem:[%s2 + $0x18] sm:$0xff]
  %v31 = vld [vmem:[%s2 + $0x20] sm:$0xff]
  %v32 = vld [vmem:[%s2 + $0x28] sm:$0xff]
  %v33 = vld [vmem:[%s2 + $0x30] sm:$0xff]
  %v34 = vld [vmem:[%s2 + $0x38] sm:$0xff]
  %v35 = vld [vmem:[%s2 + $0x40] sm:$0xff]
  %v36 = vld [vmem:[%s2 + $0x48] sm:$0xff]
  %v37 = vld [vmem:[%s2 + $0x50] sm:$0xff]
  %v38 = vld [vmem:[%s2 + $0x58] sm:$0xff]
  %v39 = vld [vmem:[%s2 + $0x60] sm:$0xff]
  %v40 = vld [vmem:[%s2 + $0x68] sm:$0xff]
  %v41 = vld [vmem:[%s2 + $0x70] sm:$0xff]
  %v42 = vld [vmem:[%s2 + $0x78] sm:$0xff]
  %43 = vmatpush.msra.mxu0 %v42
  %44 = vmatpush.msra.mxu0 %v41
  %45 = vmatpush.msra.mxu0 %v40
  %46 = vmatpush.msra.mxu0 %v39
  %47 = vmatpush.msra.mxu0 %v38
  %48 = vmatpush.msra.mxu0 %v37
  %49 = vmatpush.msra.mxu0 %v36
  %50 = vmatpush.msra.mxu0 %v35
  %51 = vmatpush.msra.mxu0 %v34
  %52 = vmatpush.msra.mxu0 %v33
  %53 = vmatpush.msra.mxu0 %v32
  %54 = vmatpush.msra.mxu0 %v31
  %55 = vmatpush.msra.mxu0 %v30
  %56 = vmatpush.msra.mxu0 %v29
  %57 = vmatpush.msra.mxu0 %v28
  %58 = vmatpush.msra.mxu0 %v27
  %59 = vmatmul.f32.gmra.mxu0 %v25
  %v60 = vpop.f32.mrf.mxu0
  %v61 = vadd.f32 0.0, %v60
  %62 = vmatmul.f32.gmra.mxu0 %v26
  %v63 = vpop.f32.mrf.mxu0
  %v64 = vadd.f32 0.0, %v63
  %65 = vdwg.mxu0
  %v66 = vld [vmem:[%s3] sm:$0x1]
  %v68 = vperm.slane %v66, 0
  %vm70 = vcmask 130048
  %v72 = vsel %vm70, %v23, 0
  %v75 = vsel %vm70, %v24, 0
  %77 = vmatpush.msra.mxu0 0.0
  %78 = vmatpush.msra.mxu0 0.0
  %79 = vmatpush.msra.mxu0 0.0
  %80 = vmatpush.msra.mxu0 0.0
  %81 = vmatpush.msra.mxu0 0.0
  %82 = vmatpush.msra.mxu0 0.0
  %83 = vmatpush.msra.mxu0 0.0
  %84 = vmatpush.msra.mxu0 0.0
  %85 = vmatpush.msra.mxu0 0.0
  %86 = vmatpush.msra.mxu0 0.0
  %87 = vmatpush.msra.mxu0 0.0
  %88 = vmatpush.msra.mxu0 0.0
  %89 = vmatpush.msra.mxu0 0.0
  %90 = vmatpush.msra.mxu0 0.0
  %91 = vmatpush.msra.mxu0 %v64
  %92 = vmatpush.msra.mxu0 %v61
  %93 = vmatmul.f32.gmra.mxu0 %v72
  %v94 = vpop.f32.mrf.mxu0
  %v95 = vadd.f32 %v68, %v94
  %96 = vmatmul.f32.gmra.mxu0 %v75
  %v97 = vpop.f32.mrf.mxu0
  %v98 = vadd.f32 %v68, %v97
  %99 = vdwg.mxu0
  %v100 = vmax.f32 %v95, 0.0
  %v101 = vmax.f32 %v98, 0.0
  %v102 = vld [vmem:[%s4] sm:$0xff]
  %v103 = vld [vmem:[%s4 + $0x8] sm:$0xff]
  %v104 = vld [vmem:[%s4 + $0x10] sm:$0xff]
  %v105 = vld [vmem:[%s4 + $0x18] sm:$0xff]
  %v106 = vld [vmem:[%s4 + $0x20] sm:$0xff]
  %v107 = vld [vmem:[%s4 + $0x28] sm:$0xff]
  %v108 = vld [vmem:[%s4 + $0x30] sm:$0xff]
  %v109 = vld [vmem:[%s4 + $0x38] sm:$0xff]
  %v110 = vld [vmem:[%s4 + $0x40] sm:$0xff]
  %v111 = vld [vmem:[%s4 + $0x48] sm:$0xff]
  %v112 = vld [vmem:[%s4 + $0x50] sm:$0xff]
  %v113 = vld [vmem:[%s4 + $0x58] sm:$0xff]
  %v114 = vld [vmem:[%s4 + $0x60] sm:$0xff]
  %v115 = vld [vmem:[%s4 + $0x68] sm:$0xff]
  %v116 = vld [vmem:[%s4 + $0x70] sm:$0xff]
  %v117 = vld [vmem:[%s4 + $0x78] sm:$0xff]
  %118 = vmatpush.msra.mxu0 %v117
  %119 = vmatpush.msra.mxu0 %v116
  %120 = vmatpush.msra.mxu0 %v115
  %121 = vmatpush.msra.mxu0 %v114
  %122 = vmatpush.msra.mxu0 %v113
  %123 = vmatpush.msra.mxu0 %v112
  %124 = vmatpush.msra.mxu0 %v111
  %125 = vmatpush.msra.mxu0 %v110
  %126 = vmatpush.msra.mxu0 %v109
  %127 = vmatpush.msra.mxu0 %v108
  %128 = vmatpush.msra.mxu0 %v107
  %129 = vmatpush.msra.mxu0 %v106
  %130 = vmatpush.msra.mxu0 %v105
  %131 = vmatpush.msra.mxu0 %v104
  %132 = vmatpush.msra.mxu0 %v103
  %133 = vmatpush.msra.mxu0 %v102
  %134 = vmatmul.f32.gmra.mxu0 %v100
  %v135 = vpop.f32.mrf.mxu0
  %v136 = vadd.f32 0.0, %v135
  %137 = vmatmul.f32.gmra.mxu0 %v101
  %v138 = vpop.f32.mrf.mxu0
  %v139 = vadd.f32 0.0, %v138
  %140 = vdwg.mxu0
  %v141 = vld [vmem:[%s5] sm:$0x1]
  %v143 = vperm.slane %v141, 0
  %145 = vmatpush.msra.mxu0 0.0
  %146 = vmatpush.msra.mxu0 0.0
  %147 = vmatpush.msra.mxu0 0.0
  %148 = vmatpush.msra.mxu0 0.0
  %149 = vmatpush.msra.mxu0 0.0
  %150 = vmatpush.msra.mxu0 0.0
  %151 = vmatpush.msra.mxu0 0.0
  %152 = vmatpush.msra.mxu0 0.0
  %153 = vmatpush.msra.mxu0 0.0
  %154 = vmatpush.msra.mxu0 0.0
  %155 = vmatpush.msra.mxu0 0.0
  %156 = vmatpush.msra.mxu0 0.0
  %157 = vmatpush.msra.mxu0 0.0
  %158 = vmatpush.msra.mxu0 0.0
  %159 = vmatpush.msra.mxu0 %v139
  %160 = vmatpush.msra.mxu0 %v136
  %161 = vmatmul.f32.gmra.mxu0 %v72
  %v162 = vpop.f32.mrf.mxu0
  %v163 = vadd.f32 %v143, %v162
  %164 = vmatmul.f32.gmra.mxu0 %v75
  %v165 = vpop.f32.mrf.mxu0
  %v166 = vadd.f32 %v143, %v165
  %167 = vdwg.mxu0
  %v168 = vmax.f32 %v163, 0.0
  %v169 = vmax.f32 %v166, 0.0
  %170 = vst [vmem:[%s6] sm:$0xff] %v168
  %171 = vst [vmem:[%s6 + $0x8] sm:$0xff] %v169
  // Predicated region
  $region26: #{net_forward.2} parent=0 // pred_check
    _
  $region27: #{net_forward.2} parent=0 // pred_check_branch
    %173 = sbr.rel (0) target = $region29
  $region28: #{net_forward.2} parent=0 // pred_region
    _
  $region29: #{net_forward.2} parent=0 // pred_fallthru
    _
  // Predicated region
  $region30: #{net_forward.2} parent=0 // pred_check
    _
  $region31: #{net_forward.2} parent=0 // pred_check_branch
    %175 = sbr.rel (0) target = $region33
  $region32: #{net_forward.2} parent=0 // pred_region
    _
  $region33: #{net_forward.2} parent=0 // pred_fallthru
    _

// kernel: custom-call.64
$region0: #{custom-call.64}
  %s0 = inlined_call_operand.hbm [shape: pred[3], index: 0, kind: output, shape index: {}]

// kernel: custom-call.69
$region0: #{custom-call.69}
  %s0 = inlined_call_operand.vmem [shape: f32[3,6,6], index: 0, kind: input, shape index: {}]
  %s1 = inlined_call_operand.vmem [shape: f32[3,6,6], index: 1, kind: output, shape index: {}]
  $region1: #{custom-call.69} parent=0
    #allocation0 [shape = 'u8[8192]{0}', space=vmem, size = 0x2000, scoped, tag = 'operand span for operand 0']
    #allocation1 [shape = 'u8[8192]{0}', space=vmem, size = 0x2000, scoped, tag = 'operand span for operand 1']
    loop: start=0, step=1, limit=5
    $region2: #{custom-call.69} parent=1 // loop_pre_header
      _
    $region3: #{custom-call.69} parent=1 // loop_header
      %s3 = sphi 0, %s7
      %p4 = scmp.ge.s32.totalorder %s3, 5
      %s10 = sphi 0, %s29
      %s11 = sphi 0, %s25
      %s12 = sphi 0, %s21
      %s13 = sphi 0, %s10
      %s14 = sphi 0, %s11
      %s15 = sphi 0, %s12
      %s16 = sphi 0, %s13
      %s17 = sphi 0, %s14
      %s18 = sphi 0, %s15
    $region4: #{custom-call.69} parent=1 // loop_header_branch
      %6 = sbr.rel (%p4) target = $region8
    $region5: #{custom-call.69} parent=1 // loop_body
      %s8 = ssub.s32 %s3, 1
      %s9 = ssub.s32 %s3, 2
      %s19 = sadd.s32 1, %s12
      %p20 = scmp.ge.s32.totalorder %s19, 1
      %s21 = scalar_select %p20, 0, %s19
      %s22 = sadd.s32 1, %s11
      %s23 = scalar_select %p20, %s22, %s11
      %p24 = scmp.ge.s32.totalorder %s23, 1
      %s25 = scalar_select %p24, 0, %s23
      %s26 = sadd.s32 1, %s10
      %s27 = scalar_select %p24, %s26, %s10
      %p28 = scmp.ge.s32.totalorder %s27, 3
      %s29 = scalar_select %p28, 0, %s27
      %p30 = scmp.le.s32.totalorder 1, %s3
      %p31 = scmp.lt.s32.totalorder %s3, 4
      %p32 = pnand %p30, %p31
      %p33 = pneg %p32
      // Predicated region
      $region9: #{custom-call.69} parent=5 // pred_check
        _
      $region10: #{custom-call.69} parent=5 // pred_check_branch
        %35 = sbr.rel (%p32) target = $region12
      $region11: #{custom-call.69} parent=5 // pred_region
        %s36 = ssub.s32 %s3, 1
      $region12: #{custom-call.69} parent=5 // pred_fallthru
        _
      %p37 = scmp.lt.s32.totalorder %s3, 3
      // Predicated region
      $region13: #{custom-call.69} parent=5 // pred_check
        %p38 = pneg %p37
      $region14: #{custom-call.69} parent=5 // pred_check_branch
        %40 = sbr.rel (%p38) target = $region16
      $region15: #{custom-call.69} parent=5 // pred_region
        %s41 = sand.u32 %s3, 1
        %s42 = sand.u32 %s3, 1
        %s43 = smul.addr %s42, 8
        %s44 = scalar_lea.vmem [#allocation0], %s43
        %s45 = sadd.s32 %s12, %s11
        %s46 = sadd.s32 %s45, %s10
        %s47 = smul.addr %s46, 8
        %s48 = scalar_lea.vmem %s0, %s47
        // Predicated region
        $region17: #{custom-call.69} parent=15 // pred_check
          _
        $region18: #{custom-call.69} parent=15 // pred_check_branch
          %50 = sbr.rel (0) target = $region20
        $region19: #{custom-call.69} parent=15 // pred_region
          // Predicated region
          $region21: #{custom-call.69} parent=19 // pred_check
            _
          $region22: #{custom-call.69} parent=19 // pred_check_branch
            %52 = sbr.rel (0) target = $region24
          $region23: #{custom-call.69} parent=19 // pred_region
            // Predicated region
            $region36: #{custom-call.69} parent=23 // pred_check
              _
            $region37: #{custom-call.69} parent=23 // pred_check_branch
              %68 = sbr.rel (0) target = $region39
            $region38: #{custom-call.69} parent=23 // pred_region
              loop: start=0, step=1, limit=1
              $region40: #{custom-call.69} parent=38 // loop_pre_header
                _
              $region41: #{custom-call.69} parent=38 // loop_header
                %s70 = sphi 0, %s74
                %p71 = scmp.ge.s32.totalorder %s70, 1
                %s75 = sphi %s48, %s48
                %s76 = sphi %s44, %s44
              $region42: #{custom-call.69} parent=38 // loop_header_branch
                %73 = sbr.rel (%p71) target = $region46
              $region43: #{custom-call.69} parent=38 // loop_body
                %v77 = vld [vmem:[%s75] sm:$0xff]
                %78 = vst [vmem:[%s76] sm:$0xff] %v77
              $region44: #{custom-call.69} parent=38 // loop_footer
                %s74 = sadd.s32 1, %s70
              $region45: #{custom-call.69} parent=38 // loop_footer_branch
                %69 = sbr.rel target = $region41
              $region46: #{custom-call.69} parent=38 // loop_exit
                _
            $region39: #{custom-call.69} parent=23 // pred_fallthru
              _
            // Predicated region
            $region47: #{custom-call.69} parent=23 // pred_check
              _
            $region48: #{custom-call.69} parent=23 // pred_check_branch
              %80 = sbr.rel target = $region50
            $region49: #{custom-call.69} parent=23 // pred_region
              _
            $region50: #{custom-call.69} parent=23 // pred_fallthru
              _
          $region24: #{custom-call.69} parent=19 // pred_fallthru
            _
          // Predicated region
          $region25: #{custom-call.69} parent=19 // pred_check
            _
          $region26: #{custom-call.69} parent=19 // pred_check_branch
            %54 = sbr.rel target = $region28
          $region27: #{custom-call.69} parent=19 // pred_region
            %s56 = ssub.s32 256, 1
            loop: start=0, step=1, limit=1
            $region29: #{custom-call.69} parent=27 // loop_pre_header
              _
            $region30: #{custom-call.69} parent=27 // loop_header
              %s58 = sphi 0, %s62
              %p59 = scmp.ge.s32.totalorder %s58, 1
              %s63 = sphi %s48, %s48
              %s64 = sphi %s44, %s44
            $region31: #{custom-call.69} parent=27 // loop_header_branch
              %61 = sbr.rel (%p59) target = $region35
            $region32: #{custom-call.69} parent=27 // loop_body
              %v65 = vld [vmem:[%s63] sm:%s56]
              %66 = vst [vmem:[%s64] sm:%s56] %v65
            $region33: #{custom-call.69} parent=27 // loop_footer
              %s62 = sadd.s32 1, %s58
            $region34: #{custom-call.69} parent=27 // loop_footer_branch
              %57 = sbr.rel target = $region30
            $region35: #{custom-call.69} parent=27 // loop_exit
              _
          $region28: #{custom-call.69} parent=19 // pred_fallthru
            _
        $region20: #{custom-call.69} parent=15 // pred_fallthru
          _
        %81 = vnop
      $region16: #{custom-call.69} parent=5 // pred_fallthru
        _
      %p82 = scmp.le.s32.totalorder 1, %s3
      %p83 = scmp.lt.s32.totalorder %s3, 4
      %p84 = pnand %p82, %p83
      %p85 = pneg %p84
      // Predicated region
      $region51: #{custom-call.69} parent=5 // pred_check
        _
      $region52: #{custom-call.69} parent=5 // pred_check_branch
        %87 = sbr.rel (%p84) target = $region54
      $region53: #{custom-call.69} parent=5 // pred_region
        %s88 = ssub.s32 %s3, 1
        %s89 = sand.u32 %s8, 1
        %s90 = sand.u32 %s8, 1
        %s91 = smul.addr %s90, 8
        %s92 = scalar_lea.vmem [#allocation0], %s91
        %s93 = sand.u32 %s8, 1
        %s94 = sand.u32 %s8, 1
        %s95 = smul.addr %s94, 8
        %s96 = scalar_lea.vmem [#allocation0], %s95
        %s97 = sand.u32 %s8, 1
        %s98 = sand.u32 %s8, 1
        %s99 = smul.addr %s98, 8
        %s100 = scalar_lea.vmem [#allocation1], %s99
        %101 = vst [vmem:[%s100] sm:$0xff] 0.0
        %vm102 = vcmask 7168
        %v103 = vld [vmem:[%s100] ss:$0 sm:$0xff]
        %v104 = vld [vmem:[%s92] ss:$0 sm:$0xff]
        %v105 = vmul.f32 %v103, %v103
        %106 = vadd.xlane.f32.xlu0 %v105
        %v107 = vpop.xlane.xlu0 %106
        %v108 = vsub.f32 %v104, %v107
        %v109 = vrsqrt.pop %v108
        %v110 = vmul.f32 %v109, %v108
        %v111 = vmul.f32 %v110, %v109
        %v112 = vmul.f32 0.5, %v111
        %v113 = vsub.f32 1.5, %v112
        %v114 = vmul.f32 %v109, %v113
        %vm115 = vweird.f32 %v108
        %vm116 = vweird.f32 %v109
        %vm117 = vmor %vm115, %vm116
        %v118 = vsel %vm117, %v109, %v114
        %v119 = vld [vmem:[%s92] sm:$0xff]
        %v120 = vld [vmem:[%s100] sm:$0xff]
        %v121 = vmul.f32 %v120, %v103
        %122 = vadd.xlane.f32.xlu0 %v121
        %v123 = vpop.xlane.xlu0 %122
        %v124 = vsub.f32 %v119, %v123
        %v125 = vmul.f32 %v124, %v118
        %v126 = vsel %vm102, %v125, 0.0
        %v127 = vadd.f32 %v120, %v126
        %128 = vst [vmem:[%s100] sm:$0xff] %v127
        %vm129 = vcmask 15368
        %s130 = scalar_lea.vmem %s100, 1 [#allocation1]
        %v131 = vld [vmem:[%s130] ss:$0 sm:$0xff]
        %s132 = scalar_lea.vmem %s92, 1 [#allocation0]
        %v133 = vld [vmem:[%s132] ss:$0 sm:$0xff]
        %v134 = vmul.f32 %v131, %v131
        %135 = vadd.xlane.f32.xlu0 %v134
        %v136 = vpop.xlane.xlu0 %135
        %v137 = vsub.f32 %v133, %v136
        %v138 = vrsqrt.pop %v137
        %v139 = vmul.f32 %v138, %v137
        %v140 = vmul.f32 %v139, %v138
        %v141 = vmul.f32 0.5, %v140
        %v142 = vsub.f32 1.5, %v141
        %v143 = vmul.f32 %v138, %v142
        %vm144 = vweird.f32 %v137
        %vm145 = vweird.f32 %v138
        %vm146 = vmor %vm144, %vm145
        %v147 = vsel %vm146, %v138, %v143
        %v148 = vld [vmem:[%s92] sm:$0xff]
        %v149 = vld [vmem:[%s100] sm:$0xff]
        %v150 = vmul.f32 %v149, %v131
        %151 = vadd.xlane.f32.xlu0 %v150
        %v152 = vpop.xlane.xlu0 %151
        %v153 = vsub.f32 %v148, %v152
        %v154 = vmul.f32 %v153, %v147
        %vm155 = vcmask 1047553
        %vm156 = vmand %vm129, %vm155
        %v157 = vsel %vm156, %v154, 0.0
        %v158 = vadd.f32 %v149, %v157
        %159 = vst [vmem:[%s100] sm:$0xff] %v158
        %vm160 = vcmask 23568
        %s161 = scalar_lea.vmem %s100, 2 [#allocation1]
        %v162 = vld [vmem:[%s161] ss:$0 sm:$0xff]
        %s163 = scalar_lea.vmem %s92, 2 [#allocation0]
        %v164 = vld [vmem:[%s163] ss:$0 sm:$0xff]
        %v165 = vmul.f32 %v162, %v162
        %166 = vadd.xlane.f32.xlu0 %v165
        %v167 = vpop.xlane.xlu0 %166
        %v168 = vsub.f32 %v164, %v167
        %v169 = vrsqrt.pop %v168
        %v170 = vmul.f32 %v169, %v168
        %v171 = vmul.f32 %v170, %v169
        %v172 = vmul.f32 0.5, %v171
        %v173 = vsub.f32 1.5, %v172
        %v174 = vmul.f32 %v169, %v173
        %vm175 = vweird.f32 %v168
        %vm176 = vweird.f32 %v169
        %vm177 = vmor %vm175, %vm176
        %v178 = vsel %vm177, %v169, %v174
        %v179 = vld [vmem:[%s92] sm:$0xff]
        %v180 = vld [vmem:[%s100] sm:$0xff]
        %v181 = vmul.f32 %v180, %v162
        %182 = vadd.xlane.f32.xlu0 %v181
        %v183 = vpop.xlane.xlu0 %182
        %v184 = vsub.f32 %v179, %v183
        %v185 = vmul.f32 %v184, %v178
        %vm186 = vcmask 1047554
        %vm187 = vmand %vm160, %vm186
        %v188 = vsel %vm187, %v185, 0.0
        %v189 = vadd.f32 %v180, %v188
        %190 = vst [vmem:[%s100] sm:$0xff] %v189
        %vm191 = vcmask 31768
        %s192 = scalar_lea.vmem %s100, 3 [#allocation1]
        %v193 = vld [vmem:[%s192] ss:$0 sm:$0xff]
        %s194 = scalar_lea.vmem %s92, 3 [#allocation0]
        %v195 = vld [vmem:[%s194] ss:$0 sm:$0xff]
        %v196 = vmul.f32 %v193, %v193
        %197 = vadd.xlane.f32.xlu0 %v196
        %v198 = vpop.xlane.xlu0 %197
        %v199 = vsub.f32 %v195, %v198
        %v200 = vrsqrt.pop %v199
        %v201 = vmul.f32 %v200, %v199
        %v202 = vmul.f32 %v201, %v200
        %v203 = vmul.f32 0.5, %v202
        %v204 = vsub.f32 1.5, %v203
        %v205 = vmul.f32 %v200, %v204
        %vm206 = vweird.f32 %v199
        %vm207 = vweird.f32 %v200
        %vm208 = vmor %vm206, %vm207
        %v209 = vsel %vm208, %v200, %v205
        %v210 = vld [vmem:[%s92] sm:$0xff]
        %v211 = vld [vmem:[%s100] sm:$0xff]
        %v212 = vmul.f32 %v211, %v193
        %213 = vadd.xlane.f32.xlu0 %v212
        %v214 = vpop.xlane.xlu0 %213
        %v215 = vsub.f32 %v210, %v214
        %v216 = vmul.f32 %v215, %v209
        %vm217 = vcmask 1047555
        %vm218 = vmand %vm191, %vm217
        %v219 = vsel %vm218, %v216, 0.0
        %v220 = vadd.f32 %v211, %v219
        %221 = vst [vmem:[%s100] sm:$0xff] %v220
        %vm222 = vcmask 39968
        %s223 = scalar_lea.vmem %s100, 4 [#allocation1]
        %v224 = vld [vmem:[%s223] ss:$0 sm:$0xff]
        %s225 = scalar_lea.vmem %s92, 4 [#allocation0]
        %v226 = vld [vmem:[%s225] ss:$0 sm:$0xff]
        %v227 = vmul.f32 %v224, %v224
        %228 = vadd.xlane.f32.xlu0 %v227
        %v229 = vpop.xlane.xlu0 %228
        %v230 = vsub.f32 %v226, %v229
        %v231 = vrsqrt.pop %v230
        %v232 = vmul.f32 %v231, %v230
        %v233 = vmul.f32 %v232, %v231
        %v234 = vmul.f32 0.5, %v233
        %v235 = vsub.f32 1.5, %v234
        %v236 = vmul.f32 %v231, %v235
        %vm237 = vweird.f32 %v230
        %vm238 = vweird.f32 %v231
        %vm239 = vmor %vm237, %vm238
        %v240 = vsel %vm239, %v231, %v236
        %v241 = vld [vmem:[%s92] sm:$0xff]
        %v242 = vld [vmem:[%s100] sm:$0xff]
        %v243 = vmul.f32 %v242, %v224
        %244 = vadd.xlane.f32.xlu0 %v243
        %v245 = vpop.xlane.xlu0 %244
        %v246 = vsub.f32 %v241, %v245
        %v247 = vmul.f32 %v246, %v240
        %vm248 = vcmask 1047556
        %vm249 = vmand %vm222, %vm248
        %v250 = vsel %vm249, %v247, 0.0
        %v251 = vadd.f32 %v242, %v250
        %252 = vst [vmem:[%s100] sm:$0xff] %v251
        %vm253 = vcmask 48168
        %s254 = scalar_lea.vmem %s100, 5 [#allocation1]
        %v255 = vld [vmem:[%s254] ss:$0 sm:$0xff]
        %s256 = scalar_lea.vmem %s92, 5 [#allocation0]
        %v257 = vld [vmem:[%s256] ss:$0 sm:$0xff]
        %v258 = vmul.f32 %v255, %v255
        %259 = vadd.xlane.f32.xlu0 %v258
        %v260 = vpop.xlane.xlu0 %259
        %v261 = vsub.f32 %v257, %v260
        %v262 = vrsqrt.pop %v261
        %v263 = vmul.f32 %v262, %v261
        %v264 = vmul.f32 %v263, %v262
        %v265 = vmul.f32 0.5, %v264
        %v266 = vsub.f32 1.5, %v265
        %v267 = vmul.f32 %v262, %v266
        %vm268 = vweird.f32 %v261
        %vm269 = vweird.f32 %v262
        %vm270 = vmor %vm268, %vm269
        %v271 = vsel %vm270, %v262, %v267
        %v272 = vld [vmem:[%s92] sm:$0xff]
        %v273 = vld [vmem:[%s100] sm:$0xff]
        %v274 = vmul.f32 %v273, %v255
        %275 = vadd.xlane.f32.xlu0 %v274
        %v276 = vpop.xlane.xlu0 %275
        %v277 = vsub.f32 %v272, %v276
        %v278 = vmul.f32 %v277, %v271
        %vm279 = vcmask 1047557
        %vm280 = vmand %vm253, %vm279
        %v281 = vsel %vm280, %v278, 0.0
        %v282 = vadd.f32 %v273, %v281
        %283 = vst [vmem:[%s100] sm:$0xff] %v282
        %s284 = sand.u32 %s8, 1
        %s285 = sand.u32 %s8, 1
        %s286 = smul.addr %s285, 8
        %s287 = scalar_lea.vmem [#allocation1], %s286
        %s288 = sadd.s32 %s15, %s14
        %s289 = sadd.s32 %s288, %s13
        %s290 = smul.addr %s289, 8
        %s291 = scalar_lea.vmem %s1, %s290
        // Predicated region
        $region55: #{custom-call.69} parent=53 // pred_check
          _
        $region56: #{custom-call.69} parent=53 // pred_check_branch
          %293 = sbr.rel (0) target = $region58
        $region57: #{custom-call.69} parent=53 // pred_region
          // Predicated region
          $region59: #{custom-call.69} parent=57 // pred_check
            _
          $region60: #{custom-call.69} parent=57 // pred_check_branch
            %295 = sbr.rel (0) target = $region62
          $region61: #{custom-call.69} parent=57 // pred_region
            // Predicated region
            $region74: #{custom-call.69} parent=61 // pred_check
              _
            $region75: #{custom-call.69} parent=61 // pred_check_branch
              %311 = sbr.rel (0) target = $region77
            $region76: #{custom-call.69} parent=61 // pred_region
              loop: start=0, step=1, limit=1
              $region78: #{custom-call.69} parent=76 // loop_pre_header
                _
              $region79: #{custom-call.69} parent=76 // loop_header
                %s313 = sphi 0, %s317
                %p314 = scmp.ge.s32.totalorder %s313, 1
                %s318 = sphi %s287, %s287
                %s319 = sphi %s291, %s291
              $region80: #{custom-call.69} parent=76 // loop_header_branch
                %316 = sbr.rel (%p314) target = $region84
              $region81: #{custom-call.69} parent=76 // loop_body
                %v320 = vld [vmem:[%s318] sm:$0xff]
                %321 = vst [vmem:[%s319] sm:$0xff] %v320
              $region82: #{custom-call.69} parent=76 // loop_footer
                %s317 = sadd.s32 1, %s313
              $region83: #{custom-call.69} parent=76 // loop_footer_branch
                %312 = sbr.rel target = $region79
              $region84: #{custom-call.69} parent=76 // loop_exit
                _
            $region77: #{custom-call.69} parent=61 // pred_fallthru
              _
            // Predicated region
            $region85: #{custom-call.69} parent=61 // pred_check
              _
            $region86: #{custom-call.69} parent=61 // pred_check_branch
              %323 = sbr.rel target = $region88
            $region87: #{custom-call.69} parent=61 // pred_region
              _
            $region88: #{custom-call.69} parent=61 // pred_fallthru
              _
          $region62: #{custom-call.69} parent=57 // pred_fallthru
            _
          // Predicated region
          $region63: #{custom-call.69} parent=57 // pred_check
            _
          $region64: #{custom-call.69} parent=57 // pred_check_branch
            %297 = sbr.rel target = $region66
          $region65: #{custom-call.69} parent=57 // pred_region
            %s299 = ssub.s32 256, 1
            loop: start=0, step=1, limit=1
            $region67: #{custom-call.69} parent=65 // loop_pre_header
              _
            $region68: #{custom-call.69} parent=65 // loop_header
              %s301 = sphi 0, %s305
              %p302 = scmp.ge.s32.totalorder %s301, 1
              %s306 = sphi %s287, %s287
              %s307 = sphi %s291, %s291
            $region69: #{custom-call.69} parent=65 // loop_header_branch
              %304 = sbr.rel (%p302) target = $region73
            $region70: #{custom-call.69} parent=65 // loop_body
              %v308 = vld [vmem:[%s306] sm:%s299]
              %309 = vst [vmem:[%s307] sm:%s299] %v308
            $region71: #{custom-call.69} parent=65 // loop_footer
              %s305 = sadd.s32 1, %s301
            $region72: #{custom-call.69} parent=65 // loop_footer_branch
              %300 = sbr.rel target = $region68
            $region73: #{custom-call.69} parent=65 // loop_exit
              _
          $region66: #{custom-call.69} parent=57 // pred_fallthru
            _
        $region58: #{custom-call.69} parent=53 // pred_fallthru
          _
        %324 = vnop
      $region54: #{custom-call.69} parent=5 // pred_fallthru
        _
      %p325 = scmp.le.s32.totalorder 2, %s3
      // Predicated region
      $region89: #{custom-call.69} parent=5 // pred_check
        %p326 = pneg %p325
      $region90: #{custom-call.69} parent=5 // pred_check_branch
        %328 = sbr.rel (%p326) target = $region92
      $region91: #{custom-call.69} parent=5 // pred_region
        %s329 = ssub.s32 %s3, 2
        %s330 = sand.u32 %s9, 1
        %s331 = sand.u32 %s9, 1
        %s332 = smul.addr %s331, 8
        %s333 = scalar_lea.vmem [#allocation1], %s332
      $region92: #{custom-call.69} parent=5 // pred_fallthru
        _
    $region6: #{custom-call.69} parent=1 // loop_footer
      %s7 = sadd.s32 1, %s3
    $region7: #{custom-call.69} parent=1 // loop_footer_branch
      %2 = sbr.rel target = $region3
    $region8: #{custom-call.69} parent=1 // loop_exit
      _

// kernel: custom-call.70
$region0: #{custom-call.70}
  %s0 = inlined_call_operand.vmem [shape: f32[3,1,6,6], index: 0, kind: input, shape index: {}]
  %s1 = inlined_call_operand.vmem [shape: f32[3,1,6,6], index: 1, kind: output, shape index: {}]
  $region1: #{custom-call.70} parent=0
    #allocation0 [shape = 'u8[8192]{0}', space=vmem, size = 0x2000, scoped, tag = 'operand span for operand 0']
    #allocation1 [shape = 'u8[8192]{0}', space=vmem, size = 0x2000, scoped, tag = 'operand span for operand 1']
    loop: start=0, step=1, limit=5
    $region2: #{custom-call.70} parent=1 // loop_pre_header
      _
    $region3: #{custom-call.70} parent=1 // loop_header
      %s3 = sphi 0, %s7
      %p4 = scmp.ge.s32.totalorder %s3, 5
      %s10 = sphi 0, %s36
      %s11 = sphi 0, %s32
      %s12 = sphi 0, %s28
      %s13 = sphi 0, %s24
      %s14 = sphi 0, %s10
      %s15 = sphi 0, %s11
      %s16 = sphi 0, %s12
      %s17 = sphi 0, %s13
      %s18 = sphi 0, %s14
      %s19 = sphi 0, %s15
      %s20 = sphi 0, %s16
      %s21 = sphi 0, %s17
    $region4: #{custom-call.70} parent=1 // loop_header_branch
      %6 = sbr.rel (%p4) target = $region8
    $region5: #{custom-call.70} parent=1 // loop_body
      %s8 = ssub.s32 %s3, 1
      %s9 = ssub.s32 %s3, 2
      %s22 = sadd.s32 1, %s13
      %p23 = scmp.ge.s32.totalorder %s22, 1
      %s24 = scalar_select %p23, 0, %s22
      %s25 = sadd.s32 1, %s12
      %s26 = scalar_select %p23, %s25, %s12
      %p27 = scmp.ge.s32.totalorder %s26, 1
      %s28 = scalar_select %p27, 0, %s26
      %s29 = sadd.s32 1, %s11
      %s30 = scalar_select %p27, %s29, %s11
      %p31 = scmp.ge.s32.totalorder %s30, 1
      %s32 = scalar_select %p31, 0, %s30
      %s33 = sadd.s32 1, %s10
      %s34 = scalar_select %p31, %s33, %s10
      %p35 = scmp.ge.s32.totalorder %s34, 3
      %s36 = scalar_select %p35, 0, %s34
      %p37 = scmp.le.s32.totalorder 1, %s3
      %p38 = scmp.lt.s32.totalorder %s3, 4
      %p39 = pnand %p37, %p38
      %p40 = pneg %p39
      // Predicated region
      $region9: #{custom-call.70} parent=5 // pred_check
        _
      $region10: #{custom-call.70} parent=5 // pred_check_branch
        %42 = sbr.rel (%p39) target = $region12
      $region11: #{custom-call.70} parent=5 // pred_region
        %s43 = ssub.s32 %s3, 1
      $region12: #{custom-call.70} parent=5 // pred_fallthru
        _
      %p44 = scmp.lt.s32.totalorder %s3, 3
      // Predicated region
      $region13: #{custom-call.70} parent=5 // pred_check
        %p45 = pneg %p44
      $region14: #{custom-call.70} parent=5 // pred_check_branch
        %47 = sbr.rel (%p45) target = $region16
      $region15: #{custom-call.70} parent=5 // pred_region
        %s48 = sand.u32 %s3, 1
        %s49 = sand.u32 %s3, 1
        %s50 = smul.addr %s49, 8
        %s51 = scalar_lea.vmem [#allocation0], %s50
        %s52 = sadd.s32 %s13, %s12
        %s53 = sadd.s32 %s52, %s11
        %s54 = sadd.s32 %s53, %s10
        %s55 = smul.addr %s54, 8
        %s56 = scalar_lea.vmem %s0, %s55
        // Predicated region
        $region17: #{custom-call.70} parent=15 // pred_check
          _
        $region18: #{custom-call.70} parent=15 // pred_check_branch
          %58 = sbr.rel (0) target = $region20
        $region19: #{custom-call.70} parent=15 // pred_region
          // Predicated region
          $region21: #{custom-call.70} parent=19 // pred_check
            _
          $region22: #{custom-call.70} parent=19 // pred_check_branch
            %60 = sbr.rel (0) target = $region24
          $region23: #{custom-call.70} parent=19 // pred_region
            // Predicated region
            $region36: #{custom-call.70} parent=23 // pred_check
              _
            $region37: #{custom-call.70} parent=23 // pred_check_branch
              %76 = sbr.rel (0) target = $region39
            $region38: #{custom-call.70} parent=23 // pred_region
              loop: start=0, step=1, limit=1
              $region40: #{custom-call.70} parent=38 // loop_pre_header
                _
              $region41: #{custom-call.70} parent=38 // loop_header
                %s78 = sphi 0, %s82
                %p79 = scmp.ge.s32.totalorder %s78, 1
                %s83 = sphi %s56, %s56
                %s84 = sphi %s51, %s51
              $region42: #{custom-call.70} parent=38 // loop_header_branch
                %81 = sbr.rel (%p79) target = $region46
              $region43: #{custom-call.70} parent=38 // loop_body
                %v85 = vld [vmem:[%s83] sm:$0xff]
                %86 = vst [vmem:[%s84] sm:$0xff] %v85
              $region44: #{custom-call.70} parent=38 // loop_footer
                %s82 = sadd.s32 1, %s78
              $region45: #{custom-call.70} parent=38 // loop_footer_branch
                %77 = sbr.rel target = $region41
              $region46: #{custom-call.70} parent=38 // loop_exit
                _
            $region39: #{custom-call.70} parent=23 // pred_fallthru
              _
            // Predicated region
            $region47: #{custom-call.70} parent=23 // pred_check
              _
            $region48: #{custom-call.70} parent=23 // pred_check_branch
              %88 = sbr.rel target = $region50
            $region49: #{custom-call.70} parent=23 // pred_region
              _
            $region50: #{custom-call.70} parent=23 // pred_fallthru
              _
          $region24: #{custom-call.70} parent=19 // pred_fallthru
            _
          // Predicated region
          $region25: #{custom-call.70} parent=19 // pred_check
            _
          $region26: #{custom-call.70} parent=19 // pred_check_branch
            %62 = sbr.rel target = $region28
          $region27: #{custom-call.70} parent=19 // pred_region
            %s64 = ssub.s32 256, 1
            loop: start=0, step=1, limit=1
            $region29: #{custom-call.70} parent=27 // loop_pre_header
              _
            $region30: #{custom-call.70} parent=27 // loop_header
              %s66 = sphi 0, %s70
              %p67 = scmp.ge.s32.totalorder %s66, 1
              %s71 = sphi %s56, %s56
              %s72 = sphi %s51, %s51
            $region31: #{custom-call.70} parent=27 // loop_header_branch
              %69 = sbr.rel (%p67) target = $region35
            $region32: #{custom-call.70} parent=27 // loop_body
              %v73 = vld [vmem:[%s71] sm:%s64]
              %74 = vst [vmem:[%s72] sm:%s64] %v73
            $region33: #{custom-call.70} parent=27 // loop_footer
              %s70 = sadd.s32 1, %s66
            $region34: #{custom-call.70} parent=27 // loop_footer_branch
              %65 = sbr.rel target = $region30
            $region35: #{custom-call.70} parent=27 // loop_exit
              _
          $region28: #{custom-call.70} parent=19 // pred_fallthru
            _
        $region20: #{custom-call.70} parent=15 // pred_fallthru
          _
        %89 = vnop
      $region16: #{custom-call.70} parent=5 // pred_fallthru
        _
      %p90 = scmp.le.s32.totalorder 1, %s3
      %p91 = scmp.lt.s32.totalorder %s3, 4
      %p92 = pnand %p90, %p91
      %p93 = pneg %p92
      // Predicated region
      $region51: #{custom-call.70} parent=5 // pred_check
        _
      $region52: #{custom-call.70} parent=5 // pred_check_branch
        %95 = sbr.rel (%p92) target = $region54
      $region53: #{custom-call.70} parent=5 // pred_region
        #allocation2 [shape = 'f32[6,6]{1,0}', space=vmem, size = 0x1000, scoped, tag = 'rescaled input a']
        %s96 = ssub.s32 %s3, 1
        %s97 = sand.u32 %s8, 1
        %s98 = sand.u32 %s8, 1
        %s99 = smul.addr %s98, 8
        %s100 = scalar_lea.vmem [#allocation0], %s99
        %s101 = sand.u32 %s8, 1
        %s102 = sand.u32 %s8, 1
        %s103 = smul.addr %s102, 8
        %s104 = scalar_lea.vmem [#allocation0], %s103
        %s105 = sand.u32 %s8, 1
        %s106 = sand.u32 %s8, 1
        %s107 = smul.addr %s106, 8
        %s108 = scalar_lea.vmem [#allocation1], %s107
        %v109 = vlaneseq
        %v110 = vand.u32 %v109, 127
        %vm111 = vcmp.lt.s32.totalorder %v110, 6
        %v112 = vlaneseq
        %v113 = vshrl.u32 %v112, 7
        %vm115 = vcmp.eq.s32.totalorder %v113, %v110
        %v116 = vld [vmem:[%s100] sm:$0xff]
        %v117 = vsel %vm115, %v116, 0.0
        %118 = vadd.xlane.f32.xlu0 %v117
        %v119 = vpop.xlane.xlu0 %118
        %vm120 = vcmp.ge.s32.totalorder %v113, %v110
        %vm121 = vmand %vm120, %vm111
        %v122 = vsel %vm121, %v116, 0.0
        %v123 = vrcp.pop %v119
        %v124 = vmul.f32 %v119, %v123
        %v125 = vsub.f32 1.0, %v124
        %v126 = vmul.f32 %v123, %v125
        %v127 = vadd.f32 %v123, %v126
        %vm128 = vweird.f32 %v119
        %vm129 = vweird.f32 %v123
        %vm130 = vmor %vm128, %vm129
        %v131 = vsel %vm130, %v123, %v127
        %v132 = vand.u32 2147483647, %v119
        %vm133 = vcmp.eq.f32.partialorder %v132, 8.507059e+37
        %v134 = vand.u32 %v119, 2147483648
        %v135 = vor.u32 1.1754944e-38, %v134
        %v136 = vsel %vm133, %v135, %v131
        %v137 = vmul.f32 %v122, %v136
        %138 = vst [vmem:[#allocation2] sm:$0xff] %v137
        %v139 = vlaneseq
        %v140 = vand.u32 %v139, 127
        %v141 = vlaneseq
        %v142 = vshrl.u32 %v141, 7
        %vm144 = vcmp.eq.s32.totalorder %v140, %v142
        %v145 = vlaneseq
        %v146 = vand.u32 %v145, 127
        %vm147 = vcmp.eq.s32.totalorder %v146, 0
        %v148 = vsel %vm147, 1.0, -1.0
        %v149 = vsel %vm144, %v148, 0.0
        %s150 = scalar_lea.vmem [#allocation2], 1
        %v151 = vld [vmem:[%s150] ss:$0 sm:$0xff]
        %v152 = vxor.u32 %v151, 2147483648
        %v153 = vlaneseq
        %v154 = vand.u32 %v153, 127
        %vm155 = vcmp.eq.s32.totalorder %v154, 1
        %v156 = vmul.f32 %v152, %v149
        %157 = vadd.xlane.f32.xlu0 %v156
        %v158 = vpop.xlane.xlu0 %157
        %v159 = vsel %vm155, %v158, %v149
        %s160 = scalar_lea.vmem [#allocation2], 2
        %v161 = vld [vmem:[%s160] ss:$0 sm:$0xff]
        %v162 = vxor.u32 %v161, 2147483648
        %v163 = vlaneseq
        %v164 = vand.u32 %v163, 127
        %vm165 = vcmp.eq.s32.totalorder %v164, 2
        %v166 = vmul.f32 %v162, %v159
        %167 = vadd.xlane.f32.xlu0 %v166
        %v168 = vpop.xlane.xlu0 %167
        %v169 = vsel %vm165, %v168, %v159
        %s170 = scalar_lea.vmem [#allocation2], 3
        %v171 = vld [vmem:[%s170] ss:$0 sm:$0xff]
        %v172 = vxor.u32 %v171, 2147483648
        %v173 = vlaneseq
        %v174 = vand.u32 %v173, 127
        %vm175 = vcmp.eq.s32.totalorder %v174, 3
        %v176 = vmul.f32 %v172, %v169
        %177 = vadd.xlane.f32.xlu0 %v176
        %v178 = vpop.xlane.xlu0 %177
        %v179 = vsel %vm175, %v178, %v169
        %s180 = scalar_lea.vmem [#allocation2], 4
        %v181 = vld [vmem:[%s180] ss:$0 sm:$0xff]
        %v182 = vxor.u32 %v181, 2147483648
        %v183 = vlaneseq
        %v184 = vand.u32 %v183, 127
        %vm185 = vcmp.eq.s32.totalorder %v184, 4
        %v186 = vmul.f32 %v182, %v179
        %187 = vadd.xlane.f32.xlu0 %v186
        %v188 = vpop.xlane.xlu0 %187
        %v189 = vsel %vm185, %v188, %v179
        %s190 = scalar_lea.vmem [#allocation2], 5
        %v191 = vld [vmem:[%s190] ss:$0 sm:$0xff]
        %v192 = vxor.u32 %v191, 2147483648
        %v193 = vlaneseq
        %v194 = vand.u32 %v193, 127
        %vm195 = vcmp.eq.s32.totalorder %v194, 5
        %v196 = vmul.f32 %v192, %v189
        %197 = vadd.xlane.f32.xlu0 %v196
        %v198 = vpop.xlane.xlu0 %197
        %v199 = vsel %vm195, %v198, %v189
        %v200 = vrcp.pop %v119
        %v201 = vmul.f32 %v119, %v200
        %v202 = vsub.f32 1.0, %v201
        %v203 = vmul.f32 %v200, %v202
        %v204 = vadd.f32 %v200, %v203
        %vm205 = vweird.f32 %v119
        %vm206 = vweird.f32 %v200
        %vm207 = vmor %vm205, %vm206
        %v208 = vsel %vm207, %v200, %v204
        %v209 = vand.u32 2147483647, %v119
        %vm210 = vcmp.eq.f32.partialorder %v209, 8.507059e+37
        %v211 = vand.u32 %v119, 2147483648
        %v212 = vor.u32 1.1754944e-38, %v211
        %v213 = vsel %vm210, %v212, %v208
        %v214 = vmul.f32 %v199, %v213
        %vm215 = vweird.f32 %v119
        %v216 = vsel %vm215, %v199, %v214
        %217 = vst [vmem:[%s108] sm:$0xff] %v216
        %s218 = sand.u32 %s8, 1
        %s219 = sand.u32 %s8, 1
        %s220 = smul.addr %s219, 8
        %s221 = scalar_lea.vmem [#allocation1], %s220
        %s222 = sadd.s32 %s17, %s16
        %s223 = sadd.s32 %s222, %s15
        %s224 = sadd.s32 %s223, %s14
        %s225 = smul.addr %s224, 8
        %s226 = scalar_lea.vmem %s1, %s225
        // Predicated region
        $region55: #{custom-call.70} parent=53 // pred_check
          _
        $region56: #{custom-call.70} parent=53 // pred_check_branch
          %228 = sbr.rel (0) target = $region58
        $region57: #{custom-call.70} parent=53 // pred_region
          // Predicated region
          $region59: #{custom-call.70} parent=57 // pred_check
            _
          $region60: #{custom-call.70} parent=57 // pred_check_branch
            %230 = sbr.rel (0) target = $region62
          $region61: #{custom-call.70} parent=57 // pred_region
            // Predicated region
            $region74: #{custom-call.70} parent=61 // pred_check
              _
            $region75: #{custom-call.70} parent=61 // pred_check_branch
              %246 = sbr.rel (0) target = $region77
            $region76: #{custom-call.70} parent=61 // pred_region
              loop: start=0, step=1, limit=1
              $region78: #{custom-call.70} parent=76 // loop_pre_header
                _
              $region79: #{custom-call.70} parent=76 // loop_header
                %s248 = sphi 0, %s252
                %p249 = scmp.ge.s32.totalorder %s248, 1
                %s253 = sphi %s221, %s221
                %s254 = sphi %s226, %s226
              $region80: #{custom-call.70} parent=76 // loop_header_branch
                %251 = sbr.rel (%p249) target = $region84
              $region81: #{custom-call.70} parent=76 // loop_body
                %v255 = vld [vmem:[%s253] sm:$0xff]
                %256 = vst [vmem:[%s254] sm:$0xff] %v255
              $region82: #{custom-call.70} parent=76 // loop_footer
                %s252 = sadd.s32 1, %s248
              $region83: #{custom-call.70} parent=76 // loop_footer_branch
                %247 = sbr.rel target = $region79
              $region84: #{custom-call.70} parent=76 // loop_exit
                _
            $region77: #{custom-call.70} parent=61 // pred_fallthru
              _
            // Predicated region
            $region85: #{custom-call.70} parent=61 // pred_check
              _
            $region86: #{custom-call.70} parent=61 // pred_check_branch
              %258 = sbr.rel target = $region88
            $region87: #{custom-call.70} parent=61 // pred_region
              _
            $region88: #{custom-call.70} parent=61 // pred_fallthru
              _
          $region62: #{custom-call.70} parent=57 // pred_fallthru
            _
          // Predicated region
          $region63: #{custom-call.70} parent=57 // pred_check
            _
          $region64: #{custom-call.70} parent=57 // pred_check_branch
            %232 = sbr.rel target = $region66
          $region65: #{custom-call.70} parent=57 // pred_region
            %s234 = ssub.s32 256, 1
            loop: start=0, step=1, limit=1
            $region67: #{custom-call.70} parent=65 // loop_pre_header
              _
            $region68: #{custom-call.70} parent=65 // loop_header
              %s236 = sphi 0, %s240
              %p237 = scmp.ge.s32.totalorder %s236, 1
              %s241 = sphi %s221, %s221
              %s242 = sphi %s226, %s226
            $region69: #{custom-call.70} parent=65 // loop_header_branch
              %239 = sbr.rel (%p237) target = $region73
            $region70: #{custom-call.70} parent=65 // loop_body
              %v243 = vld [vmem:[%s241] sm:%s234]
              %244 = vst [vmem:[%s242] sm:%s234] %v243
            $region71: #{custom-call.70} parent=65 // loop_footer
              %s240 = sadd.s32 1, %s236
            $region72: #{custom-call.70} parent=65 // loop_footer_branch
              %235 = sbr.rel target = $region68
            $region73: #{custom-call.70} parent=65 // loop_exit
              _
          $region66: #{custom-call.70} parent=57 // pred_fallthru
            _
        $region58: #{custom-call.70} parent=53 // pred_fallthru
          _
        %259 = vnop
      $region54: #{custom-call.70} parent=5 // pred_fallthru
        _
      %p260 = scmp.le.s32.totalorder 2, %s3
      // Predicated region
      $region89: #{custom-call.70} parent=5 // pred_check
        %p261 = pneg %p260
      $region90: #{custom-call.70} parent=5 // pred_check_branch
        %263 = sbr.rel (%p261) target = $region92
      $region91: #{custom-call.70} parent=5 // pred_region
        %s264 = ssub.s32 %s3, 2
        %s265 = sand.u32 %s9, 1
        %s266 = sand.u32 %s9, 1
        %s267 = smul.addr %s266, 8
        %s268 = scalar_lea.vmem [#allocation1], %s267
      $region92: #{custom-call.70} parent=5 // pred_fallthru
        _
    $region6: #{custom-call.70} parent=1 // loop_footer
      %s7 = sadd.s32 1, %s3
    $region7: #{custom-call.70} parent=1 // loop_footer_branch
      %2 = sbr.rel target = $region3
    $region8: #{custom-call.70} parent=1 // loop_exit
      _

// kernel: custom-call.34
$region0: #{custom-call.34}
  %s0 = inlined_call_operand.vmem [shape: f32[3,3,3], index: 0, kind: input, shape index: {}]
  %s1 = inlined_call_operand.vmem [shape: f32[3,3,3], index: 1, kind: input, shape index: {}]
  %s2 = inlined_call_operand.vmem [shape: f32[3,3,3], index: 2, kind: input, shape index: {}]
  %s3 = inlined_call_operand.vmem [shape: f32[3,3,3], index: 3, kind: input, shape index: {}]
  %s4 = inlined_call_operand.vmem [shape: f32[3,3], index: 4, kind: output, shape index: {0}]
  %s5 = inlined_call_operand.vmem [shape: f32[3,3], index: 5, kind: output, shape index: {1}]
  %s6 = inlined_call_operand.vmem [shape: f32[3,3,3], index: 6, kind: output, shape index: {2}]
  %s7 = inlined_call_operand.vmem [shape: f32[3,3,3], index: 7, kind: output, shape index: {3}]
  %s8 = inlined_call_operand.vmem [shape: f32[3,3,3], index: 8, kind: output, shape index: {4}]
  %s9 = inlined_call_operand.vmem [shape: f32[3,3,3], index: 9, kind: output, shape index: {5}]
  %10 = xla_tuple %s4, %s5, %s6, %s7, %s8, %s9
  $region1: #{custom-call.34} parent=0
    #allocation0 [shape = 'u8[4096]{0}', space=vmem, size = 0x1000, scoped, tag = 'operand span for operand 0']
    #allocation1 [shape = 'u8[4096]{0}', space=vmem, size = 0x1000, scoped, tag = 'packed  for operand 0']
    #allocation2 [shape = 'u8[4096]{0}', space=vmem, size = 0x1000, scoped, tag = 'operand span for operand 1']
    #allocation3 [shape = 'u8[4096]{0}', space=vmem, size = 0x1000, scoped, tag = 'packed  for operand 1']
    #allocation4 [shape = 'u8[4096]{0}', space=vmem, size = 0x1000, scoped, tag = 'operand span for operand 2']
    #allocation5 [shape = 'u8[4096]{0}', space=vmem, size = 0x1000, scoped, tag = 'packed  for operand 2']
    #allocation6 [shape = 'u8[4096]{0}', space=vmem, size = 0x1000, scoped, tag = 'operand span for operand 3']
    #allocation7 [shape = 'u8[4096]{0}', space=vmem, size = 0x1000, scoped, tag = 'packed  for operand 3']
    #allocation8 [shape = 'u8[4096]{0}', space=vmem, size = 0x1000, scoped, tag = 'operand span for operand 4']
    #allocation9 [shape = 'u8[4096]{0}', space=vmem, size = 0x1000, scoped, tag = 'packed  for operand 4']
    #allocation10 [shape = 'u8[4096]{0}', space=vmem, size = 0x1000, scoped, tag = 'operand span for operand 5']
    #allocation11 [shape = 'u8[4096]{0}', space=vmem, size = 0x1000, scoped, tag = 'packed  for operand 5']
    #allocation12 [shape = 'u8[4096]{0}', space=vmem, size = 0x1000, scoped, tag = 'operand span for operand 6']
    #allocation13 [shape = 'u8[4096]{0}', space=vmem, size = 0x1000, scoped, tag = 'packed  for operand 6']
    #allocation14 [shape = 'u8[4096]{0}', space=vmem, size = 0x1000, scoped, tag = 'operand span for operand 7']
    #allocation15 [shape = 'u8[4096]{0}', space=vmem, size = 0x1000, scoped, tag = 'packed  for operand 7']
    #allocation16 [shape = 'u8[4096]{0}', space=vmem, size = 0x1000, scoped, tag = 'operand span for operand 8']
    #allocation17 [shape = 'u8[4096]{0}', space=vmem, size = 0x1000, scoped, tag = 'packed  for operand 8']
    #allocation18 [shape = 'u8[4096]{0}', space=vmem, size = 0x1000, scoped, tag = 'operand span for operand 9']
    #allocation19 [shape = 'u8[4096]{0}', space=vmem, size = 0x1000, scoped, tag = 'packed  for operand 9']
    loop: start=0, step=1, limit=5
    $region2: #{custom-call.34} parent=1 // loop_pre_header
      _
    $region3: #{custom-call.34} parent=1 // loop_header
      %s12 = sphi 0, %s16
      %p13 = scmp.ge.s32.totalorder %s12, 5
      %s24 = sphi 0, %s26
      %s27 = sphi 0, %s24
      %s28 = sphi 0, %s27
      %s44 = sphi 0, %s28
      %s52 = sphi 0, %s54
      %s55 = sphi 0, %s52
      %s56 = sphi 0, %s55
      %s72 = sphi 0, %s56
    $region4: #{custom-call.34} parent=1 // loop_header_branch
      %15 = sbr.rel (%p13) target = $region8
    $region5: #{custom-call.34} parent=1 // loop_body
      %s17 = ssub.s32 %s12, 1
      %s18 = ssub.s32 %s12, 2
      %s19 = sadd.s32 %s12, 1
      %s20 = sshrl.u32 %s12, 3
      %s21 = sshrl.u32 %s19, 3
      %s22 = ssub.s32 %s20, %s21
      %p23 = scmp.eq.s32.totalorder %s22, 0
      %s25 = sadd.s32 %s24, 1
      %s26 = scalar_select %p23, %s24, %s25
      %p29 = pneg %p23
      %p30 = scmp.eq.s32.totalorder %s12, 2
      %p31 = por %p29, %p30
      %p32 = scmp.ne.s32.totalorder %s24, %s27
      %p33 = scmp.eq.s32.totalorder %s12, 0
      %p34 = por %p32, %p33
      %p35 = scmp.ne.s32.totalorder %s24, %s27
      %p36 = scmp.eq.s32.totalorder %s17, 2
      %p37 = por %p35, %p36
      %p38 = scmp.ne.s32.totalorder %s27, %s28
      %p39 = scmp.eq.s32.totalorder %s17, 0
      %p40 = por %p38, %p39
      %p41 = scmp.ne.s32.totalorder %s27, %s28
      %p42 = scmp.eq.s32.totalorder %s18, 2
      %p43 = por %p41, %p42
      %p45 = scmp.ne.s32.totalorder %s28, %s44
      %p46 = scmp.eq.s32.totalorder %s18, 0
      %p47 = por %p45, %p46
      %s48 = sshrl.u32 %s12, 3
      %s49 = sshrl.u32 %s19, 3
      %s50 = ssub.s32 %s48, %s49
      %p51 = scmp.eq.s32.totalorder %s50, 0
      %s53 = sadd.s32 %s52, 1
      %s54 = scalar_select %p51, %s52, %s53
      %p57 = pneg %p51
      %p58 = scmp.eq.s32.totalorder %s12, 2
      %p59 = por %p57, %p58
      %p60 = scmp.ne.s32.totalorder %s52, %s55
      %p61 = scmp.eq.s32.totalorder %s12, 0
      %p62 = por %p60, %p61
      %p63 = scmp.ne.s32.totalorder %s52, %s55
      %p64 = scmp.eq.s32.totalorder %s17, 2
      %p65 = por %p63, %p64
      %p66 = scmp.ne.s32.totalorder %s55, %s56
      %p67 = scmp.eq.s32.totalorder %s17, 0
      %p68 = por %p66, %p67
      %p69 = scmp.ne.s32.totalorder %s55, %s56
      %p70 = scmp.eq.s32.totalorder %s18, 2
      %p71 = por %p69, %p70
      %p73 = scmp.ne.s32.totalorder %s56, %s72
      %p74 = scmp.eq.s32.totalorder %s18, 0
      %p75 = por %p73, %p74
      %p76 = scmp.le.s32.totalorder 1, %s12
      %p77 = scmp.lt.s32.totalorder %s12, 4
      %p78 = pnand %p76, %p77
      %p79 = pneg %p78
      // Predicated region
      $region9: #{custom-call.34} parent=5 // pred_check
        _
      $region10: #{custom-call.34} parent=5 // pred_check_branch
        %81 = sbr.rel (%p78) target = $region12
      $region11: #{custom-call.34} parent=5 // pred_region
        %s82 = ssub.s32 %s12, 1
      $region12: #{custom-call.34} parent=5 // pred_fallthru
        _
      %p83 = scmp.lt.s32.totalorder %s12, 3
      // Predicated region
      $region13: #{custom-call.34} parent=5 // pred_check
        %p84 = pneg %p83
      $region14: #{custom-call.34} parent=5 // pred_check_branch
        %86 = sbr.rel (%p84) target = $region16
      $region15: #{custom-call.34} parent=5 // pred_region
        %s87 = sand.u32 %s12, 1
        %s88 = sand.u32 %s12, 1
        %s89 = smul.addr %s88, 4
        %s90 = scalar_lea.vmem [#allocation1], %s89
        %s91 = smul.addr %s12, 4
        %s92 = scalar_lea.vmem %s0, %s91
        // Predicated region
        $region17: #{custom-call.34} parent=15 // pred_check
          _
        $region18: #{custom-call.34} parent=15 // pred_check_branch
          %94 = sbr.rel (0) target = $region20
        $region19: #{custom-call.34} parent=15 // pred_region
          // Predicated region
          $region21: #{custom-call.34} parent=19 // pred_check
            _
          $region22: #{custom-call.34} parent=19 // pred_check_branch
            %96 = sbr.rel target = $region24
          $region23: #{custom-call.34} parent=19 // pred_region
            // Predicated region
            $region36: #{custom-call.34} parent=23 // pred_check
              _
            $region37: #{custom-call.34} parent=23 // pred_check_branch
              %112 = sbr.rel (0) target = $region39
            $region38: #{custom-call.34} parent=23 // pred_region
              %s114 = ssub.s32 16, 1
              loop: start=0, step=1, limit=1
              $region40: #{custom-call.34} parent=38 // loop_pre_header
                _
              $region41: #{custom-call.34} parent=38 // loop_header
                %s116 = sphi 0, %s120
                %p117 = scmp.ge.s32.totalorder %s116, 1
                %s121 = sphi %s92, %s92
                %s122 = sphi %s90, %s90
              $region42: #{custom-call.34} parent=38 // loop_header_branch
                %119 = sbr.rel (%p117) target = $region46
              $region43: #{custom-call.34} parent=38 // loop_body
                %v123 = vld [vmem:[%s121] sm:%s114]
                %124 = vst [vmem:[%s122] sm:%s114] %v123
              $region44: #{custom-call.34} parent=38 // loop_footer
                %s120 = sadd.s32 1, %s116
              $region45: #{custom-call.34} parent=38 // loop_footer_branch
                %115 = sbr.rel target = $region41
              $region46: #{custom-call.34} parent=38 // loop_exit
                _
            $region39: #{custom-call.34} parent=23 // pred_fallthru
              _
          $region24: #{custom-call.34} parent=19 // pred_fallthru
            _
          // Predicated region
          $region25: #{custom-call.34} parent=19 // pred_check
            _
          $region26: #{custom-call.34} parent=19 // pred_check_branch
            %98 = sbr.rel (0) target = $region28
          $region27: #{custom-call.34} parent=19 // pred_region
            %s100 = ssub.s32 16, 1
            loop: start=0, step=1, limit=1
            $region29: #{custom-call.34} parent=27 // loop_pre_header
              _
            $region30: #{custom-call.34} parent=27 // loop_header
              %s102 = sphi 0, %s106
              %p103 = scmp.ge.s32.totalorder %s102, 1
              %s107 = sphi %s92, %s92
              %s108 = sphi %s90, %s90
            $region31: #{custom-call.34} parent=27 // loop_header_branch
              %105 = sbr.rel (%p103) target = $region35
            $region32: #{custom-call.34} parent=27 // loop_body
              %v109 = vld [vmem:[%s107] sm:%s100]
              %110 = vst [vmem:[%s108] sm:%s100] %v109
            $region33: #{custom-call.34} parent=27 // loop_footer
              %s106 = sadd.s32 1, %s102
            $region34: #{custom-call.34} parent=27 // loop_footer_branch
              %101 = sbr.rel target = $region30
            $region35: #{custom-call.34} parent=27 // loop_exit
              _
          $region28: #{custom-call.34} parent=19 // pred_fallthru
            _
        $region20: #{custom-call.34} parent=15 // pred_fallthru
          _
        %125 = vnop
        %s126 = sand.u32 %s12, 1
        %s127 = sand.u32 %s12, 1
        %s128 = smul.addr %s127, 4
        %s129 = scalar_lea.vmem [#allocation3], %s128
        %s130 = smul.addr %s12, 4
        %s131 = scalar_lea.vmem %s1, %s130
        // Predicated region
        $region47: #{custom-call.34} parent=15 // pred_check
          _
        $region48: #{custom-call.34} parent=15 // pred_check_branch
          %133 = sbr.rel (0) target = $region50
        $region49: #{custom-call.34} parent=15 // pred_region
          // Predicated region
          $region51: #{custom-call.34} parent=49 // pred_check
            _
          $region52: #{custom-call.34} parent=49 // pred_check_branch
            %135 = sbr.rel target = $region54
          $region53: #{custom-call.34} parent=49 // pred_region
            // Predicated region
            $region66: #{custom-call.34} parent=53 // pred_check
              _
            $region67: #{custom-call.34} parent=53 // pred_check_branch
              %151 = sbr.rel (0) target = $region69
            $region68: #{custom-call.34} parent=53 // pred_region
              %s153 = ssub.s32 16, 1
              loop: start=0, step=1, limit=1
              $region70: #{custom-call.34} parent=68 // loop_pre_header
                _
              $region71: #{custom-call.34} parent=68 // loop_header
                %s155 = sphi 0, %s159
                %p156 = scmp.ge.s32.totalorder %s155, 1
                %s160 = sphi %s131, %s131
                %s161 = sphi %s129, %s129
              $region72: #{custom-call.34} parent=68 // loop_header_branch
                %158 = sbr.rel (%p156) target = $region76
              $region73: #{custom-call.34} parent=68 // loop_body
                %v162 = vld [vmem:[%s160] sm:%s153]
                %163 = vst [vmem:[%s161] sm:%s153] %v162
              $region74: #{custom-call.34} parent=68 // loop_footer
                %s159 = sadd.s32 1, %s155
              $region75: #{custom-call.34} parent=68 // loop_footer_branch
                %154 = sbr.rel target = $region71
              $region76: #{custom-call.34} parent=68 // loop_exit
                _
            $region69: #{custom-call.34} parent=53 // pred_fallthru
              _
          $region54: #{custom-call.34} parent=49 // pred_fallthru
            _
          // Predicated region
          $region55: #{custom-call.34} parent=49 // pred_check
            _
          $region56: #{custom-call.34} parent=49 // pred_check_branch
            %137 = sbr.rel (0) target = $region58
          $region57: #{custom-call.34} parent=49 // pred_region
            %s139 = ssub.s32 16, 1
            loop: start=0, step=1, limit=1
            $region59: #{custom-call.34} parent=57 // loop_pre_header
              _
            $region60: #{custom-call.34} parent=57 // loop_header
              %s141 = sphi 0, %s145
              %p142 = scmp.ge.s32.totalorder %s141, 1
              %s146 = sphi %s131, %s131
              %s147 = sphi %s129, %s129
            $region61: #{custom-call.34} parent=57 // loop_header_branch
              %144 = sbr.rel (%p142) target = $region65
            $region62: #{custom-call.34} parent=57 // loop_body
              %v148 = vld [vmem:[%s146] sm:%s139]
              %149 = vst [vmem:[%s147] sm:%s139] %v148
            $region63: #{custom-call.34} parent=57 // loop_footer
              %s145 = sadd.s32 1, %s141
            $region64: #{custom-call.34} parent=57 // loop_footer_branch
              %140 = sbr.rel target = $region60
            $region65: #{custom-call.34} parent=57 // loop_exit
              _
          $region58: #{custom-call.34} parent=49 // pred_fallthru
            _
        $region50: #{custom-call.34} parent=15 // pred_fallthru
          _
        %164 = vnop
        %s165 = sand.u32 %s12, 1
        %s166 = sand.u32 %s12, 1
        %s167 = smul.addr %s166, 4
        %s168 = scalar_lea.vmem [#allocation5], %s167
        %s169 = smul.addr %s12, 4
        %s170 = scalar_lea.vmem %s2, %s169
        // Predicated region
        $region77: #{custom-call.34} parent=15 // pred_check
          _
        $region78: #{custom-call.34} parent=15 // pred_check_branch
          %172 = sbr.rel (0) target = $region80
        $region79: #{custom-call.34} parent=15 // pred_region
          // Predicated region
          $region81: #{custom-call.34} parent=79 // pred_check
            _
          $region82: #{custom-call.34} parent=79 // pred_check_branch
            %174 = sbr.rel target = $region84
          $region83: #{custom-call.34} parent=79 // pred_region
            // Predicated region
            $region96: #{custom-call.34} parent=83 // pred_check
              _
            $region97: #{custom-call.34} parent=83 // pred_check_branch
              %190 = sbr.rel (0) target = $region99
            $region98: #{custom-call.34} parent=83 // pred_region
              %s192 = ssub.s32 16, 1
              loop: start=0, step=1, limit=1
              $region100: #{custom-call.34} parent=98 // loop_pre_header
                _
              $region101: #{custom-call.34} parent=98 // loop_header
                %s194 = sphi 0, %s198
                %p195 = scmp.ge.s32.totalorder %s194, 1
                %s199 = sphi %s170, %s170
                %s200 = sphi %s168, %s168
              $region102: #{custom-call.34} parent=98 // loop_header_branch
                %197 = sbr.rel (%p195) target = $region106
              $region103: #{custom-call.34} parent=98 // loop_body
                %v201 = vld [vmem:[%s199] sm:%s192]
                %202 = vst [vmem:[%s200] sm:%s192] %v201
              $region104: #{custom-call.34} parent=98 // loop_footer
                %s198 = sadd.s32 1, %s194
              $region105: #{custom-call.34} parent=98 // loop_footer_branch
                %193 = sbr.rel target = $region101
              $region106: #{custom-call.34} parent=98 // loop_exit
                _
            $region99: #{custom-call.34} parent=83 // pred_fallthru
              _
          $region84: #{custom-call.34} parent=79 // pred_fallthru
            _
          // Predicated region
          $region85: #{custom-call.34} parent=79 // pred_check
            _
          $region86: #{custom-call.34} parent=79 // pred_check_branch
            %176 = sbr.rel (0) target = $region88
          $region87: #{custom-call.34} parent=79 // pred_region
            %s178 = ssub.s32 16, 1
            loop: start=0, step=1, limit=1
            $region89: #{custom-call.34} parent=87 // loop_pre_header
              _
            $region90: #{custom-call.34} parent=87 // loop_header
              %s180 = sphi 0, %s184
              %p181 = scmp.ge.s32.totalorder %s180, 1
              %s185 = sphi %s170, %s170
              %s186 = sphi %s168, %s168
            $region91: #{custom-call.34} parent=87 // loop_header_branch
              %183 = sbr.rel (%p181) target = $region95
            $region92: #{custom-call.34} parent=87 // loop_body
              %v187 = vld [vmem:[%s185] sm:%s178]
              %188 = vst [vmem:[%s186] sm:%s178] %v187
            $region93: #{custom-call.34} parent=87 // loop_footer
              %s184 = sadd.s32 1, %s180
            $region94: #{custom-call.34} parent=87 // loop_footer_branch
              %179 = sbr.rel target = $region90
            $region95: #{custom-call.34} parent=87 // loop_exit
              _
          $region88: #{custom-call.34} parent=79 // pred_fallthru
            _
        $region80: #{custom-call.34} parent=15 // pred_fallthru
          _
        %203 = vnop
        %s204 = sand.u32 %s12, 1
        %s205 = sand.u32 %s12, 1
        %s206 = smul.addr %s205, 4
        %s207 = scalar_lea.vmem [#allocation7], %s206
        %s208 = smul.addr %s12, 4
        %s209 = scalar_lea.vmem %s3, %s208
        // Predicated region
        $region107: #{custom-call.34} parent=15 // pred_check
          _
        $region108: #{custom-call.34} parent=15 // pred_check_branch
          %211 = sbr.rel (0) target = $region110
        $region109: #{custom-call.34} parent=15 // pred_region
          // Predicated region
          $region111: #{custom-call.34} parent=109 // pred_check
            _
          $region112: #{custom-call.34} parent=109 // pred_check_branch
            %213 = sbr.rel target = $region114
          $region113: #{custom-call.34} parent=109 // pred_region
            // Predicated region
            $region126: #{custom-call.34} parent=113 // pred_check
              _
            $region127: #{custom-call.34} parent=113 // pred_check_branch
              %229 = sbr.rel (0) target = $region129
            $region128: #{custom-call.34} parent=113 // pred_region
              %s231 = ssub.s32 16, 1
              loop: start=0, step=1, limit=1
              $region130: #{custom-call.34} parent=128 // loop_pre_header
                _
              $region131: #{custom-call.34} parent=128 // loop_header
                %s233 = sphi 0, %s237
                %p234 = scmp.ge.s32.totalorder %s233, 1
                %s238 = sphi %s209, %s209
                %s239 = sphi %s207, %s207
              $region132: #{custom-call.34} parent=128 // loop_header_branch
                %236 = sbr.rel (%p234) target = $region136
              $region133: #{custom-call.34} parent=128 // loop_body
                %v240 = vld [vmem:[%s238] sm:%s231]
                %241 = vst [vmem:[%s239] sm:%s231] %v240
              $region134: #{custom-call.34} parent=128 // loop_footer
                %s237 = sadd.s32 1, %s233
              $region135: #{custom-call.34} parent=128 // loop_footer_branch
                %232 = sbr.rel target = $region131
              $region136: #{custom-call.34} parent=128 // loop_exit
                _
            $region129: #{custom-call.34} parent=113 // pred_fallthru
              _
          $region114: #{custom-call.34} parent=109 // pred_fallthru
            _
          // Predicated region
          $region115: #{custom-call.34} parent=109 // pred_check
            _
          $region116: #{custom-call.34} parent=109 // pred_check_branch
            %215 = sbr.rel (0) target = $region118
          $region117: #{custom-call.34} parent=109 // pred_region
            %s217 = ssub.s32 16, 1
            loop: start=0, step=1, limit=1
            $region119: #{custom-call.34} parent=117 // loop_pre_header
              _
            $region120: #{custom-call.34} parent=117 // loop_header
              %s219 = sphi 0, %s223
              %p220 = scmp.ge.s32.totalorder %s219, 1
              %s224 = sphi %s209, %s209
              %s225 = sphi %s207, %s207
            $region121: #{custom-call.34} parent=117 // loop_header_branch
              %222 = sbr.rel (%p220) target = $region125
            $region122: #{custom-call.34} parent=117 // loop_body
              %v226 = vld [vmem:[%s224] sm:%s217]
              %227 = vst [vmem:[%s225] sm:%s217] %v226
            $region123: #{custom-call.34} parent=117 // loop_footer
              %s223 = sadd.s32 1, %s219
            $region124: #{custom-call.34} parent=117 // loop_footer_branch
              %218 = sbr.rel target = $region120
            $region125: #{custom-call.34} parent=117 // loop_exit
              _
          $region118: #{custom-call.34} parent=109 // pred_fallthru
            _
        $region110: #{custom-call.34} parent=15 // pred_fallthru
          _
        %242 = vnop
      $region16: #{custom-call.34} parent=5 // pred_fallthru
        _
      %p243 = scmp.le.s32.totalorder 1, %s12
      %p244 = scmp.lt.s32.totalorder %s12, 4
      %p245 = pnand %p243, %p244
      %p246 = pneg %p245
      // Predicated region
      $region137: #{custom-call.34} parent=5 // pred_check
        _
      $region138: #{custom-call.34} parent=5 // pred_check_branch
        %248 = sbr.rel (%p245) target = $region140
      $region139: #{custom-call.34} parent=5 // pred_region
        #allocation20 [shape = 'f32[3,3]{1,0}', space=vmem, size = 0x1000, scoped, tag = 'a top-left matrix']
        #allocation21 [shape = 'f32[3,3]{1,0}', space=vmem, size = 0x1000, scoped, tag = 'a top-right matrix']
        #allocation22 [shape = 'f32[3,3]{1,0}', space=vmem, size = 0x1000, scoped, tag = 'a bottom-left matrix']
        #allocation23 [shape = 'f32[3,3]{1,0}', space=vmem, size = 0x1000, scoped, tag = 'a bottom-right matrix']
        %s249 = ssub.s32 %s12, 1
        %s250 = sand.u32 %s17, 1
        %s251 = sand.u32 %s17, 1
        %s252 = smul.addr %s251, 4
        %s253 = scalar_lea.vmem [#allocation1], %s252
        %s254 = sand.u32 %s17, 1
        %s255 = sand.u32 %s17, 1
        %s256 = smul.addr %s255, 4
        %s257 = scalar_lea.vmem [#allocation3], %s256
        %s258 = sand.u32 %s17, 1
        %s259 = sand.u32 %s17, 1
        %s260 = smul.addr %s259, 4
        %s261 = scalar_lea.vmem [#allocation5], %s260
        %s262 = sand.u32 %s17, 1
        %s263 = sand.u32 %s17, 1
        %s264 = smul.addr %s263, 4
        %s265 = scalar_lea.vmem [#allocation7], %s264
        %s266 = sand.u32 %s17, 1
        %s267 = sand.u32 %s17, 1
        %s268 = smul.addr %s267, 4
        %s269 = scalar_lea.vmem [#allocation1], %s268
        %s270 = sand.u32 %s17, 1
        %s271 = sand.u32 %s17, 1
        %s272 = smul.addr %s271, 4
        %s273 = scalar_lea.vmem [#allocation3], %s272
        %s274 = sand.u32 %s17, 1
        %s275 = sand.u32 %s17, 1
        %s276 = smul.addr %s275, 4
        %s277 = scalar_lea.vmem [#allocation5], %s276
        %s278 = sand.u32 %s17, 1
        %s279 = sand.u32 %s17, 1
        %s280 = smul.addr %s279, 4
        %s281 = scalar_lea.vmem [#allocation7], %s280
        %p282 = pneg %p40
        %p283 = pneg %p37
        %s284 = sand.u32 %s27, 1
        %s285 = sand.u32 %s27, 1
        %s286 = smul.addr %s285, 4
        %s287 = scalar_lea.vmem [#allocation9], %s286
        %p288 = pneg %p68
        %p289 = pneg %p65
        %s290 = sand.u32 %s55, 1
        %s291 = sand.u32 %s55, 1
        %s292 = smul.addr %s291, 4
        %s293 = scalar_lea.vmem [#allocation11], %s292
        %s294 = sand.u32 %s17, 1
        %s295 = sand.u32 %s17, 1
        %s296 = smul.addr %s295, 4
        %s297 = scalar_lea.vmem [#allocation13], %s296
        %s298 = sand.u32 %s17, 1
        %s299 = sand.u32 %s17, 1
        %s300 = smul.addr %s299, 4
        %s301 = scalar_lea.vmem [#allocation15], %s300
        %s302 = sand.u32 %s17, 1
        %s303 = sand.u32 %s17, 1
        %s304 = smul.addr %s303, 4
        %s305 = scalar_lea.vmem [#allocation17], %s304
        %s306 = sand.u32 %s17, 1
        %s307 = sand.u32 %s17, 1
        %s308 = smul.addr %s307, 4
        %s309 = scalar_lea.vmem [#allocation19], %s308
        %s311 = ssub.s32 16, 1
        %v312 = vld [vmem:[%s269] sm:%s311]
        %313 = vst [vmem:[#allocation0] sm:%s311] %v312
        %s315 = ssub.s32 16, 1
        %v316 = vld [vmem:[%s273] sm:%s315]
        %317 = vst [vmem:[#allocation2] sm:%s315] %v316
        %s319 = ssub.s32 16, 1
        %v320 = vld [vmem:[%s277] sm:%s319]
        %321 = vst [vmem:[#allocation4] sm:%s319] %v320
        %s323 = ssub.s32 16, 1
        %v324 = vld [vmem:[%s281] sm:%s323]
        %325 = vst [vmem:[#allocation6] sm:%s323] %v324
        %s326 = sshrl.u32 %s17, 3
        %s327 = sshrl.u32 %s17, 3
        %s328 = smov [#allocation20]
        %v329 = vld [vmem:[#allocation0] sm:$0xff]
        %330 = vst [vmem:[%s328] sm:$0xff] %v329
        %s331 = smov [#allocation21]
        %v332 = vld [vmem:[#allocation2] sm:$0xff]
        %333 = vst [vmem:[%s331] sm:$0xff] %v332
        %s334 = smov [#allocation22]
        %v335 = vld [vmem:[#allocation4] sm:$0xff]
        %336 = vst [vmem:[%s334] sm:$0xff] %v335
        %s337 = smov [#allocation23]
        %v338 = vld [vmem:[#allocation6] sm:$0xff]
        %339 = vst [vmem:[%s337] sm:$0xff] %v338
        %340 = vst [vmem:[#allocation12] sm:$0xff] 0.0
        %341 = vst [vmem:[#allocation14] sm:$0xff] 0.0
        %342 = vst [vmem:[#allocation16] sm:$0xff] 0.0
        %343 = vst [vmem:[#allocation18] sm:$0xff] 0.0
        %s344 = smov [#allocation12]
        %v345 = vlaneseq
        %v346 = vand.u32 %v345, 127
        %v347 = vmov %v346
        %v348 = vlaneseq
        %v349 = vshrl.u32 %v348, 7
        %v350 = vmov %v349
        %v351 = vld [vmem:[%s344] sm:$0x7]
        %vm354 = vcmp.eq.s32.totalorder %v350, %v347
        %v355 = vsel %vm354, 1.0, %v351
        %356 = vst [vmem:[%s344] sm:$0x7] %v355
        %s357 = smov [#allocation18]
        %v358 = vlaneseq
        %v359 = vand.u32 %v358, 127
        %v360 = vmov %v359
        %v361 = vlaneseq
        %v362 = vshrl.u32 %v361, 7
        %v363 = vmov %v362
        %v364 = vld [vmem:[%s357] sm:$0x7]
        %vm367 = vcmp.eq.s32.totalorder %v363, %v360
        %v368 = vsel %vm367, 1.0, %v364
        %369 = vst [vmem:[%s357] sm:$0x7] %v368
        // While loop
        $region141: #{custom-call.34} parent=139 // loop_pre_header
          _
        $region142: #{custom-call.34} parent=139 // loop_header
          %s371 = sphi 0, %s953
          %v372 = vlaneseq
          %v373 = vand.u32 %v372, 127
          %v374 = vmov %v373
          %v375 = vlaneseq
          %v376 = vshrl.u32 %v375, 7
          %v377 = vmov %v376
          %s378 = smov [#allocation20]
          %v379 = vlaneseq
          %v380 = vand.u32 %v379, 127
          %vm381 = vcmp.ge.s32.totalorder %v380, 0
          %vm382 = vcmp.lt.s32.totalorder %v380, 3
          %vm383 = vmand %vm381, %vm382
          %v384 = vld [vmem:[%s378] sm:$0x7]
          %v385 = vsel %vm383, %v384, 0.0
          %v386 = vmul.f32 %v385, %v385
          %vm389 = vcmp.eq.s32.totalorder %v377, %v374
          %v390 = vsel %vm389, 0.0, %v386
          %v391 = vlaneseq
          %v392 = vand.u32 %v391, 127
          %v393 = vmov %v392
          %v394 = vlaneseq
          %v395 = vshrl.u32 %v394, 7
          %v396 = vmov %v395
          %s397 = smov [#allocation21]
          %v398 = vlaneseq
          %v399 = vand.u32 %v398, 127
          %vm400 = vcmp.ge.s32.totalorder %v399, 0
          %vm401 = vcmp.lt.s32.totalorder %v399, 3
          %vm402 = vmand %vm400, %vm401
          %v403 = vld [vmem:[%s397] sm:$0x7]
          %v404 = vsel %vm402, %v403, 0.0
          %v405 = vmul.f32 %v404, %v404
          %v406 = vadd.f32 %v390, %v405
          %v407 = vadd.f32 %v386, %v405
          %v408 = vlaneseq
          %v409 = vand.u32 %v408, 127
          %v410 = vmov %v409
          %v411 = vlaneseq
          %v412 = vshrl.u32 %v411, 7
          %v413 = vmov %v412
          %s414 = smov [#allocation22]
          %v415 = vlaneseq
          %v416 = vand.u32 %v415, 127
          %vm417 = vcmp.ge.s32.totalorder %v416, 0
          %vm418 = vcmp.lt.s32.totalorder %v416, 3
          %vm419 = vmand %vm417, %vm418
          %v420 = vld [vmem:[%s414] sm:$0x7]
          %v421 = vsel %vm419, %v420, 0.0
          %v422 = vmul.f32 %v421, %v421
          %v423 = vadd.f32 %v406, %v422
          %v424 = vadd.f32 %v407, %v422
          %v425 = vlaneseq
          %v426 = vand.u32 %v425, 127
          %v427 = vmov %v426
          %v428 = vlaneseq
          %v429 = vshrl.u32 %v428, 7
          %v430 = vmov %v429
          %s431 = smov [#allocation23]
          %v432 = vlaneseq
          %v433 = vand.u32 %v432, 127
          %vm434 = vcmp.ge.s32.totalorder %v433, 0
          %vm435 = vcmp.lt.s32.totalorder %v433, 3
          %vm436 = vmand %vm434, %vm435
          %v437 = vld [vmem:[%s431] sm:$0x7]
          %v438 = vsel %vm436, %v437, 0.0
          %v439 = vmul.f32 %v438, %v438
          %vm442 = vcmp.eq.s32.totalorder %v430, %v427
          %v443 = vsel %vm442, 0.0, %v439
          %v444 = vadd.f32 %v423, %v443
          %v445 = vadd.f32 %v424, %v439
          %446 = vadd.xlane.f32.xlu0 %v445
          %v447 = vpop.xlane.xlu0 %446
          %v448 = vrot.slane %v447, 4
          %v449 = vadd.f32 %v447, %v448
          %v450 = vrot.slane %v449, 2
          %v451 = vadd.f32 %v449, %v450
          %v452 = vrot.slane %v451, 1
          %v453 = vadd.f32 %v451, %v452
          %454 = vadd.xlane.f32.xlu0 %v444
          %v455 = vpop.xlane.xlu0 %454
          %v456 = vrot.slane %v455, 4
          %v457 = vadd.f32 %v455, %v456
          %v458 = vrot.slane %v457, 2
          %v459 = vadd.f32 %v457, %v458
          %v460 = vrot.slane %v459, 1
          %v461 = vadd.f32 %v459, %v460
          %s462 = vtos %v461
          %s463 = vtos %v453
          %s464 = smul.f32 1e-10, %s463
          %p465 = scmp.le.f32.partialorder %s462, %s464
          %p466 = scmp.ge.s32.totalorder %s371, 15
          %p467 = por %p465, %p466
        $region143: #{custom-call.34} parent=139 // loop_header_branch
          %955 = sbr.rel (%p467) target = $region147
        $region144: #{custom-call.34} parent=139 // loop_body
          loop: start=0, step=1, limit=5
          $region148: #{custom-call.34} parent=144 // loop_pre_header
            _
          $region149: #{custom-call.34} parent=144 // loop_header
            %s469 = sphi 0, %s473
            %p470 = scmp.ge.s32.totalorder %s469, 5
          $region150: #{custom-call.34} parent=144 // loop_header_branch
            %472 = sbr.rel (%p470) target = $region154
          $region151: #{custom-call.34} parent=144 // loop_body
            #allocation24 [shape = 'f32[1024]{0}', space=vmem, size = 0x1000, scoped, tag = 'a_tl_diag vmem']
            #allocation25 [shape = 'f32[1024]{0}', space=vmem, size = 0x1000, scoped, tag = 'a_tr_diag vmem']
            #allocation26 [shape = 'f32[1024]{0}', space=vmem, size = 0x1000, scoped, tag = 'a_br_diag vmem']
            #allocation27 [shape = 'f32[1024]{0}', space=vmem, size = 0x1000, scoped, tag = 'rt1 vmem']
            #allocation28 [shape = 'f32[1024]{0}', space=vmem, size = 0x1000, scoped, tag = 'rt2 vmem']
            #allocation29 [shape = 'f32[1024]{0}', space=vmem, size = 0x1000, scoped, tag = 'c vmem']
            #allocation30 [shape = 'f32[1024]{0}', space=vmem, size = 0x1000, scoped, tag = 's vmem']
            #allocation31 [shape = 'f32[4096]{0}', space=vmem, size = 0x4000, scoped, tag = 'c broadcast']
            #allocation32 [shape = 'f32[4096]{0}', space=vmem, size = 0x4000, scoped, tag = 's broadcast']
            %s474 = smov [#allocation20]
            %s475 = smov [#allocation24]
            %v476 = vlaneseq
            %v477 = vand.u32 %v476, 127
            %v478 = vmov %v477
            %v479 = vlaneseq
            %v480 = vshrl.u32 %v479, 7
            %v481 = vmov %v480
            %v482 = vld [vmem:[%s474] sm:$0x7]
            %vm485 = vcmp.eq.s32.totalorder %v481, %v478
            %v486 = vsel %vm485, %v482, 0.0
            %v487 = vrot.slane %v486, 4
            %v488 = vadd.f32 %v486, %v487
            %v489 = vrot.slane %v488, 2
            %v490 = vadd.f32 %v488, %v489
            %v491 = vrot.slane %v490, 1
            %v492 = vadd.f32 %v490, %v491
            %493 = vst [vmem:[%s475] sm:$0x1] %v492
            %s494 = smov [#allocation21]
            %s495 = smov [#allocation25]
            %v496 = vlaneseq
            %v497 = vand.u32 %v496, 127
            %v498 = vmov %v497
            %v499 = vlaneseq
            %v500 = vshrl.u32 %v499, 7
            %v501 = vmov %v500
            %v502 = vld [vmem:[%s494] sm:$0x7]
            %vm505 = vcmp.eq.s32.totalorder %v501, %v498
            %v506 = vsel %vm505, %v502, 0.0
            %v507 = vrot.slane %v506, 4
            %v508 = vadd.f32 %v506, %v507
            %v509 = vrot.slane %v508, 2
            %v510 = vadd.f32 %v508, %v509
            %v511 = vrot.slane %v510, 1
            %v512 = vadd.f32 %v510, %v511
            %513 = vst [vmem:[%s495] sm:$0x1] %v512
            %s514 = smov [#allocation23]
            %s515 = smov [#allocation26]
            %v516 = vlaneseq
            %v517 = vand.u32 %v516, 127
            %v518 = vmov %v517
            %v519 = vlaneseq
            %v520 = vshrl.u32 %v519, 7
            %v521 = vmov %v520
            %v522 = vld [vmem:[%s514] sm:$0x7]
            %vm525 = vcmp.eq.s32.totalorder %v521, %v518
            %v526 = vsel %vm525, %v522, 0.0
            %v527 = vrot.slane %v526, 4
            %v528 = vadd.f32 %v526, %v527
            %v529 = vrot.slane %v528, 2
            %v530 = vadd.f32 %v528, %v529
            %v531 = vrot.slane %v530, 1
            %v532 = vadd.f32 %v530, %v531
            %533 = vst [vmem:[%s515] sm:$0x1] %v532
            %s534 = smov [#allocation29]
            %s535 = smov [#allocation30]
            %s536 = smov [#allocation24]
            %v537 = vld [vmem:[%s536] sm:$0xff]
            %s538 = smov [#allocation25]
            %v539 = vld [vmem:[%s538] sm:$0xff]
            %s540 = smov [#allocation26]
            %v541 = vld [vmem:[%s540] sm:$0xff]
            %v542 = vsub.f32 %v541, %v537
            %v543 = vmul.f32 2.0, %v539
            %v544 = vrcp.pop %v543
            %v545 = vmul.f32 %v543, %v544
            %v546 = vsub.f32 1.0, %v545
            %v547 = vmul.f32 %v544, %v546
            %v548 = vadd.f32 %v544, %v547
            %vm549 = vweird.f32 %v543
            %vm550 = vweird.f32 %v544
            %vm551 = vmor %vm549, %vm550
            %v552 = vsel %vm551, %v544, %v548
            %v553 = vand.u32 2147483647, %v543
            %vm554 = vcmp.eq.f32.partialorder %v553, 8.507059e+37
            %v555 = vand.u32 %v543, 2147483648
            %v556 = vor.u32 1.1754944e-38, %v555
            %v557 = vsel %vm554, %v556, %v552
            %v558 = vmul.f32 %v542, %v557
            %vm559 = vcmp.ge.f32.partialorder %v558, 0.0
            %v560 = vmul.f32 %v558, %v558
            %v561 = vadd.f32 1.0, %v560
            %v562 = vrsqrt.pop %v561
            %v563 = vmul.f32 %v562, %v561
            %v564 = vmul.f32 %v563, %v562
            %v565 = vmul.f32 0.5, %v564
            %v566 = vsub.f32 1.5, %v565
            %v567 = vmul.f32 %v562, %v566
            %v568 = vmul.f32 %v561, %v567
            %vm569 = vcmp.eq.f32.partialorder %v561, inf
            %v570 = vsel %vm569, %v561, %v568
            %vm571 = vcmp.eq.f32.partialorder %v561, 0.0
            %v572 = vand.u32 %v561, 2147483648
            %v573 = vsel %vm571, %v572, %v570
            %v574 = vxor.u32 %v573, 2147483648
            %v575 = vsel %vm559, %v573, %v574
            %v576 = vadd.f32 %v558, %v575
            %v577 = vrcp.pop %v576
            %v578 = vmul.f32 %v576, %v577
            %v579 = vsub.f32 1.0, %v578
            %v580 = vmul.f32 %v577, %v579
            %v581 = vadd.f32 %v577, %v580
            %vm582 = vweird.f32 %v576
            %vm583 = vweird.f32 %v577
            %vm584 = vmor %vm582, %vm583
            %v585 = vsel %vm584, %v577, %v581
            %v586 = vand.u32 2147483647, %v576
            %vm587 = vcmp.eq.f32.partialorder %v586, 8.507059e+37
            %v588 = vand.u32 %v576, 2147483648
            %v589 = vor.u32 1.1754944e-38, %v588
            %v590 = vsel %vm587, %v589, %v585
            %v591 = vand.u32 2147483647, %v537
            %v592 = vand.u32 2147483647, %v539
            %v593 = vand.u32 2147483647, %v541
            %v594 = vmin.f32 %v591, %v593
            %v595 = vmul.f32 1.1920929e-08, %v594
            %vm596 = vcmp.le.f32.partialorder %v592, %v595
            %v597 = vsel %vm596, 0.0, %v590
            %v598 = vmul.f32 %v597, %v597
            %v599 = vadd.f32 1.0, %v598
            %v600 = vrsqrt.pop %v599
            %v601 = vmul.f32 %v600, %v599
            %v602 = vmul.f32 %v601, %v600
            %v603 = vmul.f32 0.5, %v602
            %v604 = vsub.f32 1.5, %v603
            %v605 = vmul.f32 %v600, %v604
            %vm606 = vweird.f32 %v599
            %vm607 = vweird.f32 %v600
            %vm608 = vmor %vm606, %vm607
            %v609 = vsel %vm608, %v600, %v605
            %v610 = vmul.f32 %v597, %v609
            %v611 = vmul.f32 %v597, %v539
            %v612 = vsub.f32 %v537, %v611
            %v613 = vmul.f32 %v597, %v539
            %v614 = vadd.f32 %v541, %v613
            %s615 = smov [#allocation27]
            %616 = vst [vmem:[%s615] sm:$0xff] %v612
            %s617 = smov [#allocation28]
            %618 = vst [vmem:[%s617] sm:$0xff] %v614
            %s619 = smov %s534
            %620 = vst [vmem:[%s619] sm:$0xff] %v609
            %s621 = smov %s535
            %622 = vst [vmem:[%s621] sm:$0xff] %v610
            %s623 = smov [#allocation29]
            %v624 = vld [vmem:[%s623] ss:$0 sm:$0xff]
            %v625 = vlaneseq
            %v626 = vand.u32 %v625, 127
            %v627 = vmov %v626
            %v628 = vlaneseq
            %v629 = vshrl.u32 %v628, 7
            %v630 = vmov %v629
            %vm632 = vcmp.eq.s32.totalorder %v630, %v627
            %v633 = vsel %vm632, %v624, 0.0
            %634 = vadd.xlane.f32.xlu0 %v633
            %v635 = vpop.xlane.xlu0 %634
            %s636 = smov [#allocation31]
            %637 = vst [vmem:[%s636] sm:$0xff] %v635
            %s638 = smov [#allocation30]
            %v639 = vld [vmem:[%s638] ss:$0 sm:$0xff]
            %v640 = vlaneseq
            %v641 = vand.u32 %v640, 127
            %v642 = vmov %v641
            %v643 = vlaneseq
            %v644 = vshrl.u32 %v643, 7
            %v645 = vmov %v644
            %vm647 = vcmp.eq.s32.totalorder %v645, %v642
            %v648 = vsel %vm647, %v639, 0.0
            %649 = vadd.xlane.f32.xlu0 %v648
            %v650 = vpop.xlane.xlu0 %649
            %s651 = smov [#allocation32]
            %652 = vst [vmem:[%s651] sm:$0xff] %v650
            %s653 = smov [#allocation31]
            %v654 = vld [vmem:[%s653] sm:$0xff]
            %s655 = smov [#allocation32]
            %v656 = vld [vmem:[%s655] sm:$0xff]
            %s657 = smov [#allocation20]
            %s658 = smov [#allocation21]
            %s659 = smov [#allocation22]
            %s660 = smov [#allocation23]
            %v661 = vld [vmem:[%s657] sm:$0x7]
            %v662 = vld [vmem:[%s658] sm:$0x7]
            %v663 = vld [vmem:[%s659] sm:$0x7]
            %v664 = vld [vmem:[%s660] sm:$0x7]
            %v665 = vmul.f32 %v654, %v661
            %v666 = vmul.f32 %v656, %v663
            %v667 = vsub.f32 %v665, %v666
            %v668 = vmul.f32 %v654, %v662
            %v669 = vmul.f32 %v656, %v664
            %v670 = vsub.f32 %v668, %v669
            %v671 = vmul.f32 %v656, %v661
            %v672 = vmul.f32 %v654, %v663
            %v673 = vadd.f32 %v671, %v672
            %v674 = vmul.f32 %v656, %v662
            %v675 = vmul.f32 %v654, %v664
            %v676 = vadd.f32 %v674, %v675
            %677 = vst [vmem:[%s657] sm:$0x7] %v667
            %678 = vst [vmem:[%s658] sm:$0x7] %v670
            %679 = vst [vmem:[%s659] sm:$0x7] %v673
            %680 = vst [vmem:[%s660] sm:$0x7] %v676
            %s681 = smov [#allocation29]
            %v682 = vld [vmem:[%s681] ss:$0 sm:$0xff]
            %s683 = smov [#allocation30]
            %v684 = vld [vmem:[%s683] ss:$0 sm:$0xff]
            %s685 = smov [#allocation20]
            %s686 = smov [#allocation21]
            %s687 = smov [#allocation22]
            %s688 = smov [#allocation23]
            %v689 = vld [vmem:[%s685] sm:$0x7]
            %v690 = vld [vmem:[%s686] sm:$0x7]
            %v691 = vld [vmem:[%s687] sm:$0x7]
            %v692 = vld [vmem:[%s688] sm:$0x7]
            %v693 = vmul.f32 %v682, %v689
            %v694 = vmul.f32 %v684, %v690
            %v695 = vsub.f32 %v693, %v694
            %v696 = vmul.f32 %v684, %v689
            %v697 = vmul.f32 %v682, %v690
            %v698 = vadd.f32 %v696, %v697
            %v699 = vmul.f32 %v682, %v691
            %v700 = vmul.f32 %v684, %v692
            %v701 = vsub.f32 %v699, %v700
            %v702 = vmul.f32 %v684, %v691
            %v703 = vmul.f32 %v682, %v692
            %v704 = vadd.f32 %v702, %v703
            %705 = vst [vmem:[%s685] sm:$0x7] %v695
            %706 = vst [vmem:[%s686] sm:$0x7] %v698
            %707 = vst [vmem:[%s687] sm:$0x7] %v701
            %708 = vst [vmem:[%s688] sm:$0x7] %v704
            %s709 = smov [#allocation20]
            %s710 = smov [#allocation27]
            %v711 = vlaneseq
            %v712 = vand.u32 %v711, 127
            %v713 = vmov %v712
            %v714 = vlaneseq
            %v715 = vshrl.u32 %v714, 7
            %v716 = vmov %v715
            %v717 = vld [vmem:[%s710] ss:$0 sm:$0xff]
            %v718 = vld [vmem:[%s709] sm:$0x7]
            %vm721 = vcmp.eq.s32.totalorder %v716, %v713
            %v722 = vsel %vm721, %v717, %v718
            %723 = vst [vmem:[%s709] sm:$0x7] %v722
            %s724 = smov [#allocation21]
            %v725 = vlaneseq
            %v726 = vand.u32 %v725, 127
            %v727 = vmov %v726
            %v728 = vlaneseq
            %v729 = vshrl.u32 %v728, 7
            %v730 = vmov %v729
            %v731 = vld [vmem:[%s724] sm:$0x7]
            %vm734 = vcmp.eq.s32.totalorder %v730, %v727
            %v735 = vsel %vm734, 0.0, %v731
            %736 = vst [vmem:[%s724] sm:$0x7] %v735
            %s737 = smov [#allocation22]
            %v738 = vlaneseq
            %v739 = vand.u32 %v738, 127
            %v740 = vmov %v739
            %v741 = vlaneseq
            %v742 = vshrl.u32 %v741, 7
            %v743 = vmov %v742
            %v744 = vld [vmem:[%s737] sm:$0x7]
            %vm747 = vcmp.eq.s32.totalorder %v743, %v740
            %v748 = vsel %vm747, 0.0, %v744
            %749 = vst [vmem:[%s737] sm:$0x7] %v748
            %s750 = smov [#allocation23]
            %s751 = smov [#allocation28]
            %v752 = vlaneseq
            %v753 = vand.u32 %v752, 127
            %v754 = vmov %v753
            %v755 = vlaneseq
            %v756 = vshrl.u32 %v755, 7
            %v757 = vmov %v756
            %v758 = vld [vmem:[%s751] ss:$0 sm:$0xff]
            %v759 = vld [vmem:[%s750] sm:$0x7]
            %vm762 = vcmp.eq.s32.totalorder %v757, %v754
            %v763 = vsel %vm762, %v758, %v759
            %764 = vst [vmem:[%s750] sm:$0x7] %v763
            %s765 = smov [#allocation20]
            %s766 = smov [#allocation21]
            %v767 = vld [vmem:[%s766] sm:$0x7]
            %768 = vrot.lane.b32.xlu0 %v767, 1
            %v769 = vpop.permute.xlu0 %768
            %v770 = vld [vmem:[%s765] sm:$0x7]
            %v771 = vld [vmem:[%s765] sm:$0x7]
            %772 = vrot.lane.b32.xlu0 %v771, 1
            %v773 = vpop.permute.xlu0 %772
            %v774 = vlaneseq
            %v775 = vand.u32 %v774, 127
            %vm776 = vcmp.eq.s32.totalorder %v775, 0
            %v777 = vsel %vm776, %v771, %v773
            %v778 = vlaneseq
            %v779 = vand.u32 %v778, 127
            %vm780 = vcmp.eq.s32.totalorder %v779, 1
            %v781 = vsel %vm780, %v769, %v777
            %v782 = vlaneseq
            %v783 = vand.u32 %v782, 127
            %vm784 = vcmp.ge.s32.totalorder %v783, 0
            %vm785 = vcmp.lt.s32.totalorder %v783, 3
            %vm786 = vmand %vm784, %vm785
            %v787 = vsel %vm786, %v781, 0.0
            %v788 = vld [vmem:[%s766] sm:$0x7]
            %789 = vrot.lane.b32.xlu0 %v788, 127
            %v790 = vpop.permute.xlu0 %789
            %v791 = vlaneseq
            %v792 = vand.u32 %v791, 127
            %vm793 = vcmp.eq.s32.totalorder %v792, 2
            %v794 = vsel %vm793, %v770, %v790
            %795 = vst [vmem:[%s765] sm:$0x7] %v787
            %796 = vst [vmem:[%s766] sm:$0x7] %v794
            %s797 = smov [#allocation22]
            %s798 = smov [#allocation23]
            %v799 = vld [vmem:[%s798] sm:$0x7]
            %800 = vrot.lane.b32.xlu0 %v799, 1
            %v801 = vpop.permute.xlu0 %800
            %v802 = vld [vmem:[%s797] sm:$0x7]
            %v803 = vld [vmem:[%s797] sm:$0x7]
            %804 = vrot.lane.b32.xlu0 %v803, 1
            %v805 = vpop.permute.xlu0 %804
            %v806 = vlaneseq
            %v807 = vand.u32 %v806, 127
            %vm808 = vcmp.eq.s32.totalorder %v807, 0
            %v809 = vsel %vm808, %v803, %v805
            %v810 = vlaneseq
            %v811 = vand.u32 %v810, 127
            %vm812 = vcmp.eq.s32.totalorder %v811, 1
            %v813 = vsel %vm812, %v801, %v809
            %v814 = vlaneseq
            %v815 = vand.u32 %v814, 127
            %vm816 = vcmp.ge.s32.totalorder %v815, 0
            %vm817 = vcmp.lt.s32.totalorder %v815, 3
            %vm818 = vmand %vm816, %vm817
            %v819 = vsel %vm818, %v813, 0.0
            %v820 = vld [vmem:[%s798] sm:$0x7]
            %821 = vrot.lane.b32.xlu0 %v820, 127
            %v822 = vpop.permute.xlu0 %821
            %v823 = vlaneseq
            %v824 = vand.u32 %v823, 127
            %vm825 = vcmp.eq.s32.totalorder %v824, 2
            %v826 = vsel %vm825, %v802, %v822
            %827 = vst [vmem:[%s797] sm:$0x7] %v819
            %828 = vst [vmem:[%s798] sm:$0x7] %v826
            %s829 = smov [#allocation20]
            %s830 = smov [#allocation22]
            %v831 = vld [vmem:[%s829] ss:$0 sm:$0xff]
            %s833 = scalar_lea.vmem %s829, 4294967295
            %v834 = vld [vmem:[%s833] sm:$0x6]
            %v835 = vlaneseq
            %v836 = vshrl.u32 %v835, 7
            %vm837 = vcmp.eq.s32.totalorder %v836, 0
            %v838 = vsel %vm837, %v831, %v834
            %s839 = scalar_lea.vmem %s829, 2
            %v840 = vld [vmem:[%s839] ss:$0 sm:$0xff]
            %841 = vst [vmem:[%s829] sm:$0x7] %v838
            %v842 = vld [vmem:[%s830] ss:$0 sm:$0xff]
            %s843 = scalar_lea.vmem %s829, 1
            %844 = vst [vmem:[%s843] sm:$0x1] %v842
            %s845 = scalar_lea.vmem %s830, 1
            %v846 = vld [vmem:[%s845] sm:$0x3]
            %v847 = vlaneseq
            %v848 = vshrl.u32 %v847, 7
            %vm849 = vcmp.eq.s32.totalorder %v848, 2
            %v850 = vsel %vm849, %v840, %v846
            %v851 = vld [vmem:[%s830] ss:$0 sm:$0xff]
            %852 = vst [vmem:[%s830] sm:$0x7] %v850
            %s853 = smov [#allocation21]
            %s854 = smov [#allocation23]
            %v855 = vld [vmem:[%s853] ss:$0 sm:$0xff]
            %s857 = scalar_lea.vmem %s853, 4294967295
            %v858 = vld [vmem:[%s857] sm:$0x6]
            %v859 = vlaneseq
            %v860 = vshrl.u32 %v859, 7
            %vm861 = vcmp.eq.s32.totalorder %v860, 0
            %v862 = vsel %vm861, %v855, %v858
            %s863 = scalar_lea.vmem %s853, 2
            %v864 = vld [vmem:[%s863] ss:$0 sm:$0xff]
            %865 = vst [vmem:[%s853] sm:$0x7] %v862
            %v866 = vld [vmem:[%s854] ss:$0 sm:$0xff]
            %s867 = scalar_lea.vmem %s853, 1
            %868 = vst [vmem:[%s867] sm:$0x1] %v866
            %s869 = scalar_lea.vmem %s854, 1
            %v870 = vld [vmem:[%s869] sm:$0x3]
            %v871 = vlaneseq
            %v872 = vshrl.u32 %v871, 7
            %vm873 = vcmp.eq.s32.totalorder %v872, 2
            %v874 = vsel %vm873, %v864, %v870
            %v875 = vld [vmem:[%s854] ss:$0 sm:$0xff]
            %876 = vst [vmem:[%s854] sm:$0x7] %v874
            %s877 = smov [#allocation31]
            %v878 = vld [vmem:[%s877] sm:$0xff]
            %s879 = smov [#allocation32]
            %v880 = vld [vmem:[%s879] sm:$0xff]
            %s881 = smov [#allocation12]
            %s882 = smov [#allocation14]
            %s883 = smov [#allocation16]
            %s884 = smov [#allocation18]
            %v885 = vld [vmem:[%s881] sm:$0x7]
            %v886 = vld [vmem:[%s882] sm:$0x7]
            %v887 = vld [vmem:[%s883] sm:$0x7]
            %v888 = vld [vmem:[%s884] sm:$0x7]
            %v889 = vmul.f32 %v878, %v885
            %v890 = vmul.f32 %v880, %v887
            %v891 = vsub.f32 %v889, %v890
            %v892 = vmul.f32 %v878, %v886
            %v893 = vmul.f32 %v880, %v888
            %v894 = vsub.f32 %v892, %v893
            %v895 = vmul.f32 %v880, %v885
            %v896 = vmul.f32 %v878, %v887
            %v897 = vadd.f32 %v895, %v896
            %v898 = vmul.f32 %v880, %v886
            %v899 = vmul.f32 %v878, %v888
            %v900 = vadd.f32 %v898, %v899
            %901 = vst [vmem:[%s881] sm:$0x7] %v891
            %902 = vst [vmem:[%s882] sm:$0x7] %v894
            %903 = vst [vmem:[%s883] sm:$0x7] %v897
            %904 = vst [vmem:[%s884] sm:$0x7] %v900
            %s905 = smov [#allocation12]
            %s906 = smov [#allocation16]
            %v907 = vld [vmem:[%s905] ss:$0 sm:$0xff]
            %s909 = scalar_lea.vmem %s905, 4294967295
            %v910 = vld [vmem:[%s909] sm:$0x6]
            %v911 = vlaneseq
            %v912 = vshrl.u32 %v911, 7
            %vm913 = vcmp.eq.s32.totalorder %v912, 0
            %v914 = vsel %vm913, %v907, %v910
            %s915 = scalar_lea.vmem %s905, 2
            %v916 = vld [vmem:[%s915] ss:$0 sm:$0xff]
            %917 = vst [vmem:[%s905] sm:$0x7] %v914
            %v918 = vld [vmem:[%s906] ss:$0 sm:$0xff]
            %s919 = scalar_lea.vmem %s905, 1
            %920 = vst [vmem:[%s919] sm:$0x1] %v918
            %s921 = scalar_lea.vmem %s906, 1
            %v922 = vld [vmem:[%s921] sm:$0x3]
            %v923 = vlaneseq
            %v924 = vshrl.u32 %v923, 7
            %vm925 = vcmp.eq.s32.totalorder %v924, 2
            %v926 = vsel %vm925, %v916, %v922
            %v927 = vld [vmem:[%s906] ss:$0 sm:$0xff]
            %928 = vst [vmem:[%s906] sm:$0x7] %v926
            %s929 = smov [#allocation14]
            %s930 = smov [#allocation18]
            %v931 = vld [vmem:[%s929] ss:$0 sm:$0xff]
            %s933 = scalar_lea.vmem %s929, 4294967295
            %v934 = vld [vmem:[%s933] sm:$0x6]
            %v935 = vlaneseq
            %v936 = vshrl.u32 %v935, 7
            %vm937 = vcmp.eq.s32.totalorder %v936, 0
            %v938 = vsel %vm937, %v931, %v934
            %s939 = scalar_lea.vmem %s929, 2
            %v940 = vld [vmem:[%s939] ss:$0 sm:$0xff]
            %941 = vst [vmem:[%s929] sm:$0x7] %v938
            %v942 = vld [vmem:[%s930] ss:$0 sm:$0xff]
            %s943 = scalar_lea.vmem %s929, 1
            %944 = vst [vmem:[%s943] sm:$0x1] %v942
            %s945 = scalar_lea.vmem %s930, 1
            %v946 = vld [vmem:[%s945] sm:$0x3]
            %v947 = vlaneseq
            %v948 = vshrl.u32 %v947, 7
            %vm949 = vcmp.eq.s32.totalorder %v948, 2
            %v950 = vsel %vm949, %v940, %v946
            %v951 = vld [vmem:[%s930] ss:$0 sm:$0xff]
            %952 = vst [vmem:[%s930] sm:$0x7] %v950
          $region152: #{custom-call.34} parent=144 // loop_footer
            %s473 = sadd.s32 1, %s469
          $region153: #{custom-call.34} parent=144 // loop_footer_branch
            %468 = sbr.rel target = $region149
          $region154: #{custom-call.34} parent=144 // loop_exit
            _
          %s953 = sadd.s32 %s371, 1
        $region145: #{custom-call.34} parent=139 // loop_footer
          _
        $region146: #{custom-call.34} parent=139 // loop_footer_branch
          %370 = sbr.rel target = $region142
        $region147: #{custom-call.34} parent=139 // loop_exit
          _
        %s956 = sand.u32 %s17, 7
        %s957 = scalar_lea.vmem [#allocation8], %s956
        %s958 = sand.u32 %s17, 7
        %s959 = scalar_lea.vmem [#allocation10], %s958
        %s960 = smov [#allocation20]
        %s961 = smov %s957
        %v962 = vlaneseq
        %v963 = vand.u32 %v962, 127
        %v964 = vmov %v963
        %v965 = vlaneseq
        %v966 = vshrl.u32 %v965, 7
        %v967 = vmov %v966
        %v968 = vld [vmem:[%s960] sm:$0x7]
        %vm971 = vcmp.eq.s32.totalorder %v967, %v964
        %v972 = vsel %vm971, %v968, 0.0
        %v973 = vrot.slane %v972, 4
        %v974 = vadd.f32 %v972, %v973
        %v975 = vrot.slane %v974, 2
        %v976 = vadd.f32 %v974, %v975
        %v977 = vrot.slane %v976, 1
        %v978 = vadd.f32 %v976, %v977
        %979 = vst [vmem:[%s961] sm:$0x1] %v978
        %s980 = smov [#allocation23]
        %s981 = smov %s959
        %v982 = vlaneseq
        %v983 = vand.u32 %v982, 127
        %v984 = vmov %v983
        %v985 = vlaneseq
        %v986 = vshrl.u32 %v985, 7
        %v987 = vmov %v986
        %v988 = vld [vmem:[%s980] sm:$0x7]
        %vm991 = vcmp.eq.s32.totalorder %v987, %v984
        %v992 = vsel %vm991, %v988, 0.0
        %v993 = vrot.slane %v992, 4
        %v994 = vadd.f32 %v992, %v993
        %v995 = vrot.slane %v994, 2
        %v996 = vadd.f32 %v994, %v995
        %v997 = vrot.slane %v996, 1
        %v998 = vadd.f32 %v996, %v997
        %999 = vst [vmem:[%s981] sm:$0x1] %v998
        %s1001 = ssub.s32 16, 1
        %v1002 = vld [vmem:[#allocation8] sm:%s1001]
        %s1004 = ssub.s32 16, 1
        %1005 = vst [vmem:[%s287] sm:%s1004] %v1002
        %s1007 = ssub.s32 16, 1
        %v1008 = vld [vmem:[#allocation10] sm:%s1007]
        %s1010 = ssub.s32 16, 1
        %1011 = vst [vmem:[%s293] sm:%s1010] %v1008
        %s1013 = ssub.s32 16, 1
        %v1014 = vld [vmem:[#allocation12] sm:%s1013]
        %s1016 = ssub.s32 16, 1
        %1017 = vst [vmem:[%s297] sm:%s1016] %v1014
        %s1019 = ssub.s32 16, 1
        %v1020 = vld [vmem:[#allocation14] sm:%s1019]
        %s1022 = ssub.s32 16, 1
        %1023 = vst [vmem:[%s301] sm:%s1022] %v1020
        %s1025 = ssub.s32 16, 1
        %v1026 = vld [vmem:[#allocation16] sm:%s1025]
        %s1028 = ssub.s32 16, 1
        %1029 = vst [vmem:[%s305] sm:%s1028] %v1026
        %s1031 = ssub.s32 16, 1
        %v1032 = vld [vmem:[#allocation18] sm:%s1031]
        %s1034 = ssub.s32 16, 1
        %1035 = vst [vmem:[%s309] sm:%s1034] %v1032
        %s1036 = sand.u32 %s27, 1
        %s1037 = sand.u32 %s27, 1
        %s1038 = smul.addr %s1037, 4
        %s1039 = scalar_lea.vmem [#allocation9], %s1038
        %s1040 = sand.u32 %s55, 1
        %s1041 = sand.u32 %s55, 1
        %s1042 = smul.addr %s1041, 4
        %s1043 = scalar_lea.vmem [#allocation11], %s1042
        %s1044 = sand.u32 %s17, 1
        %s1045 = sand.u32 %s17, 1
        %s1046 = smul.addr %s1045, 4
        %s1047 = scalar_lea.vmem [#allocation13], %s1046
        %s1048 = sand.u32 %s17, 1
        %s1049 = sand.u32 %s17, 1
        %s1050 = smul.addr %s1049, 4
        %s1051 = scalar_lea.vmem [#allocation15], %s1050
        %s1052 = sand.u32 %s17, 1
        %s1053 = sand.u32 %s17, 1
        %s1054 = smul.addr %s1053, 4
        %s1055 = scalar_lea.vmem [#allocation17], %s1054
        %s1056 = sand.u32 %s17, 1
        %s1057 = sand.u32 %s17, 1
        %s1058 = smul.addr %s1057, 4
        %s1059 = scalar_lea.vmem [#allocation19], %s1058
        // Predicated region
        $region155: #{custom-call.34} parent=139 // pred_check
          %p1060 = pneg %p37
        $region156: #{custom-call.34} parent=139 // pred_check_branch
          %1062 = sbr.rel (%p1060) target = $region158
        $region157: #{custom-call.34} parent=139 // pred_region
          %s1063 = sshrl.u32 %s17, 3
          %s1064 = smul.addr %s1063, 4
          %s1065 = scalar_lea.vmem %s4, %s1064
          // Predicated region
          $region159: #{custom-call.34} parent=157 // pred_check
            _
          $region160: #{custom-call.34} parent=157 // pred_check_branch
            %1067 = sbr.rel (0) target = $region162
          $region161: #{custom-call.34} parent=157 // pred_region
            // Predicated region
            $region163: #{custom-call.34} parent=161 // pred_check
              _
            $region164: #{custom-call.34} parent=161 // pred_check_branch
              %1069 = sbr.rel target = $region166
            $region165: #{custom-call.34} parent=161 // pred_region
              // Predicated region
              $region178: #{custom-call.34} parent=165 // pred_check
                _
              $region179: #{custom-call.34} parent=165 // pred_check_branch
                %1085 = sbr.rel (0) target = $region181
              $region180: #{custom-call.34} parent=165 // pred_region
                %s1087 = ssub.s32 16, 1
                loop: start=0, step=1, limit=1
                $region182: #{custom-call.34} parent=180 // loop_pre_header
                  _
                $region183: #{custom-call.34} parent=180 // loop_header
                  %s1089 = sphi 0, %s1093
                  %p1090 = scmp.ge.s32.totalorder %s1089, 1
                  %s1094 = sphi %s1039, %s1039
                  %s1095 = sphi %s1065, %s1065
                $region184: #{custom-call.34} parent=180 // loop_header_branch
                  %1092 = sbr.rel (%p1090) target = $region188
                $region185: #{custom-call.34} parent=180 // loop_body
                  %v1096 = vld [vmem:[%s1094] sm:%s1087]
                  %1097 = vst [vmem:[%s1095] sm:%s1087] %v1096
                $region186: #{custom-call.34} parent=180 // loop_footer
                  %s1093 = sadd.s32 1, %s1089
                $region187: #{custom-call.34} parent=180 // loop_footer_branch
                  %1088 = sbr.rel target = $region183
                $region188: #{custom-call.34} parent=180 // loop_exit
                  _
              $region181: #{custom-call.34} parent=165 // pred_fallthru
                _
            $region166: #{custom-call.34} parent=161 // pred_fallthru
              _
            // Predicated region
            $region167: #{custom-call.34} parent=161 // pred_check
              _
            $region168: #{custom-call.34} parent=161 // pred_check_branch
              %1071 = sbr.rel (0) target = $region170
            $region169: #{custom-call.34} parent=161 // pred_region
              %s1073 = ssub.s32 16, 1
              loop: start=0, step=1, limit=1
              $region171: #{custom-call.34} parent=169 // loop_pre_header
                _
              $region172: #{custom-call.34} parent=169 // loop_header
                %s1075 = sphi 0, %s1079
                %p1076 = scmp.ge.s32.totalorder %s1075, 1
                %s1080 = sphi %s1039, %s1039
                %s1081 = sphi %s1065, %s1065
              $region173: #{custom-call.34} parent=169 // loop_header_branch
                %1078 = sbr.rel (%p1076) target = $region177
              $region174: #{custom-call.34} parent=169 // loop_body
                %v1082 = vld [vmem:[%s1080] sm:%s1073]
                %1083 = vst [vmem:[%s1081] sm:%s1073] %v1082
              $region175: #{custom-call.34} parent=169 // loop_footer
                %s1079 = sadd.s32 1, %s1075
              $region176: #{custom-call.34} parent=169 // loop_footer_branch
                %1074 = sbr.rel target = $region172
              $region177: #{custom-call.34} parent=169 // loop_exit
                _
            $region170: #{custom-call.34} parent=161 // pred_fallthru
              _
          $region162: #{custom-call.34} parent=157 // pred_fallthru
            _
          %1098 = vnop
        $region158: #{custom-call.34} parent=139 // pred_fallthru
          _
        // Predicated region
        $region189: #{custom-call.34} parent=139 // pred_check
          %p1099 = pneg %p65
        $region190: #{custom-call.34} parent=139 // pred_check_branch
          %1101 = sbr.rel (%p1099) target = $region192
        $region191: #{custom-call.34} parent=139 // pred_region
          %s1102 = sshrl.u32 %s17, 3
          %s1103 = smul.addr %s1102, 4
          %s1104 = scalar_lea.vmem %s5, %s1103
          // Predicated region
          $region193: #{custom-call.34} parent=191 // pred_check
            _
          $region194: #{custom-call.34} parent=191 // pred_check_branch
            %1106 = sbr.rel (0) target = $region196
          $region195: #{custom-call.34} parent=191 // pred_region
            // Predicated region
            $region197: #{custom-call.34} parent=195 // pred_check
              _
            $region198: #{custom-call.34} parent=195 // pred_check_branch
              %1108 = sbr.rel target = $region200
            $region199: #{custom-call.34} parent=195 // pred_region
              // Predicated region
              $region212: #{custom-call.34} parent=199 // pred_check
                _
              $region213: #{custom-call.34} parent=199 // pred_check_branch
                %1124 = sbr.rel (0) target = $region215
              $region214: #{custom-call.34} parent=199 // pred_region
                %s1126 = ssub.s32 16, 1
                loop: start=0, step=1, limit=1
                $region216: #{custom-call.34} parent=214 // loop_pre_header
                  _
                $region217: #{custom-call.34} parent=214 // loop_header
                  %s1128 = sphi 0, %s1132
                  %p1129 = scmp.ge.s32.totalorder %s1128, 1
                  %s1133 = sphi %s1043, %s1043
                  %s1134 = sphi %s1104, %s1104
                $region218: #{custom-call.34} parent=214 // loop_header_branch
                  %1131 = sbr.rel (%p1129) target = $region222
                $region219: #{custom-call.34} parent=214 // loop_body
                  %v1135 = vld [vmem:[%s1133] sm:%s1126]
                  %1136 = vst [vmem:[%s1134] sm:%s1126] %v1135
                $region220: #{custom-call.34} parent=214 // loop_footer
                  %s1132 = sadd.s32 1, %s1128
                $region221: #{custom-call.34} parent=214 // loop_footer_branch
                  %1127 = sbr.rel target = $region217
                $region222: #{custom-call.34} parent=214 // loop_exit
                  _
              $region215: #{custom-call.34} parent=199 // pred_fallthru
                _
            $region200: #{custom-call.34} parent=195 // pred_fallthru
              _
            // Predicated region
            $region201: #{custom-call.34} parent=195 // pred_check
              _
            $region202: #{custom-call.34} parent=195 // pred_check_branch
              %1110 = sbr.rel (0) target = $region204
            $region203: #{custom-call.34} parent=195 // pred_region
              %s1112 = ssub.s32 16, 1
              loop: start=0, step=1, limit=1
              $region205: #{custom-call.34} parent=203 // loop_pre_header
                _
              $region206: #{custom-call.34} parent=203 // loop_header
                %s1114 = sphi 0, %s1118
                %p1115 = scmp.ge.s32.totalorder %s1114, 1
                %s1119 = sphi %s1043, %s1043
                %s1120 = sphi %s1104, %s1104
              $region207: #{custom-call.34} parent=203 // loop_header_branch
                %1117 = sbr.rel (%p1115) target = $region211
              $region208: #{custom-call.34} parent=203 // loop_body
                %v1121 = vld [vmem:[%s1119] sm:%s1112]
                %1122 = vst [vmem:[%s1120] sm:%s1112] %v1121
              $region209: #{custom-call.34} parent=203 // loop_footer
                %s1118 = sadd.s32 1, %s1114
              $region210: #{custom-call.34} parent=203 // loop_footer_branch
                %1113 = sbr.rel target = $region206
              $region211: #{custom-call.34} parent=203 // loop_exit
                _
            $region204: #{custom-call.34} parent=195 // pred_fallthru
              _
          $region196: #{custom-call.34} parent=191 // pred_fallthru
            _
          %1137 = vnop
        $region192: #{custom-call.34} parent=139 // pred_fallthru
          _
        %s1138 = smul.addr %s17, 4
        %s1139 = scalar_lea.vmem %s6, %s1138
        // Predicated region
        $region223: #{custom-call.34} parent=139 // pred_check
          _
        $region224: #{custom-call.34} parent=139 // pred_check_branch
          %1141 = sbr.rel (0) target = $region226
        $region225: #{custom-call.34} parent=139 // pred_region
          // Predicated region
          $region227: #{custom-call.34} parent=225 // pred_check
            _
          $region228: #{custom-call.34} parent=225 // pred_check_branch
            %1143 = sbr.rel target = $region230
          $region229: #{custom-call.34} parent=225 // pred_region
            // Predicated region
            $region242: #{custom-call.34} parent=229 // pred_check
              _
            $region243: #{custom-call.34} parent=229 // pred_check_branch
              %1159 = sbr.rel (0) target = $region245
            $region244: #{custom-call.34} parent=229 // pred_region
              %s1161 = ssub.s32 16, 1
              loop: start=0, step=1, limit=1
              $region246: #{custom-call.34} parent=244 // loop_pre_header
                _
              $region247: #{custom-call.34} parent=244 // loop_header
                %s1163 = sphi 0, %s1167
                %p1164 = scmp.ge.s32.totalorder %s1163, 1
                %s1168 = sphi %s1047, %s1047
                %s1169 = sphi %s1139, %s1139
              $region248: #{custom-call.34} parent=244 // loop_header_branch
                %1166 = sbr.rel (%p1164) target = $region252
              $region249: #{custom-call.34} parent=244 // loop_body
                %v1170 = vld [vmem:[%s1168] sm:%s1161]
                %1171 = vst [vmem:[%s1169] sm:%s1161] %v1170
              $region250: #{custom-call.34} parent=244 // loop_footer
                %s1167 = sadd.s32 1, %s1163
              $region251: #{custom-call.34} parent=244 // loop_footer_branch
                %1162 = sbr.rel target = $region247
              $region252: #{custom-call.34} parent=244 // loop_exit
                _
            $region245: #{custom-call.34} parent=229 // pred_fallthru
              _
          $region230: #{custom-call.34} parent=225 // pred_fallthru
            _
          // Predicated region
          $region231: #{custom-call.34} parent=225 // pred_check
            _
          $region232: #{custom-call.34} parent=225 // pred_check_branch
            %1145 = sbr.rel (0) target = $region234
          $region233: #{custom-call.34} parent=225 // pred_region
            %s1147 = ssub.s32 16, 1
            loop: start=0, step=1, limit=1
            $region235: #{custom-call.34} parent=233 // loop_pre_header
              _
            $region236: #{custom-call.34} parent=233 // loop_header
              %s1149 = sphi 0, %s1153
              %p1150 = scmp.ge.s32.totalorder %s1149, 1
              %s1154 = sphi %s1047, %s1047
              %s1155 = sphi %s1139, %s1139
            $region237: #{custom-call.34} parent=233 // loop_header_branch
              %1152 = sbr.rel (%p1150) target = $region241
            $region238: #{custom-call.34} parent=233 // loop_body
              %v1156 = vld [vmem:[%s1154] sm:%s1147]
              %1157 = vst [vmem:[%s1155] sm:%s1147] %v1156
            $region239: #{custom-call.34} parent=233 // loop_footer
              %s1153 = sadd.s32 1, %s1149
            $region240: #{custom-call.34} parent=233 // loop_footer_branch
              %1148 = sbr.rel target = $region236
            $region241: #{custom-call.34} parent=233 // loop_exit
              _
          $region234: #{custom-call.34} parent=225 // pred_fallthru
            _
        $region226: #{custom-call.34} parent=139 // pred_fallthru
          _
        %1172 = vnop
        %s1173 = smul.addr %s17, 4
        %s1174 = scalar_lea.vmem %s7, %s1173
        // Predicated region
        $region253: #{custom-call.34} parent=139 // pred_check
          _
        $region254: #{custom-call.34} parent=139 // pred_check_branch
          %1176 = sbr.rel (0) target = $region256
        $region255: #{custom-call.34} parent=139 // pred_region
          // Predicated region
          $region257: #{custom-call.34} parent=255 // pred_check
            _
          $region258: #{custom-call.34} parent=255 // pred_check_branch
            %1178 = sbr.rel target = $region260
          $region259: #{custom-call.34} parent=255 // pred_region
            // Predicated region
            $region272: #{custom-call.34} parent=259 // pred_check
              _
            $region273: #{custom-call.34} parent=259 // pred_check_branch
              %1194 = sbr.rel (0) target = $region275
            $region274: #{custom-call.34} parent=259 // pred_region
              %s1196 = ssub.s32 16, 1
              loop: start=0, step=1, limit=1
              $region276: #{custom-call.34} parent=274 // loop_pre_header
                _
              $region277: #{custom-call.34} parent=274 // loop_header
                %s1198 = sphi 0, %s1202
                %p1199 = scmp.ge.s32.totalorder %s1198, 1
                %s1203 = sphi %s1051, %s1051
                %s1204 = sphi %s1174, %s1174
              $region278: #{custom-call.34} parent=274 // loop_header_branch
                %1201 = sbr.rel (%p1199) target = $region282
              $region279: #{custom-call.34} parent=274 // loop_body
                %v1205 = vld [vmem:[%s1203] sm:%s1196]
                %1206 = vst [vmem:[%s1204] sm:%s1196] %v1205
              $region280: #{custom-call.34} parent=274 // loop_footer
                %s1202 = sadd.s32 1, %s1198
              $region281: #{custom-call.34} parent=274 // loop_footer_branch
                %1197 = sbr.rel target = $region277
              $region282: #{custom-call.34} parent=274 // loop_exit
                _
            $region275: #{custom-call.34} parent=259 // pred_fallthru
              _
          $region260: #{custom-call.34} parent=255 // pred_fallthru
            _
          // Predicated region
          $region261: #{custom-call.34} parent=255 // pred_check
            _
          $region262: #{custom-call.34} parent=255 // pred_check_branch
            %1180 = sbr.rel (0) target = $region264
          $region263: #{custom-call.34} parent=255 // pred_region
            %s1182 = ssub.s32 16, 1
            loop: start=0, step=1, limit=1
            $region265: #{custom-call.34} parent=263 // loop_pre_header
              _
            $region266: #{custom-call.34} parent=263 // loop_header
              %s1184 = sphi 0, %s1188
              %p1185 = scmp.ge.s32.totalorder %s1184, 1
              %s1189 = sphi %s1051, %s1051
              %s1190 = sphi %s1174, %s1174
            $region267: #{custom-call.34} parent=263 // loop_header_branch
              %1187 = sbr.rel (%p1185) target = $region271
            $region268: #{custom-call.34} parent=263 // loop_body
              %v1191 = vld [vmem:[%s1189] sm:%s1182]
              %1192 = vst [vmem:[%s1190] sm:%s1182] %v1191
            $region269: #{custom-call.34} parent=263 // loop_footer
              %s1188 = sadd.s32 1, %s1184
            $region270: #{custom-call.34} parent=263 // loop_footer_branch
              %1183 = sbr.rel target = $region266
            $region271: #{custom-call.34} parent=263 // loop_exit
              _
          $region264: #{custom-call.34} parent=255 // pred_fallthru
            _
        $region256: #{custom-call.34} parent=139 // pred_fallthru
          _
        %1207 = vnop
        %s1208 = smul.addr %s17, 4
        %s1209 = scalar_lea.vmem %s8, %s1208
        // Predicated region
        $region283: #{custom-call.34} parent=139 // pred_check
          _
        $region284: #{custom-call.34} parent=139 // pred_check_branch
          %1211 = sbr.rel (0) target = $region286
        $region285: #{custom-call.34} parent=139 // pred_region
          // Predicated region
          $region287: #{custom-call.34} parent=285 // pred_check
            _
          $region288: #{custom-call.34} parent=285 // pred_check_branch
            %1213 = sbr.rel target = $region290
          $region289: #{custom-call.34} parent=285 // pred_region
            // Predicated region
            $region302: #{custom-call.34} parent=289 // pred_check
              _
            $region303: #{custom-call.34} parent=289 // pred_check_branch
              %1229 = sbr.rel (0) target = $region305
            $region304: #{custom-call.34} parent=289 // pred_region
              %s1231 = ssub.s32 16, 1
              loop: start=0, step=1, limit=1
              $region306: #{custom-call.34} parent=304 // loop_pre_header
                _
              $region307: #{custom-call.34} parent=304 // loop_header
                %s1233 = sphi 0, %s1237
                %p1234 = scmp.ge.s32.totalorder %s1233, 1
                %s1238 = sphi %s1055, %s1055
                %s1239 = sphi %s1209, %s1209
              $region308: #{custom-call.34} parent=304 // loop_header_branch
                %1236 = sbr.rel (%p1234) target = $region312
              $region309: #{custom-call.34} parent=304 // loop_body
                %v1240 = vld [vmem:[%s1238] sm:%s1231]
                %1241 = vst [vmem:[%s1239] sm:%s1231] %v1240
              $region310: #{custom-call.34} parent=304 // loop_footer
                %s1237 = sadd.s32 1, %s1233
              $region311: #{custom-call.34} parent=304 // loop_footer_branch
                %1232 = sbr.rel target = $region307
              $region312: #{custom-call.34} parent=304 // loop_exit
                _
            $region305: #{custom-call.34} parent=289 // pred_fallthru
              _
          $region290: #{custom-call.34} parent=285 // pred_fallthru
            _
          // Predicated region
          $region291: #{custom-call.34} parent=285 // pred_check
            _
          $region292: #{custom-call.34} parent=285 // pred_check_branch
            %1215 = sbr.rel (0) target = $region294
          $region293: #{custom-call.34} parent=285 // pred_region
            %s1217 = ssub.s32 16, 1
            loop: start=0, step=1, limit=1
            $region295: #{custom-call.34} parent=293 // loop_pre_header
              _
            $region296: #{custom-call.34} parent=293 // loop_header
              %s1219 = sphi 0, %s1223
              %p1220 = scmp.ge.s32.totalorder %s1219, 1
              %s1224 = sphi %s1055, %s1055
              %s1225 = sphi %s1209, %s1209
            $region297: #{custom-call.34} parent=293 // loop_header_branch
              %1222 = sbr.rel (%p1220) target = $region301
            $region298: #{custom-call.34} parent=293 // loop_body
              %v1226 = vld [vmem:[%s1224] sm:%s1217]
              %1227 = vst [vmem:[%s1225] sm:%s1217] %v1226
            $region299: #{custom-call.34} parent=293 // loop_footer
              %s1223 = sadd.s32 1, %s1219
            $region300: #{custom-call.34} parent=293 // loop_footer_branch
              %1218 = sbr.rel target = $region296
            $region301: #{custom-call.34} parent=293 // loop_exit
              _
          $region294: #{custom-call.34} parent=285 // pred_fallthru
            _
        $region286: #{custom-call.34} parent=139 // pred_fallthru
          _
        %1242 = vnop
        %s1243 = smul.addr %s17, 4
        %s1244 = scalar_lea.vmem %s9, %s1243
        // Predicated region
        $region313: #{custom-call.34} parent=139 // pred_check
          _
        $region314: #{custom-call.34} parent=139 // pred_check_branch
          %1246 = sbr.rel (0) target = $region316
        $region315: #{custom-call.34} parent=139 // pred_region
          // Predicated region
          $region317: #{custom-call.34} parent=315 // pred_check
            _
          $region318: #{custom-call.34} parent=315 // pred_check_branch
            %1248 = sbr.rel target = $region320
          $region319: #{custom-call.34} parent=315 // pred_region
            // Predicated region
            $region332: #{custom-call.34} parent=319 // pred_check
              _
            $region333: #{custom-call.34} parent=319 // pred_check_branch
              %1264 = sbr.rel (0) target = $region335
            $region334: #{custom-call.34} parent=319 // pred_region
              %s1266 = ssub.s32 16, 1
              loop: start=0, step=1, limit=1
              $region336: #{custom-call.34} parent=334 // loop_pre_header
                _
              $region337: #{custom-call.34} parent=334 // loop_header
                %s1268 = sphi 0, %s1272
                %p1269 = scmp.ge.s32.totalorder %s1268, 1
                %s1273 = sphi %s1059, %s1059
                %s1274 = sphi %s1244, %s1244
              $region338: #{custom-call.34} parent=334 // loop_header_branch
                %1271 = sbr.rel (%p1269) target = $region342
              $region339: #{custom-call.34} parent=334 // loop_body
                %v1275 = vld [vmem:[%s1273] sm:%s1266]
                %1276 = vst [vmem:[%s1274] sm:%s1266] %v1275
              $region340: #{custom-call.34} parent=334 // loop_footer
                %s1272 = sadd.s32 1, %s1268
              $region341: #{custom-call.34} parent=334 // loop_footer_branch
                %1267 = sbr.rel target = $region337
              $region342: #{custom-call.34} parent=334 // loop_exit
                _
            $region335: #{custom-call.34} parent=319 // pred_fallthru
              _
          $region320: #{custom-call.34} parent=315 // pred_fallthru
            _
          // Predicated region
          $region321: #{custom-call.34} parent=315 // pred_check
            _
          $region322: #{custom-call.34} parent=315 // pred_check_branch
            %1250 = sbr.rel (0) target = $region324
          $region323: #{custom-call.34} parent=315 // pred_region
            %s1252 = ssub.s32 16, 1
            loop: start=0, step=1, limit=1
            $region325: #{custom-call.34} parent=323 // loop_pre_header
              _
            $region326: #{custom-call.34} parent=323 // loop_header
              %s1254 = sphi 0, %s1258
              %p1255 = scmp.ge.s32.totalorder %s1254, 1
              %s1259 = sphi %s1059, %s1059
              %s1260 = sphi %s1244, %s1244
            $region327: #{custom-call.34} parent=323 // loop_header_branch
              %1257 = sbr.rel (%p1255) target = $region331
            $region328: #{custom-call.34} parent=323 // loop_body
              %v1261 = vld [vmem:[%s1259] sm:%s1252]
              %1262 = vst [vmem:[%s1260] sm:%s1252] %v1261
            $region329: #{custom-call.34} parent=323 // loop_footer
              %s1258 = sadd.s32 1, %s1254
            $region330: #{custom-call.34} parent=323 // loop_footer_branch
              %1253 = sbr.rel target = $region326
            $region331: #{custom-call.34} parent=323 // loop_exit
              _
          $region324: #{custom-call.34} parent=315 // pred_fallthru
            _
        $region316: #{custom-call.34} parent=139 // pred_fallthru
          _
        %1277 = vnop
      $region140: #{custom-call.34} parent=5 // pred_fallthru
        _
      %p1278 = scmp.le.s32.totalorder 2, %s12
      // Predicated region
      $region343: #{custom-call.34} parent=5 // pred_check
        %p1279 = pneg %p1278
      $region344: #{custom-call.34} parent=5 // pred_check_branch
        %1281 = sbr.rel (%p1279) target = $region346
      $region345: #{custom-call.34} parent=5 // pred_region
        %s1282 = ssub.s32 %s12, 2
        // Predicated region
        $region347: #{custom-call.34} parent=345 // pred_check
          %p1283 = pneg %p43
        $region348: #{custom-call.34} parent=345 // pred_check_branch
          %1285 = sbr.rel (%p1283) target = $region350
        $region349: #{custom-call.34} parent=345 // pred_region
          %s1286 = sand.u32 %s28, 1
          %s1287 = sand.u32 %s28, 1
          %s1288 = smul.addr %s1287, 4
          %s1289 = scalar_lea.vmem [#allocation9], %s1288
        $region350: #{custom-call.34} parent=345 // pred_fallthru
          _
        // Predicated region
        $region351: #{custom-call.34} parent=345 // pred_check
          %p1290 = pneg %p71
        $region352: #{custom-call.34} parent=345 // pred_check_branch
          %1292 = sbr.rel (%p1290) target = $region354
        $region353: #{custom-call.34} parent=345 // pred_region
          %s1293 = sand.u32 %s56, 1
          %s1294 = sand.u32 %s56, 1
          %s1295 = smul.addr %s1294, 4
          %s1296 = scalar_lea.vmem [#allocation11], %s1295
        $region354: #{custom-call.34} parent=345 // pred_fallthru
          _
        %s1297 = sand.u32 %s18, 1
        %s1298 = sand.u32 %s18, 1
        %s1299 = smul.addr %s1298, 4
        %s1300 = scalar_lea.vmem [#allocation13], %s1299
        %s1301 = sand.u32 %s18, 1
        %s1302 = sand.u32 %s18, 1
        %s1303 = smul.addr %s1302, 4
        %s1304 = scalar_lea.vmem [#allocation15], %s1303
        %s1305 = sand.u32 %s18, 1
        %s1306 = sand.u32 %s18, 1
        %s1307 = smul.addr %s1306, 4
        %s1308 = scalar_lea.vmem [#allocation17], %s1307
        %s1309 = sand.u32 %s18, 1
        %s1310 = sand.u32 %s18, 1
        %s1311 = smul.addr %s1310, 4
        %s1312 = scalar_lea.vmem [#allocation19], %s1311
      $region346: #{custom-call.34} parent=5 // pred_fallthru
        _
    $region6: #{custom-call.34} parent=1 // loop_footer
      %s16 = sadd.s32 1, %s12
    $region7: #{custom-call.34} parent=1 // loop_footer_branch
      %11 = sbr.rel target = $region3
    $region8: #{custom-call.34} parent=1 // loop_exit
      _

// kernel: reverse
$region0: #{reverse}
  %s0 = inlined_call_operand.vmem [shape: f32[3,6], index: 0, kind: input, shape index: {}]
  %s1 = inlined_call_operand.vmem [shape: f32[3,6], index: 1, kind: output, shape index: {}]
  %v2 = vlaneseq
  %v3 = vsub.s32 5, %v2
  %4 = vset.pattern.permute.xlu0 %v3
  $region1: #{reverse} parent=0
    #allocation0 [shape = 'u8[4096]{0}', space=vmem, size = 0x1000, scoped, tag = 'operand span for operand 0']
    #allocation1 [shape = 'u8[2048]{0}', space=vmem, size = 0x800, scoped, tag = 'packed  for operand 0']
    #allocation2 [shape = 'u8[4096]{0}', space=vmem, size = 0x1000, scoped, tag = 'operand span for operand 1']
    #allocation3 [shape = 'u8[2048]{0}', space=vmem, size = 0x800, scoped, tag = 'packed  for operand 1']
    // Predicated region
    $region2: #{reverse} parent=1 // pred_check
      _
    $region3: #{reverse} parent=1 // pred_check_branch
      %6 = sbr.rel (0) target = $region5
    $region4: #{reverse} parent=1 // pred_region
      // Predicated region
      $region6: #{reverse} parent=4 // pred_check
        _
      $region7: #{reverse} parent=4 // pred_check_branch
        %8 = sbr.rel target = $region9
      $region8: #{reverse} parent=4 // pred_region
        // Predicated region
        $region21: #{reverse} parent=8 // pred_check
          _
        $region22: #{reverse} parent=8 // pred_check_branch
          %24 = sbr.rel (0) target = $region24
        $region23: #{reverse} parent=8 // pred_region
          %s26 = ssub.s32 16, 1
          loop: start=0, step=1, limit=1
          $region25: #{reverse} parent=23 // loop_pre_header
            _
          $region26: #{reverse} parent=23 // loop_header
            %s28 = sphi 0, %s32
            %p29 = scmp.ge.s32.totalorder %s28, 1
            %s33 = sphi %s0, %s0
            %s34 = sphi [#allocation1], [#allocation1]
          $region27: #{reverse} parent=23 // loop_header_branch
            %31 = sbr.rel (%p29) target = $region31
          $region28: #{reverse} parent=23 // loop_body
            %v35 = vld [vmem:[%s33] sm:%s26]
            %36 = vst [vmem:[%s34] sm:%s26] %v35
          $region29: #{reverse} parent=23 // loop_footer
            %s32 = sadd.s32 1, %s28
          $region30: #{reverse} parent=23 // loop_footer_branch
            %27 = sbr.rel target = $region26
          $region31: #{reverse} parent=23 // loop_exit
            _
        $region24: #{reverse} parent=8 // pred_fallthru
          _
      $region9: #{reverse} parent=4 // pred_fallthru
        _
      // Predicated region
      $region10: #{reverse} parent=4 // pred_check
        _
      $region11: #{reverse} parent=4 // pred_check_branch
        %10 = sbr.rel (0) target = $region13
      $region12: #{reverse} parent=4 // pred_region
        %s12 = ssub.s32 16, 1
        loop: start=0, step=1, limit=1
        $region14: #{reverse} parent=12 // loop_pre_header
          _
        $region15: #{reverse} parent=12 // loop_header
          %s14 = sphi 0, %s18
          %p15 = scmp.ge.s32.totalorder %s14, 1
          %s19 = sphi %s0, %s0
          %s20 = sphi [#allocation1], [#allocation1]
        $region16: #{reverse} parent=12 // loop_header_branch
          %17 = sbr.rel (%p15) target = $region20
        $region17: #{reverse} parent=12 // loop_body
          %v21 = vld [vmem:[%s19] sm:%s12]
          %22 = vst [vmem:[%s20] sm:%s12] %v21
        $region18: #{reverse} parent=12 // loop_footer
          %s18 = sadd.s32 1, %s14
        $region19: #{reverse} parent=12 // loop_footer_branch
          %13 = sbr.rel target = $region15
        $region20: #{reverse} parent=12 // loop_exit
          _
      $region13: #{reverse} parent=4 // pred_fallthru
        _
    $region5: #{reverse} parent=1 // pred_fallthru
      _
    %37 = vnop
    %s39 = ssub.s32 16, 1
    %v40 = vld [vmem:[#allocation1] sm:%s39]
    %41 = vst [vmem:[#allocation0] sm:%s39] %v40
    %v42 = vld [vmem:[#allocation0] sm:$0xff]
    %43 = vperm.xlu0 %4, %v42
    %v44 = vpop.permute.xlu0 %43
    %45 = vst [vmem:[#allocation2] sm:$0xff] %v44
    %s47 = ssub.s32 16, 1
    %v48 = vld [vmem:[#allocation2] sm:%s47]
    %s50 = ssub.s32 16, 1
    %51 = vst [vmem:[#allocation3] sm:%s50] %v48
    // Predicated region
    $region32: #{reverse} parent=1 // pred_check
      _
    $region33: #{reverse} parent=1 // pred_check_branch
      %53 = sbr.rel (0) target = $region35
    $region34: #{reverse} parent=1 // pred_region
      // Predicated region
      $region36: #{reverse} parent=34 // pred_check
        _
      $region37: #{reverse} parent=34 // pred_check_branch
        %55 = sbr.rel target = $region39
      $region38: #{reverse} parent=34 // pred_region
        // Predicated region
        $region51: #{reverse} parent=38 // pred_check
          _
        $region52: #{reverse} parent=38 // pred_check_branch
          %71 = sbr.rel (0) target = $region54
        $region53: #{reverse} parent=38 // pred_region
          %s73 = ssub.s32 16, 1
          loop: start=0, step=1, limit=1
          $region55: #{reverse} parent=53 // loop_pre_header
            _
          $region56: #{reverse} parent=53 // loop_header
            %s75 = sphi 0, %s79
            %p76 = scmp.ge.s32.totalorder %s75, 1
            %s80 = sphi [#allocation3], [#allocation3]
            %s81 = sphi %s1, %s1
          $region57: #{reverse} parent=53 // loop_header_branch
            %78 = sbr.rel (%p76) target = $region61
          $region58: #{reverse} parent=53 // loop_body
            %v82 = vld [vmem:[%s80] sm:%s73]
            %83 = vst [vmem:[%s81] sm:%s73] %v82
          $region59: #{reverse} parent=53 // loop_footer
            %s79 = sadd.s32 1, %s75
          $region60: #{reverse} parent=53 // loop_footer_branch
            %74 = sbr.rel target = $region56
          $region61: #{reverse} parent=53 // loop_exit
            _
        $region54: #{reverse} parent=38 // pred_fallthru
          _
      $region39: #{reverse} parent=34 // pred_fallthru
        _
      // Predicated region
      $region40: #{reverse} parent=34 // pred_check
        _
      $region41: #{reverse} parent=34 // pred_check_branch
        %57 = sbr.rel (0) target = $region43
      $region42: #{reverse} parent=34 // pred_region
        %s59 = ssub.s32 16, 1
        loop: start=0, step=1, limit=1
        $region44: #{reverse} parent=42 // loop_pre_header
          _
        $region45: #{reverse} parent=42 // loop_header
          %s61 = sphi 0, %s65
          %p62 = scmp.ge.s32.totalorder %s61, 1
          %s66 = sphi [#allocation3], [#allocation3]
          %s67 = sphi %s1, %s1
        $region46: #{reverse} parent=42 // loop_header_branch
          %64 = sbr.rel (%p62) target = $region50
        $region47: #{reverse} parent=42 // loop_body
          %v68 = vld [vmem:[%s66] sm:%s59]
          %69 = vst [vmem:[%s67] sm:%s59] %v68
        $region48: #{reverse} parent=42 // loop_footer
          %s65 = sadd.s32 1, %s61
        $region49: #{reverse} parent=42 // loop_footer_branch
          %60 = sbr.rel target = $region45
        $region50: #{reverse} parent=42 // loop_exit
          _
      $region43: #{reverse} parent=34 // pred_fallthru
        _
    $region35: #{reverse} parent=1 // pred_fallthru
      _
    %84 = vnop

// kernel: custom-call.19
$region0: #{custom-call.19}
  %s0 = inlined_call_operand.vmem [shape: f32[3,6,6], index: 0, kind: input, shape index: {}]
  %s1 = inlined_call_operand.vmem [shape: f32[3,6,6], index: 1, kind: output, shape index: {0}]
  %s2 = inlined_call_operand.vmem [shape: f32[3,6], index: 2, kind: output, shape index: {1}]
  %3 = xla_tuple %s1, %s2
  $region1: #{custom-call.19} parent=0
    #allocation0 [shape = 'u8[8192]{0}', space=vmem, size = 0x2000, scoped, tag = 'operand span for operand 0']
    #allocation1 [shape = 'u8[8192]{0}', space=vmem, size = 0x2000, scoped, tag = 'operand span for operand 1']
    #allocation2 [shape = 'u8[4096]{0}', space=vmem, size = 0x1000, scoped, tag = 'operand span for operand 2']
    #allocation3 [shape = 'u8[4096]{0}', space=vmem, size = 0x1000, scoped, tag = 'packed  for operand 2']
    loop: start=0, step=1, limit=5
    $region2: #{custom-call.19} parent=1 // loop_pre_header
      _
    $region3: #{custom-call.19} parent=1 // loop_header
      %s5 = sphi 0, %s9
      %p6 = scmp.ge.s32.totalorder %s5, 5
      %s12 = sphi 0, %s31
      %s13 = sphi 0, %s27
      %s14 = sphi 0, %s23
      %s15 = sphi 0, %s12
      %s16 = sphi 0, %s13
      %s17 = sphi 0, %s14
      %s18 = sphi 0, %s15
      %s19 = sphi 0, %s16
      %s20 = sphi 0, %s17
      %s46 = sphi 0, %s48
      %s49 = sphi 0, %s46
      %s50 = sphi 0, %s49
      %s66 = sphi 0, %s50
    $region4: #{custom-call.19} parent=1 // loop_header_branch
      %8 = sbr.rel (%p6) target = $region8
    $region5: #{custom-call.19} parent=1 // loop_body
      %s10 = ssub.s32 %s5, 1
      %s11 = ssub.s32 %s5, 2
      %s21 = sadd.s32 1, %s14
      %p22 = scmp.ge.s32.totalorder %s21, 1
      %s23 = scalar_select %p22, 0, %s21
      %s24 = sadd.s32 1, %s13
      %s25 = scalar_select %p22, %s24, %s13
      %p26 = scmp.ge.s32.totalorder %s25, 1
      %s27 = scalar_select %p26, 0, %s25
      %s28 = sadd.s32 1, %s12
      %s29 = scalar_select %p26, %s28, %s12
      %p30 = scmp.ge.s32.totalorder %s29, 3
      %s31 = scalar_select %p30, 0, %s29
      %p32 = scmp.lt.s32.totalorder %s12, 0
      %s33 = ssub.s32 0, %s12
      %s34 = scalar_select %p32, %s33, %s12
      %s35 = sshrl.u32 %s34, 3
      %s36 = ssub.s32 0, %s35
      %s37 = scalar_select %p32, %s36, %s35
      %p38 = scmp.lt.s32.totalorder %s31, 0
      %s39 = ssub.s32 0, %s31
      %s40 = scalar_select %p38, %s39, %s31
      %s41 = sshrl.u32 %s40, 3
      %s42 = ssub.s32 0, %s41
      %s43 = scalar_select %p38, %s42, %s41
      %s44 = ssub.s32 %s37, %s43
      %p45 = scmp.eq.s32.totalorder %s44, 0
      %s47 = sadd.s32 %s46, 1
      %s48 = scalar_select %p45, %s46, %s47
      %p51 = pneg %p45
      %p52 = scmp.eq.s32.totalorder %s5, 2
      %p53 = por %p51, %p52
      %p54 = scmp.ne.s32.totalorder %s46, %s49
      %p55 = scmp.eq.s32.totalorder %s5, 0
      %p56 = por %p54, %p55
      %p57 = scmp.ne.s32.totalorder %s46, %s49
      %p58 = scmp.eq.s32.totalorder %s10, 2
      %p59 = por %p57, %p58
      %p60 = scmp.ne.s32.totalorder %s49, %s50
      %p61 = scmp.eq.s32.totalorder %s10, 0
      %p62 = por %p60, %p61
      %p63 = scmp.ne.s32.totalorder %s49, %s50
      %p64 = scmp.eq.s32.totalorder %s11, 2
      %p65 = por %p63, %p64
      %p67 = scmp.ne.s32.totalorder %s50, %s66
      %p68 = scmp.eq.s32.totalorder %s11, 0
      %p69 = por %p67, %p68
      %p70 = scmp.le.s32.totalorder 1, %s5
      %p71 = scmp.lt.s32.totalorder %s5, 4
      %p72 = pnand %p70, %p71
      %p73 = pneg %p72
      // Predicated region
      $region9: #{custom-call.19} parent=5 // pred_check
        _
      $region10: #{custom-call.19} parent=5 // pred_check_branch
        %75 = sbr.rel (%p72) target = $region12
      $region11: #{custom-call.19} parent=5 // pred_region
        %s76 = ssub.s32 %s5, 1
      $region12: #{custom-call.19} parent=5 // pred_fallthru
        _
      %p77 = scmp.lt.s32.totalorder %s5, 3
      // Predicated region
      $region13: #{custom-call.19} parent=5 // pred_check
        %p78 = pneg %p77
      $region14: #{custom-call.19} parent=5 // pred_check_branch
        %80 = sbr.rel (%p78) target = $region16
      $region15: #{custom-call.19} parent=5 // pred_region
        %s81 = sand.u32 %s5, 1
        %s82 = sand.u32 %s5, 1
        %s83 = smul.addr %s82, 8
        %s84 = scalar_lea.vmem [#allocation0], %s83
        %s85 = sadd.s32 %s14, %s13
        %s86 = sadd.s32 %s85, %s12
        %s87 = smul.addr %s86, 8
        %s88 = scalar_lea.vmem %s0, %s87
        // Predicated region
        $region17: #{custom-call.19} parent=15 // pred_check
          _
        $region18: #{custom-call.19} parent=15 // pred_check_branch
          %90 = sbr.rel (0) target = $region20
        $region19: #{custom-call.19} parent=15 // pred_region
          // Predicated region
          $region21: #{custom-call.19} parent=19 // pred_check
            _
          $region22: #{custom-call.19} parent=19 // pred_check_branch
            %92 = sbr.rel (0) target = $region24
          $region23: #{custom-call.19} parent=19 // pred_region
            // Predicated region
            $region36: #{custom-call.19} parent=23 // pred_check
              _
            $region37: #{custom-call.19} parent=23 // pred_check_branch
              %108 = sbr.rel (0) target = $region39
            $region38: #{custom-call.19} parent=23 // pred_region
              loop: start=0, step=1, limit=1
              $region40: #{custom-call.19} parent=38 // loop_pre_header
                _
              $region41: #{custom-call.19} parent=38 // loop_header
                %s110 = sphi 0, %s114
                %p111 = scmp.ge.s32.totalorder %s110, 1
                %s115 = sphi %s88, %s88
                %s116 = sphi %s84, %s84
              $region42: #{custom-call.19} parent=38 // loop_header_branch
                %113 = sbr.rel (%p111) target = $region46
              $region43: #{custom-call.19} parent=38 // loop_body
                %v117 = vld [vmem:[%s115] sm:$0xff]
                %118 = vst [vmem:[%s116] sm:$0xff] %v117
              $region44: #{custom-call.19} parent=38 // loop_footer
                %s114 = sadd.s32 1, %s110
              $region45: #{custom-call.19} parent=38 // loop_footer_branch
                %109 = sbr.rel target = $region41
              $region46: #{custom-call.19} parent=38 // loop_exit
                _
            $region39: #{custom-call.19} parent=23 // pred_fallthru
              _
            // Predicated region
            $region47: #{custom-call.19} parent=23 // pred_check
              _
            $region48: #{custom-call.19} parent=23 // pred_check_branch
              %120 = sbr.rel target = $region50
            $region49: #{custom-call.19} parent=23 // pred_region
              _
            $region50: #{custom-call.19} parent=23 // pred_fallthru
              _
          $region24: #{custom-call.19} parent=19 // pred_fallthru
            _
          // Predicated region
          $region25: #{custom-call.19} parent=19 // pred_check
            _
          $region26: #{custom-call.19} parent=19 // pred_check_branch
            %94 = sbr.rel target = $region28
          $region27: #{custom-call.19} parent=19 // pred_region
            %s96 = ssub.s32 256, 1
            loop: start=0, step=1, limit=1
            $region29: #{custom-call.19} parent=27 // loop_pre_header
              _
            $region30: #{custom-call.19} parent=27 // loop_header
              %s98 = sphi 0, %s102
              %p99 = scmp.ge.s32.totalorder %s98, 1
              %s103 = sphi %s88, %s88
              %s104 = sphi %s84, %s84
            $region31: #{custom-call.19} parent=27 // loop_header_branch
              %101 = sbr.rel (%p99) target = $region35
            $region32: #{custom-call.19} parent=27 // loop_body
              %v105 = vld [vmem:[%s103] sm:%s96]
              %106 = vst [vmem:[%s104] sm:%s96] %v105
            $region33: #{custom-call.19} parent=27 // loop_footer
              %s102 = sadd.s32 1, %s98
            $region34: #{custom-call.19} parent=27 // loop_footer_branch
              %97 = sbr.rel target = $region30
            $region35: #{custom-call.19} parent=27 // loop_exit
              _
          $region28: #{custom-call.19} parent=19 // pred_fallthru
            _
        $region20: #{custom-call.19} parent=15 // pred_fallthru
          _
        %121 = vnop
      $region16: #{custom-call.19} parent=5 // pred_fallthru
        _
      %p122 = scmp.le.s32.totalorder 1, %s5
      %p123 = scmp.lt.s32.totalorder %s5, 4
      %p124 = pnand %p122, %p123
      %p125 = pneg %p124
      // Predicated region
      $region51: #{custom-call.19} parent=5 // pred_check
        _
      $region52: #{custom-call.19} parent=5 // pred_check_branch
        %127 = sbr.rel (%p124) target = $region54
      $region53: #{custom-call.19} parent=5 // pred_region
        #allocation4 [shape = 'f32[6,128]{1,0}', space=vmem, size = 0x1000, scoped, tag = 'scratch for Householder reflectors']
        %s128 = ssub.s32 %s5, 1
        %s129 = sand.u32 %s10, 1
        %s130 = sand.u32 %s10, 1
        %s131 = smul.addr %s130, 8
        %s132 = scalar_lea.vmem [#allocation0], %s131
        %s133 = sand.u32 %s10, 1
        %s134 = sand.u32 %s10, 1
        %s135 = smul.addr %s134, 8
        %s136 = scalar_lea.vmem [#allocation0], %s135
        %s137 = sand.u32 %s10, 1
        %s138 = sand.u32 %s10, 1
        %s139 = smul.addr %s138, 8
        %s140 = scalar_lea.vmem [#allocation1], %s139
        %p141 = pneg %p62
        %p142 = pneg %p59
        %s143 = sand.u32 %s49, 1
        %s144 = sand.u32 %s49, 1
        %s145 = smul.addr %s144, 4
        %s146 = scalar_lea.vmem [#allocation3], %s145
        %p147 = scmp.lt.s32.totalorder %s15, 0
        %s148 = ssub.s32 0, %s15
        %s149 = scalar_select %p147, %s148, %s15
        %s150 = sshrl.u32 %s149, 3
        %s151 = ssub.s32 0, %s150
        %s152 = scalar_select %p147, %s151, %s150
        %s153 = sand.u32 %s15, 7
        %s154 = scalar_lea.vmem [#allocation2], %s153
        %v155 = vld [vmem:[%s132] sm:$0xff]
        %156 = vst [vmem:[%s140] sm:$0xff] %v155
        %157 = vst [vmem:[%s154] sm:$0x1] 0.0
        loop: start=0, step=1, limit=6
        $region55: #{custom-call.19} parent=53 // loop_pre_header
          _
        $region56: #{custom-call.19} parent=53 // loop_header
          %s159 = sphi 0, %s163
          %p160 = scmp.ge.s32.totalorder %s159, 6
        $region57: #{custom-call.19} parent=53 // loop_header_branch
          %162 = sbr.rel (%p160) target = $region61
        $region58: #{custom-call.19} parent=53 // loop_body
          %v164 = vld [vmem:[%s140] sm:$0xff]
          %v165 = vlaneseq
          %v166 = vshrl.u32 %v165, 7
          %v168 = vstv %s159
          %vm169 = vcmp.gt.s32.totalorder %v166, %v168
          %vm170 = vcmp.lt.s32.totalorder %v166, 6
          %vm171 = vmand %vm169, %vm170
          %v172 = vsel %vm171, %v164, 0.0
          %v173 = vmul.f32 %v172, %v172
          %v174 = vrot.slane %v173, 4
          %v175 = vadd.f32 %v173, %v174
          %v176 = vrot.slane %v175, 2
          %v177 = vadd.f32 %v175, %v176
          %v178 = vrot.slane %v177, 1
          %v179 = vadd.f32 %v177, %v178
          %v180 = vrsqrt.pop %v179
          %v181 = vmul.f32 %v180, %v179
          %v182 = vmul.f32 %v181, %v180
          %v183 = vmul.f32 0.5, %v182
          %v184 = vsub.f32 1.5, %v183
          %v185 = vmul.f32 %v180, %v184
          %v186 = vmul.f32 %v179, %v185
          %vm187 = vcmp.eq.f32.partialorder %v179, inf
          %v188 = vsel %vm187, %v179, %v186
          %vm189 = vcmp.eq.f32.partialorder %v179, 0.0
          %v190 = vand.u32 %v179, 2147483648
          %v191 = vsel %vm189, %v190, %v188
          %vm192 = vcmp.eq.f32.partialorder %v179, 0.0
          %s193 = sshrl.u32 %s159, 3
          %s194 = sand.u32 %s159, 7
          %s195 = smul.addr %s193, 8
          %s196 = sadd.s32 %s194, %s195
          %s197 = scalar_lea.vmem %s140, %s196 [#allocation1]
          %v198 = vld [vmem:[%s197] ss:$0 sm:$0xff]
          %v199 = vand.u32 2147483647, %v198
          %v200 = vmax.f32 %v199, 0.0
          %v201 = vand.u32 2147483647, %v191
          %v202 = vmax.f32 %v200, %v201
          %v203 = vrcp.pop %v202
          %v204 = vmul.f32 %v202, %v203
          %v205 = vsub.f32 1.0, %v204
          %v206 = vmul.f32 %v203, %v205
          %v207 = vadd.f32 %v203, %v206
          %vm208 = vweird.f32 %v202
          %vm209 = vweird.f32 %v203
          %vm210 = vmor %vm208, %vm209
          %v211 = vsel %vm210, %v203, %v207
          %v212 = vand.u32 2147483647, %v202
          %vm213 = vcmp.eq.f32.partialorder %v212, 8.507059e+37
          %v214 = vand.u32 %v202, 2147483648
          %v215 = vor.u32 1.1754944e-38, %v214
          %v216 = vsel %vm213, %v215, %v211
          %v217 = vmul.f32 %v199, %v216
          %v218 = vmul.f32 %v217, %v217
          %v219 = vrcp.pop %v202
          %v220 = vmul.f32 %v202, %v219
          %v221 = vsub.f32 1.0, %v220
          %v222 = vmul.f32 %v219, %v221
          %v223 = vadd.f32 %v219, %v222
          %vm224 = vweird.f32 %v202
          %vm225 = vweird.f32 %v219
          %vm226 = vmor %vm224, %vm225
          %v227 = vsel %vm226, %v219, %v223
          %v228 = vand.u32 2147483647, %v202
          %vm229 = vcmp.eq.f32.partialorder %v228, 8.507059e+37
          %v230 = vand.u32 %v202, 2147483648
          %v231 = vor.u32 1.1754944e-38, %v230
          %v232 = vsel %vm229, %v231, %v227
          %v233 = vmul.f32 0.0, %v232
          %v234 = vmul.f32 %v233, %v233
          %v235 = vadd.f32 %v218, %v234
          %v236 = vrcp.pop %v202
          %v237 = vmul.f32 %v202, %v236
          %v238 = vsub.f32 1.0, %v237
          %v239 = vmul.f32 %v236, %v238
          %v240 = vadd.f32 %v236, %v239
          %vm241 = vweird.f32 %v202
          %vm242 = vweird.f32 %v236
          %vm243 = vmor %vm241, %vm242
          %v244 = vsel %vm243, %v236, %v240
          %v245 = vand.u32 2147483647, %v202
          %vm246 = vcmp.eq.f32.partialorder %v245, 8.507059e+37
          %v247 = vand.u32 %v202, 2147483648
          %v248 = vor.u32 1.1754944e-38, %v247
          %v249 = vsel %vm246, %v248, %v244
          %v250 = vmul.f32 %v201, %v249
          %v251 = vmul.f32 %v250, %v250
          %v252 = vadd.f32 %v235, %v251
          %vm253 = vcmp.eq.f32.partialorder %v202, 0.0
          %v254 = vrsqrt.pop %v252
          %v255 = vmul.f32 %v254, %v252
          %v256 = vmul.f32 %v255, %v254
          %v257 = vmul.f32 0.5, %v256
          %v258 = vsub.f32 1.5, %v257
          %v259 = vmul.f32 %v254, %v258
          %v260 = vmul.f32 %v252, %v259
          %vm261 = vcmp.eq.f32.partialorder %v252, inf
          %v262 = vsel %vm261, %v252, %v260
          %vm263 = vcmp.eq.f32.partialorder %v252, 0.0
          %v264 = vand.u32 %v252, 2147483648
          %v265 = vsel %vm263, %v264, %v262
          %v266 = vmul.f32 %v202, %v265
          %v267 = vsel %vm253, 0.0, %v266
          %vm268 = vcmp.lt.f32.partialorder %v198, 0.0
          %v269 = vxor.u32 %v267, 2147483648
          %v270 = vsel %vm268, %v267, %v269
          %v271 = vsub.f32 %v270, %v198
          %v272 = vrcp.pop %v270
          %v273 = vmul.f32 %v270, %v272
          %v274 = vsub.f32 1.0, %v273
          %v275 = vmul.f32 %v272, %v274
          %v276 = vadd.f32 %v272, %v275
          %vm277 = vweird.f32 %v270
          %vm278 = vweird.f32 %v272
          %vm279 = vmor %vm277, %vm278
          %v280 = vsel %vm279, %v272, %v276
          %v281 = vand.u32 2147483647, %v270
          %vm282 = vcmp.eq.f32.partialorder %v281, 8.507059e+37
          %v283 = vand.u32 %v270, 2147483648
          %v284 = vor.u32 1.1754944e-38, %v283
          %v285 = vsel %vm282, %v284, %v280
          %v286 = vmul.f32 %v271, %v285
          %v287 = vsel %vm192, %v198, %v270
          %v288 = vsel %vm192, 0.0, %v286
          %v289 = vsub.f32 %v198, %v287
          %s290 = smov %s140
          %v291 = vlaneseq
          %v292 = vshrl.u32 %v291, 7
          %v293 = vmov %v292
          %v294 = vld [vmem:[%s290] sm:$0xff]
          %v296 = vstv %s159
          %vm297 = vcmp.gt.s32.totalorder %v293, %v296
          %vm298 = vcmp.lt.s32.totalorder %v293, 6
          %vm299 = vmand %vm297, %vm298
          %v300 = vsel %vm299, %v294, 0.0
          %v301 = vrcp.pop %v289
          %v302 = vmul.f32 %v289, %v301
          %v303 = vsub.f32 1.0, %v302
          %v304 = vmul.f32 %v301, %v303
          %v305 = vadd.f32 %v301, %v304
          %vm306 = vweird.f32 %v289
          %vm307 = vweird.f32 %v301
          %vm308 = vmor %vm306, %vm307
          %v309 = vsel %vm308, %v301, %v305
          %v310 = vand.u32 2147483647, %v289
          %vm311 = vcmp.eq.f32.partialorder %v310, 8.507059e+37
          %v312 = vand.u32 %v289, 2147483648
          %v313 = vor.u32 1.1754944e-38, %v312
          %v314 = vsel %vm311, %v313, %v309
          %v315 = vmul.f32 %v300, %v314
          %v316 = vsel %vm192, 0.0, %v315
          %v317 = vstv %s159
          %v318 = vlaneseq
          %v319 = vand.u32 %v318, 127
          %vm320 = vcmp.eq.s32.totalorder %v319, %v317
          %v321 = vsel %vm320, %v316, 0.0
          %322 = vadd.xlane.f32.xlu0 %v321
          %v323 = vpop.xlane.xlu0 %322
          %324 = vst [vmem:[#allocation4] sm:$0xff] %v323
          %s325 = scalar_lea.vmem [#allocation4], %s159
          %326 = vst [vmem:[%s325] sm:$0x1] 1.0
          %v327 = vstv %s159
          %v328 = vlaneseq
          %v329 = vand.u32 %v328, 127
          %vm330 = vcmp.eq.s32.totalorder %v329, %v327
          %v331 = vsel %vm330, %v288, 0.0
          %332 = vadd.xlane.f32.xlu0 %v331
          %v333 = vpop.xlane.xlu0 %332
          %v334 = vstv %s159
          %v335 = vlaneseq
          %v336 = vand.u32 %v335, 127
          %vm337 = vcmp.eq.s32.totalorder %v336, %v334
          %v338 = vld [vmem:[%s154] ss:$0 sm:$0xff]
          %v339 = vsel %vm337, %v333, %v338
          %340 = vst [vmem:[%s154] sm:$0x1] %v339
          %s341 = smov %s140
          %s342 = smov [#allocation4]
          %v343 = vlaneseq
          %v344 = vshrl.u32 %v343, 7
          %v345 = vmov %v344
          %v347 = vld [vmem:[%s342] sm:$0xff]
          %v348 = vld [vmem:[%s341] sm:$0xff]
          %v349 = vmul.f32 %v347, %v348
          %vm350 = vcmp.lt.s32.totalorder %v345, 6
          %v351 = vsel %vm350, %v349, 0.0
          %v352 = vrot.slane %v351, 4
          %v353 = vadd.f32 %v351, %v352
          %v354 = vrot.slane %v353, 2
          %v355 = vadd.f32 %v353, %v354
          %v356 = vrot.slane %v355, 1
          %v357 = vadd.f32 %v355, %v356
          %s358 = smov %s341
          %s359 = smov %s342
          %v360 = vlaneseq
          %v361 = vshrl.u32 %v360, 7
          %v362 = vmov %v361
          %v363 = vmul.f32 %v357, %v333
          %v365 = vlaneseq
          %v366 = vand.u32 %v365, 127
          %v367 = vld [vmem:[%s359] sm:$0xff]
          %v368 = vmul.f32 %v367, %v363
          %v369 = vld [vmem:[%s358] sm:$0xff]
          %v370 = vstv %s159
          %vm371 = vcmp.gt.s32.totalorder %v366, %v370
          %v372 = vsub.f32 %v369, %v368
          %v373 = vsel %vm371, %v372, %v369
          %v374 = vstv %s159
          %v375 = vlaneseq
          %v376 = vand.u32 %v375, 127
          %vm377 = vcmp.eq.s32.totalorder %v376, %v374
          %v378 = vstv %s159
          %vm379 = vcmp.ge.s32.totalorder %v362, %v378
          %vm380 = vmand %vm377, %vm379
          %v381 = vsel %vm380, %v367, %v373
          %382 = vst [vmem:[%s358] sm:$0xff] %v381
          %s383 = scalar_lea.vmem %s358, %s159
          %v384 = vld [vmem:[%s383] ss:$0 sm:$0xff]
          %v385 = vstv %s159
          %v386 = vlaneseq
          %v387 = vand.u32 %v386, 127
          %vm388 = vcmp.eq.s32.totalorder %v387, %v385
          %v389 = vsel %vm388, %v287, %v384
          %390 = vst [vmem:[%s383] sm:$0x1] %v389
        $region59: #{custom-call.19} parent=53 // loop_footer
          %s163 = sadd.s32 1, %s159
        $region60: #{custom-call.19} parent=53 // loop_footer_branch
          %158 = sbr.rel target = $region56
        $region61: #{custom-call.19} parent=53 // loop_exit
          _
        %s392 = ssub.s32 16, 1
        %v393 = vld [vmem:[#allocation2] sm:%s392]
        %s395 = ssub.s32 16, 1
        %396 = vst [vmem:[%s146] sm:%s395] %v393
        %s397 = sand.u32 %s10, 1
        %s398 = sand.u32 %s10, 1
        %s399 = smul.addr %s398, 8
        %s400 = scalar_lea.vmem [#allocation1], %s399
        %s401 = sand.u32 %s49, 1
        %s402 = sand.u32 %s49, 1
        %s403 = smul.addr %s402, 4
        %s404 = scalar_lea.vmem [#allocation3], %s403
        %s405 = sadd.s32 %s17, %s16
        %s406 = sadd.s32 %s405, %s15
        %s407 = smul.addr %s406, 8
        %s408 = scalar_lea.vmem %s1, %s407
        // Predicated region
        $region62: #{custom-call.19} parent=53 // pred_check
          _
        $region63: #{custom-call.19} parent=53 // pred_check_branch
          %410 = sbr.rel (0) target = $region65
        $region64: #{custom-call.19} parent=53 // pred_region
          // Predicated region
          $region66: #{custom-call.19} parent=64 // pred_check
            _
          $region67: #{custom-call.19} parent=64 // pred_check_branch
            %412 = sbr.rel (0) target = $region69
          $region68: #{custom-call.19} parent=64 // pred_region
            // Predicated region
            $region81: #{custom-call.19} parent=68 // pred_check
              _
            $region82: #{custom-call.19} parent=68 // pred_check_branch
              %428 = sbr.rel (0) target = $region84
            $region83: #{custom-call.19} parent=68 // pred_region
              loop: start=0, step=1, limit=1
              $region85: #{custom-call.19} parent=83 // loop_pre_header
                _
              $region86: #{custom-call.19} parent=83 // loop_header
                %s430 = sphi 0, %s434
                %p431 = scmp.ge.s32.totalorder %s430, 1
                %s435 = sphi %s400, %s400
                %s436 = sphi %s408, %s408
              $region87: #{custom-call.19} parent=83 // loop_header_branch
                %433 = sbr.rel (%p431) target = $region91
              $region88: #{custom-call.19} parent=83 // loop_body
                %v437 = vld [vmem:[%s435] sm:$0xff]
                %438 = vst [vmem:[%s436] sm:$0xff] %v437
              $region89: #{custom-call.19} parent=83 // loop_footer
                %s434 = sadd.s32 1, %s430
              $region90: #{custom-call.19} parent=83 // loop_footer_branch
                %429 = sbr.rel target = $region86
              $region91: #{custom-call.19} parent=83 // loop_exit
                _
            $region84: #{custom-call.19} parent=68 // pred_fallthru
              _
            // Predicated region
            $region92: #{custom-call.19} parent=68 // pred_check
              _
            $region93: #{custom-call.19} parent=68 // pred_check_branch
              %440 = sbr.rel target = $region95
            $region94: #{custom-call.19} parent=68 // pred_region
              _
            $region95: #{custom-call.19} parent=68 // pred_fallthru
              _
          $region69: #{custom-call.19} parent=64 // pred_fallthru
            _
          // Predicated region
          $region70: #{custom-call.19} parent=64 // pred_check
            _
          $region71: #{custom-call.19} parent=64 // pred_check_branch
            %414 = sbr.rel target = $region73
          $region72: #{custom-call.19} parent=64 // pred_region
            %s416 = ssub.s32 256, 1
            loop: start=0, step=1, limit=1
            $region74: #{custom-call.19} parent=72 // loop_pre_header
              _
            $region75: #{custom-call.19} parent=72 // loop_header
              %s418 = sphi 0, %s422
              %p419 = scmp.ge.s32.totalorder %s418, 1
              %s423 = sphi %s400, %s400
              %s424 = sphi %s408, %s408
            $region76: #{custom-call.19} parent=72 // loop_header_branch
              %421 = sbr.rel (%p419) target = $region80
            $region77: #{custom-call.19} parent=72 // loop_body
              %v425 = vld [vmem:[%s423] sm:%s416]
              %426 = vst [vmem:[%s424] sm:%s416] %v425
            $region78: #{custom-call.19} parent=72 // loop_footer
              %s422 = sadd.s32 1, %s418
            $region79: #{custom-call.19} parent=72 // loop_footer_branch
              %417 = sbr.rel target = $region75
            $region80: #{custom-call.19} parent=72 // loop_exit
              _
          $region73: #{custom-call.19} parent=64 // pred_fallthru
            _
        $region65: #{custom-call.19} parent=53 // pred_fallthru
          _
        %441 = vnop
        // Predicated region
        $region96: #{custom-call.19} parent=53 // pred_check
          %p442 = pneg %p59
        $region97: #{custom-call.19} parent=53 // pred_check_branch
          %444 = sbr.rel (%p442) target = $region99
        $region98: #{custom-call.19} parent=53 // pred_region
          %p445 = scmp.lt.s32.totalorder %s15, 0
          %s446 = ssub.s32 0, %s15
          %s447 = scalar_select %p445, %s446, %s15
          %s448 = sshrl.u32 %s447, 3
          %s449 = ssub.s32 0, %s448
          %s450 = scalar_select %p445, %s449, %s448
          %s451 = smul.addr %s450, 4
          %s452 = scalar_lea.vmem %s2, %s451
          // Predicated region
          $region100: #{custom-call.19} parent=98 // pred_check
            _
          $region101: #{custom-call.19} parent=98 // pred_check_branch
            %454 = sbr.rel (0) target = $region103
          $region102: #{custom-call.19} parent=98 // pred_region
            // Predicated region
            $region104: #{custom-call.19} parent=102 // pred_check
              _
            $region105: #{custom-call.19} parent=102 // pred_check_branch
              %456 = sbr.rel target = $region107
            $region106: #{custom-call.19} parent=102 // pred_region
              // Predicated region
              $region119: #{custom-call.19} parent=106 // pred_check
                _
              $region120: #{custom-call.19} parent=106 // pred_check_branch
                %472 = sbr.rel (0) target = $region122
              $region121: #{custom-call.19} parent=106 // pred_region
                %s474 = ssub.s32 16, 1
                loop: start=0, step=1, limit=1
                $region123: #{custom-call.19} parent=121 // loop_pre_header
                  _
                $region124: #{custom-call.19} parent=121 // loop_header
                  %s476 = sphi 0, %s480
                  %p477 = scmp.ge.s32.totalorder %s476, 1
                  %s481 = sphi %s404, %s404
                  %s482 = sphi %s452, %s452
                $region125: #{custom-call.19} parent=121 // loop_header_branch
                  %479 = sbr.rel (%p477) target = $region129
                $region126: #{custom-call.19} parent=121 // loop_body
                  %v483 = vld [vmem:[%s481] sm:%s474]
                  %484 = vst [vmem:[%s482] sm:%s474] %v483
                $region127: #{custom-call.19} parent=121 // loop_footer
                  %s480 = sadd.s32 1, %s476
                $region128: #{custom-call.19} parent=121 // loop_footer_branch
                  %475 = sbr.rel target = $region124
                $region129: #{custom-call.19} parent=121 // loop_exit
                  _
              $region122: #{custom-call.19} parent=106 // pred_fallthru
                _
            $region107: #{custom-call.19} parent=102 // pred_fallthru
              _
            // Predicated region
            $region108: #{custom-call.19} parent=102 // pred_check
              _
            $region109: #{custom-call.19} parent=102 // pred_check_branch
              %458 = sbr.rel (0) target = $region111
            $region110: #{custom-call.19} parent=102 // pred_region
              %s460 = ssub.s32 16, 1
              loop: start=0, step=1, limit=1
              $region112: #{custom-call.19} parent=110 // loop_pre_header
                _
              $region113: #{custom-call.19} parent=110 // loop_header
                %s462 = sphi 0, %s466
                %p463 = scmp.ge.s32.totalorder %s462, 1
                %s467 = sphi %s404, %s404
                %s468 = sphi %s452, %s452
              $region114: #{custom-call.19} parent=110 // loop_header_branch
                %465 = sbr.rel (%p463) target = $region118
              $region115: #{custom-call.19} parent=110 // loop_body
                %v469 = vld [vmem:[%s467] sm:%s460]
                %470 = vst [vmem:[%s468] sm:%s460] %v469
              $region116: #{custom-call.19} parent=110 // loop_footer
                %s466 = sadd.s32 1, %s462
              $region117: #{custom-call.19} parent=110 // loop_footer_branch
                %461 = sbr.rel target = $region113
              $region118: #{custom-call.19} parent=110 // loop_exit
                _
            $region111: #{custom-call.19} parent=102 // pred_fallthru
              _
          $region103: #{custom-call.19} parent=98 // pred_fallthru
            _
          %485 = vnop
        $region99: #{custom-call.19} parent=53 // pred_fallthru
          _
      $region54: #{custom-call.19} parent=5 // pred_fallthru
        _
      %p486 = scmp.le.s32.totalorder 2, %s5
      // Predicated region
      $region130: #{custom-call.19} parent=5 // pred_check
        %p487 = pneg %p486
      $region131: #{custom-call.19} parent=5 // pred_check_branch
        %489 = sbr.rel (%p487) target = $region133
      $region132: #{custom-call.19} parent=5 // pred_region
        %s490 = ssub.s32 %s5, 2
        %s491 = sand.u32 %s11, 1
        %s492 = sand.u32 %s11, 1
        %s493 = smul.addr %s492, 8
        %s494 = scalar_lea.vmem [#allocation1], %s493
        // Predicated region
        $region134: #{custom-call.19} parent=132 // pred_check
          %p495 = pneg %p65
        $region135: #{custom-call.19} parent=132 // pred_check_branch
          %497 = sbr.rel (%p495) target = $region137
        $region136: #{custom-call.19} parent=132 // pred_region
          %s498 = sand.u32 %s50, 1
          %s499 = sand.u32 %s50, 1
          %s500 = smul.addr %s499, 4
          %s501 = scalar_lea.vmem [#allocation3], %s500
        $region137: #{custom-call.19} parent=132 // pred_fallthru
          _
      $region133: #{custom-call.19} parent=5 // pred_fallthru
        _
    $region6: #{custom-call.19} parent=1 // loop_footer
      %s9 = sadd.s32 1, %s5
    $region7: #{custom-call.19} parent=1 // loop_footer_branch
      %4 = sbr.rel target = $region3
    $region8: #{custom-call.19} parent=1 // loop_exit
      _

// kernel: net_forward.3
$region0: #{net_forward.3}
  #allocation0 [shape = 'u32[]', space=smem, size = 0x4, offset = 0x4, fixed_abs, tag = 'smem constant byte address 0x4 - core index']
  #allocation1 [shape = 'u32[72,128]{1,0:T(1,128)}', space=vmem, size = 0x9000, scoped, tag = 'internal scratch']
  %s0 = inlined_call_operand.vmem [shape: f32[3,8,128], index: 0, kind: input, shape index: {}]
  %s1 = inlined_call_operand.vmem [shape: f32[8,8,128], index: 1, kind: input, shape index: {}]
  %s2 = inlined_call_operand.vmem [shape: f32[1,128], index: 2, kind: input, shape index: {}]
  %s3 = inlined_call_operand.vmem [shape: f32[128,128], index: 3, kind: input, shape index: {}]
  %s4 = inlined_call_operand.vmem [shape: f32[1,128], index: 4, kind: input, shape index: {}]
  %s5 = inlined_call_operand.hbm [shape: f32[3,128], index: 5, kind: output, shape index: {}]
  %s6 = sld [smem:[#allocation0]]
  $region30: #{net_forward.3} parent=0
    _
  %s8 = ssub.s32 1, %s6
  %s9 = scalar_select 0, %s8, %s6
  $region1: #{net_forward.3} parent=0
    #allocation2 [shape = 'u8[2048]{0}', space=vmem, size = 0x800, scoped, tag = 'output window, operand 0, single buffered']
    #allocation3 [shape = 's32[1]{0}', space=sflag, size = 0x4, scoped, tag = 'scoped memory for net_forward.3']
    %10 = vsyncpa [#allocation3], 0
    // Predicated region
    $region2: #{net_forward.3} parent=1 // pred_check
      _
    $region3: #{net_forward.3} parent=1 // pred_check_branch
      %12 = sbr.rel (0) target = $region5
    $region4: #{net_forward.3} parent=1 // pred_region
      _
    $region5: #{net_forward.3} parent=1 // pred_fallthru
      _
    // Predicated region
    $region6: #{net_forward.3} parent=1 // pred_check
      _
    $region7: #{net_forward.3} parent=1 // pred_check_branch
      %14 = sbr.rel (0) target = $region9
    $region8: #{net_forward.3} parent=1 // pred_region
      _
    $region9: #{net_forward.3} parent=1 // pred_fallthru
      _
    // Predicated region
    $region10: #{net_forward.3} parent=1 // pred_check
      _
    $region11: #{net_forward.3} parent=1 // pred_check_branch
      %16 = sbr.rel (0) target = $region13
    $region12: #{net_forward.3} parent=1 // pred_region
      _
    $region13: #{net_forward.3} parent=1 // pred_fallthru
      _
    // Predicated region
    $region14: #{net_forward.3} parent=1 // pred_check
      _
    $region15: #{net_forward.3} parent=1 // pred_check_branch
      %18 = sbr.rel (0) target = $region17
    $region16: #{net_forward.3} parent=1 // pred_region
      _
    $region17: #{net_forward.3} parent=1 // pred_fallthru
      _
    // Predicated region
    $region18: #{net_forward.3} parent=1 // pred_check
      _
    $region19: #{net_forward.3} parent=1 // pred_check_branch
      %20 = sbr.rel (0) target = $region21
    $region20: #{net_forward.3} parent=1 // pred_region
      _
    $region21: #{net_forward.3} parent=1 // pred_fallthru
      _
    %v21 = vld [vmem:[%s0] sm:$0xff]
    %v22 = vld [vmem:[%s0 + $0x8] sm:$0xff]
    %v23 = vld [vmem:[%s0 + $0x10] sm:$0xff]
    %24 = vmatpush.xpose.msra.mxu0 0.0
    %25 = vmatpush.xpose.msra.mxu0 0.0
    %26 = vmatpush.xpose.msra.mxu0 0.0
    %27 = vmatpush.xpose.msra.mxu0 0.0
    %28 = vmatpush.xpose.msra.mxu0 0.0
    %29 = vmatpush.xpose.msra.mxu0 0.0
    %30 = vmatpush.xpose.msra.mxu0 0.0
    %31 = vmatpush.xpose.msra.mxu0 0.0
    %32 = vmatpush.xpose.msra.mxu0 0.0
    %33 = vmatpush.xpose.msra.mxu0 0.0
    %34 = vmatpush.xpose.msra.mxu0 0.0
    %35 = vmatpush.xpose.msra.mxu0 0.0
    %36 = vmatpush.xpose.msra.mxu0 0.0
    %37 = vmatpush.xpose.msra.mxu0 0.0
    %38 = vmatpush.xpose.msra.mxu0 0.0
    %39 = vmatpush.xpose.msra.mxu0 %v21
    %40 = vmatmul.f32.gmra.mxu0 %v21
    %v41 = vpop.f32.mrf.mxu0
    %v42 = vadd.f32 0.0, %v41
    %43 = vdwg.mxu0
    %44 = vmatpush.xpose.msra.mxu0 0.0
    %45 = vmatpush.xpose.msra.mxu0 0.0
    %46 = vmatpush.xpose.msra.mxu0 0.0
    %47 = vmatpush.xpose.msra.mxu0 0.0
    %48 = vmatpush.xpose.msra.mxu0 0.0
    %49 = vmatpush.xpose.msra.mxu0 0.0
    %50 = vmatpush.xpose.msra.mxu0 0.0
    %51 = vmatpush.xpose.msra.mxu0 0.0
    %52 = vmatpush.xpose.msra.mxu0 0.0
    %53 = vmatpush.xpose.msra.mxu0 0.0
    %54 = vmatpush.xpose.msra.mxu0 0.0
    %55 = vmatpush.xpose.msra.mxu0 0.0
    %56 = vmatpush.xpose.msra.mxu0 0.0
    %57 = vmatpush.xpose.msra.mxu0 0.0
    %58 = vmatpush.xpose.msra.mxu0 0.0
    %59 = vmatpush.xpose.msra.mxu0 %v22
    %60 = vmatmul.f32.gmra.mxu0 %v22
    %v61 = vpop.f32.mrf.mxu0
    %v62 = vadd.f32 0.0, %v61
    %63 = vdwg.mxu0
    %64 = vmatpush.xpose.msra.mxu0 0.0
    %65 = vmatpush.xpose.msra.mxu0 0.0
    %66 = vmatpush.xpose.msra.mxu0 0.0
    %67 = vmatpush.xpose.msra.mxu0 0.0
    %68 = vmatpush.xpose.msra.mxu0 0.0
    %69 = vmatpush.xpose.msra.mxu0 0.0
    %70 = vmatpush.xpose.msra.mxu0 0.0
    %71 = vmatpush.xpose.msra.mxu0 0.0
    %72 = vmatpush.xpose.msra.mxu0 0.0
    %73 = vmatpush.xpose.msra.mxu0 0.0
    %74 = vmatpush.xpose.msra.mxu0 0.0
    %75 = vmatpush.xpose.msra.mxu0 0.0
    %76 = vmatpush.xpose.msra.mxu0 0.0
    %77 = vmatpush.xpose.msra.mxu0 0.0
    %78 = vmatpush.xpose.msra.mxu0 0.0
    %79 = vmatpush.xpose.msra.mxu0 %v23
    %80 = vmatmul.f32.gmra.mxu0 %v23
    %v81 = vpop.f32.mrf.mxu0
    %v82 = vadd.f32 0.0, %v81
    %83 = vdwg.mxu0
    %v84 = vld [vmem:[%s1] sm:$0xff]
    %s85 = scalar_lea.vmem %s1, 8
    %v86 = vld [vmem:[%s85] sm:$0xff]
    %v90 = vrot.slane %v42, 1
    %vm91 = vcmask 1041409
    %v92 = vsel %vm91, %v62, %v90
    %v93 = vrot.slane %v82, 7
    %vm94 = vcmask 1042434
    %v95 = vsel %vm94, %v93, %v92
    %vm96 = vcmask 64512
    %v97 = vsel %vm96, %v95, 0
    %99 = vmatpush.msra.mxu0 0.0
    %100 = vmatpush.msra.mxu0 0.0
    %101 = vmatpush.msra.mxu0 0.0
    %102 = vmatpush.msra.mxu0 0.0
    %103 = vmatpush.msra.mxu0 0.0
    %104 = vmatpush.msra.mxu0 0.0
    %105 = vmatpush.msra.mxu0 0.0
    %106 = vmatpush.msra.mxu0 0.0
    %107 = vmatpush.msra.mxu0 0.0
    %108 = vmatpush.msra.mxu0 0.0
    %109 = vmatpush.msra.mxu0 0.0
    %110 = vmatpush.msra.mxu0 0.0
    %111 = vmatpush.msra.mxu0 0.0
    %112 = vmatpush.msra.mxu0 0.0
    %113 = vmatpush.msra.mxu0 0.0
    %114 = vmatpush.msra.mxu0 %v86
    %115 = vmatmul.f32.gmra.mxu0 %v97
    %v116 = vpop.f32.mrf.mxu0
    %v117 = vadd.f32 0.0, %v116
    %118 = vdwg.mxu0
    %v119 = vrot.slane %v62, 7
    %v120 = vsel %vm91, %v119, %v42
    %v121 = vrot.slane %v82, 6
    %v122 = vsel %vm94, %v121, %v120
    %v123 = vsel %vm96, %v122, 0
    %125 = vmatpush.msra.mxu0 0.0
    %126 = vmatpush.msra.mxu0 0.0
    %127 = vmatpush.msra.mxu0 0.0
    %128 = vmatpush.msra.mxu0 0.0
    %129 = vmatpush.msra.mxu0 0.0
    %130 = vmatpush.msra.mxu0 0.0
    %131 = vmatpush.msra.mxu0 0.0
    %132 = vmatpush.msra.mxu0 0.0
    %133 = vmatpush.msra.mxu0 0.0
    %134 = vmatpush.msra.mxu0 0.0
    %135 = vmatpush.msra.mxu0 0.0
    %136 = vmatpush.msra.mxu0 0.0
    %137 = vmatpush.msra.mxu0 0.0
    %138 = vmatpush.msra.mxu0 0.0
    %139 = vmatpush.msra.mxu0 0.0
    %140 = vmatpush.msra.mxu0 %v84
    %141 = vmatmul.f32.gmra.mxu0 %v123
    %v142 = vpop.f32.mrf.mxu0
    %v143 = vadd.f32 %v117, %v142
    %144 = vdwg.mxu0
    %s145 = scalar_lea.vmem %s1, 16
    %v146 = vld [vmem:[%s145] sm:$0xff]
    %v147 = vrot.slane %v42, 2
    %v148 = vrot.slane %v62, 1
    %v149 = vsel %vm91, %v148, %v147
    %v150 = vsel %vm94, %v82, %v149
    %v151 = vsel %vm96, %v150, 0
    %153 = vmatpush.msra.mxu0 0.0
    %154 = vmatpush.msra.mxu0 0.0
    %155 = vmatpush.msra.mxu0 0.0
    %156 = vmatpush.msra.mxu0 0.0
    %157 = vmatpush.msra.mxu0 0.0
    %158 = vmatpush.msra.mxu0 0.0
    %159 = vmatpush.msra.mxu0 0.0
    %160 = vmatpush.msra.mxu0 0.0
    %161 = vmatpush.msra.mxu0 0.0
    %162 = vmatpush.msra.mxu0 0.0
    %163 = vmatpush.msra.mxu0 0.0
    %164 = vmatpush.msra.mxu0 0.0
    %165 = vmatpush.msra.mxu0 0.0
    %166 = vmatpush.msra.mxu0 0.0
    %167 = vmatpush.msra.mxu0 0.0
    %168 = vmatpush.msra.mxu0 %v146
    %169 = vmatmul.f32.gmra.mxu0 %v151
    %v170 = vpop.f32.mrf.mxu0
    %v171 = vadd.f32 0.0, %v170
    %172 = vdwg.mxu0
    %v173 = vadd.f32 %v143, %v171
    %s174 = scalar_lea.vmem %s1, 24
    %v175 = vld [vmem:[%s174] sm:$0xff]
    %v176 = vrot.slane %v42, 3
    %v177 = vrot.slane %v62, 2
    %v178 = vsel %vm91, %v177, %v176
    %v179 = vrot.slane %v82, 1
    %v180 = vsel %vm94, %v179, %v178
    %v181 = vsel %vm96, %v180, 0
    %183 = vmatpush.msra.mxu0 0.0
    %184 = vmatpush.msra.mxu0 0.0
    %185 = vmatpush.msra.mxu0 0.0
    %186 = vmatpush.msra.mxu0 0.0
    %187 = vmatpush.msra.mxu0 0.0
    %188 = vmatpush.msra.mxu0 0.0
    %189 = vmatpush.msra.mxu0 0.0
    %190 = vmatpush.msra.mxu0 0.0
    %191 = vmatpush.msra.mxu0 0.0
    %192 = vmatpush.msra.mxu0 0.0
    %193 = vmatpush.msra.mxu0 0.0
    %194 = vmatpush.msra.mxu0 0.0
    %195 = vmatpush.msra.mxu0 0.0
    %196 = vmatpush.msra.mxu0 0.0
    %197 = vmatpush.msra.mxu0 0.0
    %198 = vmatpush.msra.mxu0 %v175
    %199 = vmatmul.f32.gmra.mxu0 %v181
    %v200 = vpop.f32.mrf.mxu0
    %v201 = vadd.f32 0.0, %v200
    %202 = vdwg.mxu0
    %v203 = vadd.f32 %v173, %v201
    %s204 = scalar_lea.vmem %s1, 32
    %v205 = vld [vmem:[%s204] sm:$0xff]
    %v206 = vrot.slane %v42, 4
    %v207 = vrot.slane %v62, 3
    %v208 = vsel %vm91, %v207, %v206
    %v209 = vrot.slane %v82, 2
    %v210 = vsel %vm94, %v209, %v208
    %v211 = vsel %vm96, %v210, 0
    %213 = vmatpush.msra.mxu0 0.0
    %214 = vmatpush.msra.mxu0 0.0
    %215 = vmatpush.msra.mxu0 0.0
    %216 = vmatpush.msra.mxu0 0.0
    %217 = vmatpush.msra.mxu0 0.0
    %218 = vmatpush.msra.mxu0 0.0
    %219 = vmatpush.msra.mxu0 0.0
    %220 = vmatpush.msra.mxu0 0.0
    %221 = vmatpush.msra.mxu0 0.0
    %222 = vmatpush.msra.mxu0 0.0
    %223 = vmatpush.msra.mxu0 0.0
    %224 = vmatpush.msra.mxu0 0.0
    %225 = vmatpush.msra.mxu0 0.0
    %226 = vmatpush.msra.mxu0 0.0
    %227 = vmatpush.msra.mxu0 0.0
    %228 = vmatpush.msra.mxu0 %v205
    %229 = vmatmul.f32.gmra.mxu0 %v211
    %v230 = vpop.f32.mrf.mxu0
    %v231 = vadd.f32 0.0, %v230
    %232 = vdwg.mxu0
    %v233 = vadd.f32 %v203, %v231
    %s234 = scalar_lea.vmem %s1, 40
    %v235 = vld [vmem:[%s234] sm:$0xff]
    %v236 = vrot.slane %v42, 5
    %v237 = vrot.slane %v62, 4
    %v238 = vsel %vm91, %v237, %v236
    %v239 = vrot.slane %v82, 3
    %v240 = vsel %vm94, %v239, %v238
    %v241 = vsel %vm96, %v240, 0
    %243 = vmatpush.msra.mxu0 0.0
    %244 = vmatpush.msra.mxu0 0.0
    %245 = vmatpush.msra.mxu0 0.0
    %246 = vmatpush.msra.mxu0 0.0
    %247 = vmatpush.msra.mxu0 0.0
    %248 = vmatpush.msra.mxu0 0.0
    %249 = vmatpush.msra.mxu0 0.0
    %250 = vmatpush.msra.mxu0 0.0
    %251 = vmatpush.msra.mxu0 0.0
    %252 = vmatpush.msra.mxu0 0.0
    %253 = vmatpush.msra.mxu0 0.0
    %254 = vmatpush.msra.mxu0 0.0
    %255 = vmatpush.msra.mxu0 0.0
    %256 = vmatpush.msra.mxu0 0.0
    %257 = vmatpush.msra.mxu0 0.0
    %258 = vmatpush.msra.mxu0 %v235
    %259 = vmatmul.f32.gmra.mxu0 %v241
    %v260 = vpop.f32.mrf.mxu0
    %v261 = vadd.f32 0.0, %v260
    %262 = vdwg.mxu0
    %v263 = vadd.f32 %v233, %v261
    %s264 = scalar_lea.vmem %s1, 48
    %v265 = vld [vmem:[%s264] sm:$0xff]
    %v266 = vrot.slane %v42, 6
    %v267 = vrot.slane %v62, 5
    %v268 = vsel %vm91, %v267, %v266
    %v269 = vrot.slane %v82, 4
    %v270 = vsel %vm94, %v269, %v268
    %v271 = vsel %vm96, %v270, 0
    %273 = vmatpush.msra.mxu0 0.0
    %274 = vmatpush.msra.mxu0 0.0
    %275 = vmatpush.msra.mxu0 0.0
    %276 = vmatpush.msra.mxu0 0.0
    %277 = vmatpush.msra.mxu0 0.0
    %278 = vmatpush.msra.mxu0 0.0
    %279 = vmatpush.msra.mxu0 0.0
    %280 = vmatpush.msra.mxu0 0.0
    %281 = vmatpush.msra.mxu0 0.0
    %282 = vmatpush.msra.mxu0 0.0
    %283 = vmatpush.msra.mxu0 0.0
    %284 = vmatpush.msra.mxu0 0.0
    %285 = vmatpush.msra.mxu0 0.0
    %286 = vmatpush.msra.mxu0 0.0
    %287 = vmatpush.msra.mxu0 0.0
    %288 = vmatpush.msra.mxu0 %v265
    %289 = vmatmul.f32.gmra.mxu0 %v271
    %v290 = vpop.f32.mrf.mxu0
    %v291 = vadd.f32 0.0, %v290
    %292 = vdwg.mxu0
    %v293 = vadd.f32 %v263, %v291
    %s294 = scalar_lea.vmem %s1, 56
    %v295 = vld [vmem:[%s294] sm:$0xff]
    %v296 = vrot.slane %v42, 7
    %v297 = vrot.slane %v62, 6
    %v298 = vsel %vm91, %v297, %v296
    %v299 = vrot.slane %v82, 5
    %v300 = vsel %vm94, %v299, %v298
    %v301 = vsel %vm96, %v300, 0
    %303 = vmatpush.msra.mxu0 0.0
    %304 = vmatpush.msra.mxu0 0.0
    %305 = vmatpush.msra.mxu0 0.0
    %306 = vmatpush.msra.mxu0 0.0
    %307 = vmatpush.msra.mxu0 0.0
    %308 = vmatpush.msra.mxu0 0.0
    %309 = vmatpush.msra.mxu0 0.0
    %310 = vmatpush.msra.mxu0 0.0
    %311 = vmatpush.msra.mxu0 0.0
    %312 = vmatpush.msra.mxu0 0.0
    %313 = vmatpush.msra.mxu0 0.0
    %314 = vmatpush.msra.mxu0 0.0
    %315 = vmatpush.msra.mxu0 0.0
    %316 = vmatpush.msra.mxu0 0.0
    %317 = vmatpush.msra.mxu0 0.0
    %318 = vmatpush.msra.mxu0 %v295
    %319 = vmatmul.f32.gmra.mxu0 %v301
    %v320 = vpop.f32.mrf.mxu0
    %v321 = vadd.f32 0.0, %v320
    %322 = vdwg.mxu0
    %v323 = vadd.f32 %v293, %v321
    %v324 = vld [vmem:[%s2] sm:$0x1]
    %v326 = vperm.slane %v324, 0
    %v328 = vadd.f32 %v323, %v326
    %v329 = vmax.f32 %v328, 0.0
    %v330 = vld [vmem:[%s3] sm:$0xff]
    %v331 = vld [vmem:[%s3 + $0x8] sm:$0xff]
    %v332 = vld [vmem:[%s3 + $0x10] sm:$0xff]
    %v333 = vld [vmem:[%s3 + $0x18] sm:$0xff]
    %v334 = vld [vmem:[%s3 + $0x20] sm:$0xff]
    %v335 = vld [vmem:[%s3 + $0x28] sm:$0xff]
    %v336 = vld [vmem:[%s3 + $0x30] sm:$0xff]
    %v337 = vld [vmem:[%s3 + $0x38] sm:$0xff]
    %v338 = vld [vmem:[%s3 + $0x40] sm:$0xff]
    %v339 = vld [vmem:[%s3 + $0x48] sm:$0xff]
    %v340 = vld [vmem:[%s3 + $0x50] sm:$0xff]
    %v341 = vld [vmem:[%s3 + $0x58] sm:$0xff]
    %v342 = vld [vmem:[%s3 + $0x60] sm:$0xff]
    %v343 = vld [vmem:[%s3 + $0x68] sm:$0xff]
    %v344 = vld [vmem:[%s3 + $0x70] sm:$0xff]
    %v345 = vld [vmem:[%s3 + $0x78] sm:$0xff]
    %v346 = vld [vmem:[%s4] sm:$0x1]
    %v348 = vperm.slane %v346, 0
    %350 = vmatpush.msra.mxu0 %v345
    %351 = vmatpush.msra.mxu0 %v344
    %352 = vmatpush.msra.mxu0 %v343
    %353 = vmatpush.msra.mxu0 %v342
    %354 = vmatpush.msra.mxu0 %v341
    %355 = vmatpush.msra.mxu0 %v340
    %356 = vmatpush.msra.mxu0 %v339
    %357 = vmatpush.msra.mxu0 %v338
    %358 = vmatpush.msra.mxu0 %v337
    %359 = vmatpush.msra.mxu0 %v336
    %360 = vmatpush.msra.mxu0 %v335
    %361 = vmatpush.msra.mxu0 %v334
    %362 = vmatpush.msra.mxu0 %v333
    %363 = vmatpush.msra.mxu0 %v332
    %364 = vmatpush.msra.mxu0 %v331
    %365 = vmatpush.msra.mxu0 %v330
    %366 = vmatmul.f32.gmra.mxu0 %v329
    %v367 = vpop.f32.mrf.mxu0
    %v368 = vadd.f32 %v348, %v367
    %369 = vdwg.mxu0
    %370 = vst [vmem:[#allocation2] sm:$0x7] %v368
    // Predicated region
    $region22: #{net_forward.3} parent=1 // pred_check
      _
    $region23: #{net_forward.3} parent=1 // pred_check_branch
      %372 = sbr.rel (0) target = $region25
    $region24: #{net_forward.3} parent=1 // pred_region
      %374 = vsyncadd [#allocation3], 0
      %s376 = sshll.u32 [#allocation2], 4
      %s377 = int_to_ptr.vmem [resolvable:$true] %s376
      %s378 = sshll.u32 %s5, 4
      %s379 = int_to_ptr.hbm [resolvable:$true] %s378
      %381 = dma.vmem_to_hbm [thread:$0]  %s377, 64, %s379, [#allocation3]
    $region25: #{net_forward.3} parent=1 // pred_fallthru
      _
    // Predicated region
    $region26: #{net_forward.3} parent=1 // pred_check
      _
    $region27: #{net_forward.3} parent=1 // pred_check_branch
      %383 = sbr.rel (0) target = $region29
    $region28: #{net_forward.3} parent=1 // pred_region
      %385 = dma.done [#allocation3], 64
    $region29: #{net_forward.3} parent=1 // pred_fallthru
      _
    %386 = vsyncpa [#allocation3], 1

</llo_original>
